<compile_context>
chip_gen: v7x
topology: tpu7x:2x2x1
jax: 0.10.0
libtpu: 0.0.40
codegen_flags: <defaults>
</compile_context>

<pallas_src>
import functools

import jax
import jax.numpy as jnp
from jax.experimental import pallas as pl
from jax.experimental.pallas import tpu as pltpu


def _round_up(x, m):
    return (x + m - 1) // m * m


# ---------------------------------------------------------------------------
# Pallas kernels
# ---------------------------------------------------------------------------
def _fused_backbone_kernel(xs2d_ref, ws_ref, bs_ref, wh_ref, bh_ref,
                           out_ref, stem_ref, *, ho, wo):
    """Fused conv_stem (3x3/s2, SiLU) -> conv_head (1x1, SiLU) -> spatial mean.

    Grid = (image n, head-channel block j); n is "parallel" (megacore), j is
    "arbitrary" because the stem scratch computed at j == 0 is reused by every
    later j for the same image.  The per-image space-to-depth input block and
    the packed stem weights keep a constant block index across the inner j
    loop, so Pallas skips their re-DMA; only the (32, tn) head-weight slice
    and the lane-dense (1, 1, tn) pooled output move per step.
    """
    j = pl.program_id(1)

    @pl.when(j == 0)
    def _():
        csp = stem_ref.shape[-1]
        acc = jnp.zeros((ho * wo, csp), jnp.float32)
        # In-kernel "im2col": on the space-to-depth input the 3x3/stride-2
        # conv is a 2x2/stride-1 stencil -> accumulate its 4 taps as matmuls
        # (bf16 operands, f32 accumulate on the MXU).
        for t in range(4):
            di, dj = divmod(t, 2)
            xt = xs2d_ref[0, di:di + ho, dj:dj + wo, :]
            xt = xt.reshape(ho * wo, -1).astype(jnp.bfloat16)
            acc = acc + jnp.dot(xt, ws_ref[t],
                                preferred_element_type=jnp.float32)
        acc = acc + bs_ref[...]
        acc = acc * jax.nn.sigmoid(acc)               # SiLU
        stem_ref[...] = acc.astype(stem_ref.dtype)    # bf16, stays in VMEM

    # conv_head (1x1) for this channel block: bf16 MXU matmul, f32 accumulate.
    h = jnp.dot(stem_ref[...], wh_ref[...],
                preferred_element_type=jnp.float32) + bh_ref[...]
    h = h * jax.nn.sigmoid(h)                         # SiLU
    # AdaptiveAvgPool2d(1): mean over the Ho*Wo spatial positions.
    out_ref[...] = jnp.mean(h, axis=0, keepdims=True).reshape(
        1, 1, -1).astype(out_ref.dtype)


def _head_kernel(f_ref, w_ref, b_ref, o_ref):
    # f_ref: (N_img, 1, C_head) pooled features.
    flat = jnp.max(f_ref[...], axis=0)                # torch.max(.., 0, keepdim)[0]
    out = jnp.dot(flat, w_ref[...],
                  preferred_element_type=jnp.float32) + b_ref[...]
    o_ref[...] = out.astype(o_ref.dtype)


# ---------------------------------------------------------------------------
# Forward pass (layout plumbing in plain JAX, all compute in Pallas)
# ---------------------------------------------------------------------------
def covnet_effi_forward(x, w_stem, b_stem, w_head, b_head, w_cls, b_cls):
    # x: (1, N_img, C_in, H, W) — the PyTorch input whose leading dim
    # forward() squeezes away.
    x = jnp.squeeze(x, axis=0)                  # (N, C, H, W)
    x = jnp.transpose(x, (0, 2, 3, 1))          # NHWC: channels on lanes
    n, h, w, c = x.shape
    # TF-SAME padding for 3x3/stride-2 is (0,1)/(0,1) only for even H, W.
    assert h % 2 == 0 and w % 2 == 0
    ho, wo = h // 2, w // 2

    cs = w_stem.shape[-1]                       # stem channels (24)
    c_head = w_head.shape[-1]                   # head channels (1280)
    c4 = 4 * c
    cp = _round_up(c4, 16)                      # padded s2d channels (stem K)
    csp = _round_up(cs, 16)                     # padded stem channels (head K)

    # Space-to-depth (one read + one write of the input; replaces 9x im2col):
    #   xs2d[n, p, q, ph*2C + pw*C + c] = x[n, 2p+ph, 2q+pw, c]
    xs2d = x.reshape(n, ho, 2, wo, 2, c).transpose(0, 1, 3, 2, 4, 5)
    xs2d = xs2d.reshape(n, ho, wo, c4)
    # +1 zero row/col == the TF-SAME bottom/right pad; channel pad to a
    # multiple of 16 so the stem contraction dim is sublane-aligned.
    xs2d = jnp.pad(xs2d, ((0, 0), (0, 1), (0, 1), (0, cp - c4)))

    # Repack the 3x3 stem weight into 4 stencil taps over the s2d layout:
    # tap t=(di,dj), row k = ph*2C + pw*C + c  ->  w_stem[2di+ph, 2dj+pw, c, :]
    # (taps falling outside the 3x3 window are zero).
    wsp = jnp.zeros((2, 2, 2, 2, c, csp), jnp.float32)
    for di in range(2):
        for dj in range(2):
            for ph in range(2):
                for pw in range(2):
                    kh, kw = 2 * di + ph, 2 * dj + pw
                    if kh < 3 and kw < 3:
                        wsp = wsp.at[di, dj, ph, pw, :, :cs].set(w_stem[kh, kw])
    wsp = wsp.reshape(4, c4, csp)
    wsp = jnp.pad(wsp, ((0, 0), (0, cp - c4), (0, 0))).astype(jnp.bfloat16)
    bsp = jnp.pad(b_stem, (0, csp - cs)).reshape(1, csp)

    whp = jnp.pad(w_head, ((0, csp - cs), (0, 0))).astype(jnp.bfloat16)
    bhp = b_head.reshape(1, c_head)

    # Head-channel tile: lane-dense output blocks (1280 = 5 * 256).
    tn = 256 if c_head % 256 == 0 else 128
    assert c_head % tn == 0

    kernel = functools.partial(_fused_backbone_kernel, ho=ho, wo=wo)
    pooled = pl.pallas_call(
        kernel,
        out_shape=jax.ShapeDtypeStruct((n, 1, c_head), jnp.float32),
        grid_spec=pltpu.PrefetchScalarGridSpec(
            num_scalar_prefetch=0,
            grid=(n, c_head // tn),
            in_specs=[
                pl.BlockSpec((1, ho + 1, wo + 1, cp), lambda i, j: (i, 0, 0, 0)),
                pl.BlockSpec((4, cp, csp), lambda i, j: (0, 0, 0)),
                pl.BlockSpec((1, csp), lambda i, j: (0, 0)),
                pl.BlockSpec((csp, tn), lambda i, j: (0, j)),
                pl.BlockSpec((1, tn), lambda i, j: (0, j)),
            ],
            out_specs=pl.BlockSpec((1, 1, tn), lambda i, j: (i, 0, j)),
            scratch_shapes=[pltpu.VMEM((ho * wo, csp), jnp.bfloat16)],
        ),
        compiler_params=pltpu.CompilerParams(
            dimension_semantics=("parallel", "arbitrary")),
    )(xs2d, wsp, bsp, whp, bhp)

    # Classifier: max over images + Linear, with n_classes padded to a full
    # 128-lane (unmasked) store; sliced back outside the kernel.
    n_classes = w_cls.shape[-1]
    ncp = _round_up(n_classes, 128)
    wcp = jnp.pad(w_cls, ((0, 0), (0, ncp - n_classes)))
    bcp = jnp.pad(b_cls, (0, ncp - n_classes)).reshape(1, ncp)
    out = pl.pallas_call(
        _head_kernel,
        out_shape=jax.ShapeDtypeStruct((1, ncp), jnp.float32),
        grid_spec=pltpu.PrefetchScalarGridSpec(
            num_scalar_prefetch=0,
            grid=(1,),                          # tiny classifier; grid=(1,) is fine here
            in_specs=[
                pl.BlockSpec((n, 1, c_head), lambda i: (0, 0, 0)),
                pl.BlockSpec((c_head, ncp), lambda i: (0, 0)),
                pl.BlockSpec((1, ncp), lambda i: (0, 0)),
            ],
            out_specs=pl.BlockSpec((1, ncp), lambda i: (0, 0)),
        ),
    )(pooled, wcp, bcp)
    return out[:, :n_classes]


# ---------------------------------------------------------------------------
# Pure-JAX reference (im2col formulation) for a numerics sanity check
# ---------------------------------------------------------------------------
def _reference_forward(x, w_stem, b_stem, w_head, b_head, w_cls, b_cls):
    x = jnp.squeeze(x, axis=0).transpose(0, 2, 3, 1)     # NHWC
    n, h, w, c = x.shape
    ho, wo = h // 2, w // 2
    xp = jnp.pad(x, ((0, 0), (0, 1), (0, 1), (0, 0)))
    patches = jnp.stack(
        [xp[:, kh:kh + 2 * ho:2, kw:kw + 2 * wo:2, :]
         for kh in range(3) for kw in range(3)], axis=3)  # (N, Ho, Wo, 9, C)
    patches = patches.reshape(n * ho * wo, 9 * c)
    stem = patches @ w_stem.reshape(9 * c, -1) + b_stem
    stem = stem * jax.nn.sigmoid(stem)
    feat = stem @ w_head + b_head
    feat = feat * jax.nn.sigmoid(feat)
    feat = feat.reshape(n, ho * wo, -1)
    pooled = feat.mean(axis=1)                            # (N, 1280)
    flat = jnp.max(pooled, axis=0, keepdims=True)         # (1, 1280)
    return flat @ w_cls + b_cls


# ---------------------------------------------------------------------------
# Main
# ---------------------------------------------------------------------------
if __name__ == "__main__":
    key = jax.random.PRNGKey(0)
    n_classes = 4
    n_img, c_in, hh, ww = 2, 3, 32, 32
    c_stem, c_head = 24, 1280

    ks = jax.random.split(key, 7)
    x = jax.random.normal(ks[0], (1, n_img, c_in, hh, ww), jnp.float32)

    # Deterministic synthetic parameters (shapes follow the module skeleton).
    w_stem = jax.random.normal(ks[1], (3, 3, c_in, c_stem), jnp.float32) * 0.1
    b_stem = jax.random.normal(ks[2], (c_stem,), jnp.float32) * 0.01
    w_head = jax.random.normal(ks[3], (c_stem, c_head), jnp.float32) * 0.1
    b_head = jax.random.normal(ks[4], (c_head,), jnp.float32) * 0.01
    # nn.Linear(1280, n_classes): stored transposed so the kernel does x @ W + b.
    w_cls = jax.random.normal(ks[5], (c_head, n_classes), jnp.float32) * 0.02
    b_cls = jax.random.normal(ks[6], (n_classes,), jnp.float32) * 0.01

    fwd = jax.jit(covnet_effi_forward)
    out = jax.block_until_ready(
        fwd(x, w_stem, b_stem, w_head, b_head, w_cls, b_cls))

    assert out.shape == (1, n_classes)
    assert bool(jnp.all(jnp.isfinite(out)))

    ref = _reference_forward(x, w_stem, b_stem, w_head, b_head, w_cls, b_cls)
    assert jnp.allclose(out, ref, rtol=5e-2, atol=5e-2), (out, ref)

    print("KERNEL_OK")
</pallas_src>

<mosaic_0001>
module attributes {stable_mosaic.version = 11 : i64} {
  func.func @_fused_backbone_kernel(%arg0: i32, %arg1: i32, %arg2: memref<1x17x17x16xf32, #tpu.memory_space<vmem>>, %arg3: memref<4x16x32xbf16, #tpu.memory_space<vmem>>, %arg4: memref<1x32xf32, #tpu.memory_space<vmem>>, %arg5: memref<32x256xbf16, #tpu.memory_space<vmem>>, %arg6: memref<1x256xf32, #tpu.memory_space<vmem>>, %arg7: memref<1x1x256xf32, #tpu.memory_space<vmem>>, %arg8: memref<256x32xbf16, #tpu.memory_space<vmem>>) attributes {dimension_semantics = [#tpu.dimension_semantics<parallel>, #tpu.dimension_semantics<arbitrary>], iteration_bounds = array<i64: 2, 5>, scalar_prefetch = 0 : i64, scratch_operands = 1 : i64, tpu.core_type = #tpu.core_type<tc>, window_params = [{transform_indices = @transform_0, window_bounds = array<i64: 1, 17, 17, 16>}, {pipeline_mode = #tpu.pipeline_mode<synchronous>, transform_indices = @transform_1, window_bounds = array<i64: 4, 16, 32>}, {pipeline_mode = #tpu.pipeline_mode<synchronous>, transform_indices = @transform_2, window_bounds = array<i64: 1, 32>}, {transform_indices = @transform_3, window_bounds = array<i64: 32, 256>}, {transform_indices = @transform_4, window_bounds = array<i64: 1, 256>}, {transform_indices = @transform_5, window_bounds = array<i64: 1, 1, 256>}]} {
    %c0_i32 = arith.constant 0 : i32
    %0 = arith.cmpi eq, %arg1, %c0_i32 : i32
    %1 = arith.extui %0 : i1 to i32
    %c0_i32_0 = arith.constant 0 : i32
    %2 = arith.cmpi ne, %1, %c0_i32_0 : i32
    scf.if %2 {
      %cst_12 = arith.constant 0.000000e+00 : f32
      %21 = vector.broadcast %cst_12 : f32 to vector<256x32xf32>
      %c0_13 = arith.constant 0 : index
      %c0_14 = arith.constant 0 : index
      %c0_15 = arith.constant 0 : index
      %c0_16 = arith.constant 0 : index
      %22 = vector.load %arg2[%c0_13, %c0_14, %c0_15, %c0_16] : memref<1x17x17x16xf32, #tpu.memory_space<vmem>>, vector<1x16x16x16xf32>
      %23 = vector.shape_cast %22 : vector<1x16x16x16xf32> to vector<16x16x16xf32>
      %24 = vector.shape_cast %23 : vector<16x16x16xf32> to vector<256x16xf32>
      %25 = arith.truncf %24 : vector<256x16xf32> to vector<256x16xbf16>
      %c0_17 = arith.constant 0 : index
      %c0_18 = arith.constant 0 : index
      %c0_19 = arith.constant 0 : index
      %26 = vector.load %arg3[%c0_17, %c0_18, %c0_19] : memref<4x16x32xbf16, #tpu.memory_space<vmem>>, vector<1x16x32xbf16>
      %27 = vector.shape_cast %26 : vector<1x16x32xbf16> to vector<16x32xbf16>
      %cst_20 = arith.constant dense<0.000000e+00> : vector<256x32xf32>
      %28 = tpu.matmul %25, %27, %cst_20 {dimension_numbers = #tpu.dot_dimension_numbers<[1], [0], [0], [1], [0, 0, 1, 1], [], []>} : vector<256x16xbf16>, vector<16x32xbf16>, vector<256x32xf32> -> vector<256x32xf32>
      %29 = arith.addf %21, %28 : vector<256x32xf32>
      %c0_21 = arith.constant 0 : index
      %c0_22 = arith.constant 0 : index
      %c1 = arith.constant 1 : index
      %c0_23 = arith.constant 0 : index
      %30 = vector.load %arg2[%c0_21, %c0_22, %c1, %c0_23] : memref<1x17x17x16xf32, #tpu.memory_space<vmem>>, vector<1x16x16x16xf32>
      %31 = vector.shape_cast %30 : vector<1x16x16x16xf32> to vector<16x16x16xf32>
      %32 = vector.shape_cast %31 : vector<16x16x16xf32> to vector<256x16xf32>
      %33 = arith.truncf %32 : vector<256x16xf32> to vector<256x16xbf16>
      %c1_24 = arith.constant 1 : index
      %c0_25 = arith.constant 0 : index
      %c0_26 = arith.constant 0 : index
      %34 = vector.load %arg3[%c1_24, %c0_25, %c0_26] : memref<4x16x32xbf16, #tpu.memory_space<vmem>>, vector<1x16x32xbf16>
      %35 = vector.shape_cast %34 : vector<1x16x32xbf16> to vector<16x32xbf16>
      %cst_27 = arith.constant dense<0.000000e+00> : vector<256x32xf32>
      %36 = tpu.matmul %33, %35, %cst_27 {dimension_numbers = #tpu.dot_dimension_numbers<[1], [0], [0], [1], [0, 0, 1, 1], [], []>} : vector<256x16xbf16>, vector<16x32xbf16>, vector<256x32xf32> -> vector<256x32xf32>
      %37 = arith.addf %29, %36 : vector<256x32xf32>
      %c0_28 = arith.constant 0 : index
      %c1_29 = arith.constant 1 : index
      %c0_30 = arith.constant 0 : index
      %c0_31 = arith.constant 0 : index
      %38 = vector.load %arg2[%c0_28, %c1_29, %c0_30, %c0_31] : memref<1x17x17x16xf32, #tpu.memory_space<vmem>>, vector<1x16x16x16xf32>
      %39 = vector.shape_cast %38 : vector<1x16x16x16xf32> to vector<16x16x16xf32>
      %40 = vector.shape_cast %39 : vector<16x16x16xf32> to vector<256x16xf32>
      %41 = arith.truncf %40 : vector<256x16xf32> to vector<256x16xbf16>
      %c2 = arith.constant 2 : index
      %c0_32 = arith.constant 0 : index
      %c0_33 = arith.constant 0 : index
      %42 = vector.load %arg3[%c2, %c0_32, %c0_33] : memref<4x16x32xbf16, #tpu.memory_space<vmem>>, vector<1x16x32xbf16>
      %43 = vector.shape_cast %42 : vector<1x16x32xbf16> to vector<16x32xbf16>
      %cst_34 = arith.constant dense<0.000000e+00> : vector<256x32xf32>
      %44 = tpu.matmul %41, %43, %cst_34 {dimension_numbers = #tpu.dot_dimension_numbers<[1], [0], [0], [1], [0, 0, 1, 1], [], []>} : vector<256x16xbf16>, vector<16x32xbf16>, vector<256x32xf32> -> vector<256x32xf32>
      %45 = arith.addf %37, %44 : vector<256x32xf32>
      %c0_35 = arith.constant 0 : index
      %c1_36 = arith.constant 1 : index
      %c1_37 = arith.constant 1 : index
      %c0_38 = arith.constant 0 : index
      %46 = vector.load %arg2[%c0_35, %c1_36, %c1_37, %c0_38] : memref<1x17x17x16xf32, #tpu.memory_space<vmem>>, vector<1x16x16x16xf32>
      %47 = vector.shape_cast %46 : vector<1x16x16x16xf32> to vector<16x16x16xf32>
      %48 = vector.shape_cast %47 : vector<16x16x16xf32> to vector<256x16xf32>
      %49 = arith.truncf %48 : vector<256x16xf32> to vector<256x16xbf16>
      %c3 = arith.constant 3 : index
      %c0_39 = arith.constant 0 : index
      %c0_40 = arith.constant 0 : index
      %50 = vector.load %arg3[%c3, %c0_39, %c0_40] : memref<4x16x32xbf16, #tpu.memory_space<vmem>>, vector<1x16x32xbf16>
      %51 = vector.shape_cast %50 : vector<1x16x32xbf16> to vector<16x32xbf16>
      %cst_41 = arith.constant dense<0.000000e+00> : vector<256x32xf32>
      %52 = tpu.matmul %49, %51, %cst_41 {dimension_numbers = #tpu.dot_dimension_numbers<[1], [0], [0], [1], [0, 0, 1, 1], [], []>} : vector<256x16xbf16>, vector<16x32xbf16>, vector<256x32xf32> -> vector<256x32xf32>
      %53 = arith.addf %45, %52 : vector<256x32xf32>
      %c0_42 = arith.constant 0 : index
      %c0_43 = arith.constant 0 : index
      %54 = vector.load %arg4[%c0_42, %c0_43] : memref<1x32xf32, #tpu.memory_space<vmem>>, vector<1x32xf32>
      %55 = vector.broadcast %54 : vector<1x32xf32> to vector<256x32xf32>
      %56 = arith.addf %53, %55 : vector<256x32xf32>
      %57 = arith.negf %56 : vector<256x32xf32>
      %58 = math.exp %57 : vector<256x32xf32>
      %cst_44 = arith.constant 1.000000e+00 : f32
      %59 = vector.broadcast %cst_44 : f32 to vector<256x32xf32>
      %60 = arith.addf %59, %58 : vector<256x32xf32>
      %61 = arith.divf %59, %60 : vector<256x32xf32>
      %62 = arith.mulf %56, %61 : vector<256x32xf32>
      %63 = arith.truncf %62 : vector<256x32xf32> to vector<256x32xbf16>
      %c0_45 = arith.constant 0 : index
      %c0_46 = arith.constant 0 : index
      %64 = vector.load %arg8[%c0_45, %c0_46] : memref<256x32xbf16, #tpu.memory_space<vmem>>, vector<256x32xbf16>
      tpu.vector_store %arg8[%c0_45, %c0_46], %63 {strides = array<i32>} : memref<256x32xbf16, #tpu.memory_space<vmem>>, vector<256x32xbf16>,
    } else {
    }
    %c0 = arith.constant 0 : index
    %c0_1 = arith.constant 0 : index
    %3 = vector.load %arg8[%c0, %c0_1] : memref<256x32xbf16, #tpu.memory_space<vmem>>, vector<256x32xbf16>
    %c0_2 = arith.constant 0 : index
    %c0_3 = arith.constant 0 : index
    %4 = vector.load %arg5[%c0_2, %c0_3] : memref<32x256xbf16, #tpu.memory_space<vmem>>, vector<32x256xbf16>
    %cst = arith.constant dense<0.000000e+00> : vector<256x256xf32>
    %5 = tpu.matmul %3, %4, %cst {dimension_numbers = #tpu.dot_dimension_numbers<[1], [0], [0], [1], [0, 0, 1, 1], [], []>} : vector<256x32xbf16>, vector<32x256xbf16>, vector<256x256xf32> -> vector<256x256xf32>
    %c0_4 = arith.constant 0 : index
    %c0_5 = arith.constant 0 : index
    %6 = vector.load %arg6[%c0_4, %c0_5] : memref<1x256xf32, #tpu.memory_space<vmem>>, vector<1x256xf32>
    %7 = vector.broadcast %6 : vector<1x256xf32> to vector<256x256xf32>
    %8 = arith.addf %5, %7 : vector<256x256xf32>
    %9 = arith.negf %8 : vector<256x256xf32>
    %10 = math.exp %9 : vector<256x256xf32>
    %cst_6 = arith.constant 1.000000e+00 : f32
    %11 = vector.broadcast %cst_6 : f32 to vector<256x256xf32>
    %12 = arith.addf %11, %10 : vector<256x256xf32>
    %13 = arith.divf %11, %12 : vector<256x256xf32>
    %14 = arith.mulf %8, %13 : vector<256x256xf32>
    %cst_7 = arith.constant dense<0.000000e+00> : vector<256xf32>
    %15 = vector.multi_reduction <add>, %14, %cst_7 [0] : vector<256x256xf32> to vector<256xf32>
    %16 = vector.shape_cast %15 : vector<256xf32> to vector<1x256xf32>
    %cst_8 = arith.constant 2.560000e+02 : f32
    %17 = vector.broadcast %cst_8 : f32 to vector<1x256xf32>
    %18 = arith.divf %16, %17 : vector<1x256xf32>
    %19 = vector.shape_cast %18 : vector<1x256xf32> to vector<1x1x256xf32>
    %c0_9 = arith.constant 0 : index
    %c0_10 = arith.constant 0 : index
    %c0_11 = arith.constant 0 : index
    %20 = vector.load %arg7[%c0_9, %c0_10, %c0_11] : memref<1x1x256xf32, #tpu.memory_space<vmem>>, vector<1x1x256xf32>
    tpu.vector_store %arg7[%c0_9, %c0_10, %c0_11], %19 {strides = array<i32>} : memref<1x1x256xf32, #tpu.memory_space<vmem>>, vector<1x1x256xf32>,
    return
  }
  func.func @transform_0(%arg0: i32, %arg1: i32) -> (i32, i32, i32, i32) {
    %c0_i32 = arith.constant 0 : i32
    %c0_i32_0 = arith.constant 0 : i32
    %c0_i32_1 = arith.constant 0 : i32
    %c0_i32_2 = arith.constant 0 : i32
    return %arg0, %c0_i32, %c0_i32_0, %c0_i32_1 : i32, i32, i32, i32
  }
  func.func @transform_1(%arg0: i32, %arg1: i32) -> (i32, i32, i32) {
    %c0_i32 = arith.constant 0 : i32
    %c0_i32_0 = arith.constant 0 : i32
    %c0_i32_1 = arith.constant 0 : i32
    %c0_i32_2 = arith.constant 0 : i32
    return %c0_i32, %c0_i32_0, %c0_i32_1 : i32, i32, i32
  }
  func.func @transform_2(%arg0: i32, %arg1: i32) -> (i32, i32) {
    %c0_i32 = arith.constant 0 : i32
    %c0_i32_0 = arith.constant 0 : i32
    %c0_i32_1 = arith.constant 0 : i32
    return %c0_i32, %c0_i32_0 : i32, i32
  }
  func.func @transform_3(%arg0: i32, %arg1: i32) -> (i32, i32) {
    %c0_i32 = arith.constant 0 : i32
    %c0_i32_0 = arith.constant 0 : i32
    return %c0_i32, %arg1 : i32, i32
  }
  func.func @transform_4(%arg0: i32, %arg1: i32) -> (i32, i32) {
    %c0_i32 = arith.constant 0 : i32
    %c0_i32_0 = arith.constant 0 : i32
    return %c0_i32, %arg1 : i32, i32
  }
  func.func @transform_5(%arg0: i32, %arg1: i32) -> (i32, i32, i32) {
    %c0_i32 = arith.constant 0 : i32
    %c0_i32_0 = arith.constant 0 : i32
    return %arg0, %c0_i32, %arg1 : i32, i32, i32
  }
}

module attributes {stable_mosaic.version = 11 : i64} {
  func.func @_head_kernel(%arg0: i32, %arg1: memref<2x1x1280xf32, #tpu.memory_space<vmem>>, %arg2: memref<1280x128xf32, #tpu.memory_space<vmem>>, %arg3: memref<1x128xf32, #tpu.memory_space<vmem>>, %arg4: memref<1x128xf32, #tpu.memory_space<vmem>>) attributes {dimension_semantics = [#tpu.dimension_semantics<arbitrary>], iteration_bounds = array<i64: 1>, scalar_prefetch = 0 : i64, scratch_operands = 0 : i64, tpu.core_type = #tpu.core_type<tc>, window_params = [{pipeline_mode = #tpu.pipeline_mode<synchronous>, transform_indices = @transform_0, window_bounds = array<i64: 2, 1, 1280>}, {pipeline_mode = #tpu.pipeline_mode<synchronous>, transform_indices = @transform_1, window_bounds = array<i64: 1280, 128>}, {pipeline_mode = #tpu.pipeline_mode<synchronous>, transform_indices = @transform_2, window_bounds = array<i64: 1, 128>}, {pipeline_mode = #tpu.pipeline_mode<synchronous>, transform_indices = @transform_3, window_bounds = array<i64: 1, 128>}]} {
    %c0 = arith.constant 0 : index
    %c0_0 = arith.constant 0 : index
    %c0_1 = arith.constant 0 : index
    %0 = vector.load %arg1[%c0, %c0_0, %c0_1] : memref<2x1x1280xf32, #tpu.memory_space<vmem>>, vector<2x1x1280xf32>
    %cst = arith.constant dense<0xFF800000> : vector<1x1280xf32>
    %1 = vector.multi_reduction <maximumf>, %0, %cst [0] : vector<2x1x1280xf32> to vector<1x1280xf32>
    %c0_2 = arith.constant 0 : index
    %c0_3 = arith.constant 0 : index
    %2 = vector.load %arg2[%c0_2, %c0_3] : memref<1280x128xf32, #tpu.memory_space<vmem>>, vector<1280x128xf32>
    %cst_4 = arith.constant dense<0.000000e+00> : vector<1x128xf32>
    %3 = tpu.matmul %1, %2, %cst_4 {dimension_numbers = #tpu.dot_dimension_numbers<[1], [0], [0], [1], [0, 0, 1, 1], [], []>} : vector<1x1280xf32>, vector<1280x128xf32>, vector<1x128xf32> -> vector<1x128xf32>
    %c0_5 = arith.constant 0 : index
    %c0_6 = arith.constant 0 : index
    %4 = vector.load %arg3[%c0_5, %c0_6] : memref<1x128xf32, #tpu.memory_space<vmem>>, vector<1x128xf32>
    %5 = arith.addf %3, %4 : vector<1x128xf32>
    %c0_7 = arith.constant 0 : index
    %c0_8 = arith.constant 0 : index
    %6 = vector.load %arg4[%c0_7, %c0_8] : memref<1x128xf32, #tpu.memory_space<vmem>>, vector<1x128xf32>
    tpu.vector_store %arg4[%c0_7, %c0_8], %5 {strides = array<i32>} : memref<1x128xf32, #tpu.memory_space<vmem>>, vector<1x128xf32>,
    return
  }
  func.func @transform_0(%arg0: i32) -> (i32, i32, i32) {
    %c0_i32 = arith.constant 0 : i32
    %c0_i32_0 = arith.constant 0 : i32
    %c0_i32_1 = arith.constant 0 : i32
    %c0_i32_2 = arith.constant 0 : i32
    return %c0_i32, %c0_i32_0, %c0_i32_1 : i32, i32, i32
  }
  func.func @transform_1(%arg0: i32) -> (i32, i32) {
    %c0_i32 = arith.constant 0 : i32
    %c0_i32_0 = arith.constant 0 : i32
    %c0_i32_1 = arith.constant 0 : i32
    return %c0_i32, %c0_i32_0 : i32, i32
  }
  func.func @transform_2(%arg0: i32) -> (i32, i32) {
    %c0_i32 = arith.constant 0 : i32
    %c0_i32_0 = arith.constant 0 : i32
    %c0_i32_1 = arith.constant 0 : i32
    return %c0_i32, %c0_i32_0 : i32, i32
  }
  func.func @transform_3(%arg0: i32) -> (i32, i32) {
    %c0_i32 = arith.constant 0 : i32
    %c0_i32_0 = arith.constant 0 : i32
    %c0_i32_1 = arith.constant 0 : i32
    return %c0_i32, %c0_i32_0 : i32, i32
  }
}

</mosaic_0001>

<llo_original>
// kernel: covnet_effi_forward.3
$region0: #{covnet_effi_forward.3}
  #allocation0 [shape = 'u32[]', space=smem, size = 0x4, offset = 0x4, fixed_abs, tag = 'smem constant byte address 0x4 - core index']
  #allocation1 [shape = 'u32[144,128]{1,0:T(1,128)}', space=vmem, size = 0x12000, scoped, tag = 'internal scratch']
  %s0 = inlined_call_operand.vmem [shape: f32[2,1,1280], index: 0, kind: input, shape index: {}]
  %s1 = inlined_call_operand.vmem [shape: f32[1280,128], index: 1, kind: input, shape index: {}]
  %s2 = inlined_call_operand.vmem [shape: f32[1,128], index: 2, kind: input, shape index: {}]
  %s3 = inlined_call_operand.hbm [shape: f32[1,128], index: 3, kind: output, shape index: {}]
  %s4 = sld [smem:[#allocation0]]
  $region22: #{covnet_effi_forward.3} parent=0
    _
  %s6 = ssub.s32 1, %s4
  %s7 = scalar_select 0, %s6, %s4
  $region1: #{covnet_effi_forward.3} parent=0
    #allocation2 [shape = 'u8[512]{0}', space=vmem, size = 0x400, scoped, tag = 'output window, operand 0, single buffered']
    #allocation3 [shape = 's32[1]{0}', space=sflag, size = 0x4, scoped, tag = 'scoped memory for covnet_effi_forward.3']
    %8 = vsyncpa [#allocation3], 0
    // Predicated region
    $region2: #{covnet_effi_forward.3} parent=1 // pred_check
      _
    $region3: #{covnet_effi_forward.3} parent=1 // pred_check_branch
      %10 = sbr.rel (0) target = $region5
    $region4: #{covnet_effi_forward.3} parent=1 // pred_region
      _
    $region5: #{covnet_effi_forward.3} parent=1 // pred_fallthru
      _
    // Predicated region
    $region6: #{covnet_effi_forward.3} parent=1 // pred_check
      _
    $region7: #{covnet_effi_forward.3} parent=1 // pred_check_branch
      %12 = sbr.rel (0) target = $region9
    $region8: #{covnet_effi_forward.3} parent=1 // pred_region
      _
    $region9: #{covnet_effi_forward.3} parent=1 // pred_fallthru
      _
    // Predicated region
    $region10: #{covnet_effi_forward.3} parent=1 // pred_check
      _
    $region11: #{covnet_effi_forward.3} parent=1 // pred_check_branch
      %14 = sbr.rel (0) target = $region13
    $region12: #{covnet_effi_forward.3} parent=1 // pred_region
      _
    $region13: #{covnet_effi_forward.3} parent=1 // pred_fallthru
      _
    %v15 = vld [vmem:[%s0] sm:$0xff]
    %v16 = vld [vmem:[%s0 + $0x8] sm:$0x3]
    %v17 = vld [vmem:[%s0 + $0xa] sm:$0xff]
    %v18 = vld [vmem:[%s0 + $0x12] sm:$0x3]
    %v19 = vmax.f32 %v15, %v17
    %v20 = vlaneseq
    %vm21 = vcmp.ge.s32.totalorder %v20, 0
    %vm22 = vcmp.lt.s32.totalorder %v20, 256
    %vm23 = vmand %vm21, %vm22
    %v24 = vsel %vm23, %v16, -inf
    %v25 = vsel %vm23, %v18, -inf
    %v26 = vmax.f32 %v24, %v25
    %v27 = vld [vmem:[%s1] sm:$0xff]
    %v28 = vld [vmem:[%s1 + $0x8] sm:$0xff]
    %v29 = vld [vmem:[%s1 + $0x10] sm:$0xff]
    %v30 = vld [vmem:[%s1 + $0x18] sm:$0xff]
    %v31 = vld [vmem:[%s1 + $0x20] sm:$0xff]
    %v32 = vld [vmem:[%s1 + $0x28] sm:$0xff]
    %v33 = vld [vmem:[%s1 + $0x30] sm:$0xff]
    %v34 = vld [vmem:[%s1 + $0x38] sm:$0xff]
    %v35 = vld [vmem:[%s1 + $0x40] sm:$0xff]
    %v36 = vld [vmem:[%s1 + $0x48] sm:$0xff]
    %v37 = vld [vmem:[%s1 + $0x50] sm:$0xff]
    %v38 = vld [vmem:[%s1 + $0x58] sm:$0xff]
    %v39 = vld [vmem:[%s1 + $0x60] sm:$0xff]
    %v40 = vld [vmem:[%s1 + $0x68] sm:$0xff]
    %v41 = vld [vmem:[%s1 + $0x70] sm:$0xff]
    %v42 = vld [vmem:[%s1 + $0x78] sm:$0xff]
    %v43 = vld [vmem:[%s1 + $0x80] sm:$0xff]
    %v44 = vld [vmem:[%s1 + $0x88] sm:$0xff]
    %v45 = vld [vmem:[%s1 + $0x90] sm:$0xff]
    %v46 = vld [vmem:[%s1 + $0x98] sm:$0xff]
    %v47 = vld [vmem:[%s1 + $0xa0] sm:$0xff]
    %v48 = vld [vmem:[%s1 + $0xa8] sm:$0xff]
    %v49 = vld [vmem:[%s1 + $0xb0] sm:$0xff]
    %v50 = vld [vmem:[%s1 + $0xb8] sm:$0xff]
    %v51 = vld [vmem:[%s1 + $0xc0] sm:$0xff]
    %v52 = vld [vmem:[%s1 + $0xc8] sm:$0xff]
    %v53 = vld [vmem:[%s1 + $0xd0] sm:$0xff]
    %v54 = vld [vmem:[%s1 + $0xd8] sm:$0xff]
    %v55 = vld [vmem:[%s1 + $0xe0] sm:$0xff]
    %v56 = vld [vmem:[%s1 + $0xe8] sm:$0xff]
    %v57 = vld [vmem:[%s1 + $0xf0] sm:$0xff]
    %v58 = vld [vmem:[%s1 + $0xf8] sm:$0xff]
    %v59 = vld [vmem:[%s1 + $0x100] sm:$0xff]
    %v60 = vld [vmem:[%s1 + $0x108] sm:$0xff]
    %v61 = vld [vmem:[%s1 + $0x110] sm:$0xff]
    %v62 = vld [vmem:[%s1 + $0x118] sm:$0xff]
    %v63 = vld [vmem:[%s1 + $0x120] sm:$0xff]
    %v64 = vld [vmem:[%s1 + $0x128] sm:$0xff]
    %v65 = vld [vmem:[%s1 + $0x130] sm:$0xff]
    %v66 = vld [vmem:[%s1 + $0x138] sm:$0xff]
    %v67 = vld [vmem:[%s1 + $0x140] sm:$0xff]
    %v68 = vld [vmem:[%s1 + $0x148] sm:$0xff]
    %v69 = vld [vmem:[%s1 + $0x150] sm:$0xff]
    %v70 = vld [vmem:[%s1 + $0x158] sm:$0xff]
    %v71 = vld [vmem:[%s1 + $0x160] sm:$0xff]
    %v72 = vld [vmem:[%s1 + $0x168] sm:$0xff]
    %v73 = vld [vmem:[%s1 + $0x170] sm:$0xff]
    %v74 = vld [vmem:[%s1 + $0x178] sm:$0xff]
    %v75 = vld [vmem:[%s1 + $0x180] sm:$0xff]
    %v76 = vld [vmem:[%s1 + $0x188] sm:$0xff]
    %v77 = vld [vmem:[%s1 + $0x190] sm:$0xff]
    %v78 = vld [vmem:[%s1 + $0x198] sm:$0xff]
    %v79 = vld [vmem:[%s1 + $0x1a0] sm:$0xff]
    %v80 = vld [vmem:[%s1 + $0x1a8] sm:$0xff]
    %v81 = vld [vmem:[%s1 + $0x1b0] sm:$0xff]
    %v82 = vld [vmem:[%s1 + $0x1b8] sm:$0xff]
    %v83 = vld [vmem:[%s1 + $0x1c0] sm:$0xff]
    %v84 = vld [vmem:[%s1 + $0x1c8] sm:$0xff]
    %v85 = vld [vmem:[%s1 + $0x1d0] sm:$0xff]
    %v86 = vld [vmem:[%s1 + $0x1d8] sm:$0xff]
    %v87 = vld [vmem:[%s1 + $0x1e0] sm:$0xff]
    %v88 = vld [vmem:[%s1 + $0x1e8] sm:$0xff]
    %v89 = vld [vmem:[%s1 + $0x1f0] sm:$0xff]
    %v90 = vld [vmem:[%s1 + $0x1f8] sm:$0xff]
    %v91 = vld [vmem:[%s1 + $0x200] sm:$0xff]
    %v92 = vld [vmem:[%s1 + $0x208] sm:$0xff]
    %v93 = vld [vmem:[%s1 + $0x210] sm:$0xff]
    %v94 = vld [vmem:[%s1 + $0x218] sm:$0xff]
    %v95 = vld [vmem:[%s1 + $0x220] sm:$0xff]
    %v96 = vld [vmem:[%s1 + $0x228] sm:$0xff]
    %v97 = vld [vmem:[%s1 + $0x230] sm:$0xff]
    %v98 = vld [vmem:[%s1 + $0x238] sm:$0xff]
    %v99 = vld [vmem:[%s1 + $0x240] sm:$0xff]
    %v100 = vld [vmem:[%s1 + $0x248] sm:$0xff]
    %v101 = vld [vmem:[%s1 + $0x250] sm:$0xff]
    %v102 = vld [vmem:[%s1 + $0x258] sm:$0xff]
    %v103 = vld [vmem:[%s1 + $0x260] sm:$0xff]
    %v104 = vld [vmem:[%s1 + $0x268] sm:$0xff]
    %v105 = vld [vmem:[%s1 + $0x270] sm:$0xff]
    %v106 = vld [vmem:[%s1 + $0x278] sm:$0xff]
    %v107 = vld [vmem:[%s1 + $0x280] sm:$0xff]
    %v108 = vld [vmem:[%s1 + $0x288] sm:$0xff]
    %v109 = vld [vmem:[%s1 + $0x290] sm:$0xff]
    %v110 = vld [vmem:[%s1 + $0x298] sm:$0xff]
    %v111 = vld [vmem:[%s1 + $0x2a0] sm:$0xff]
    %v112 = vld [vmem:[%s1 + $0x2a8] sm:$0xff]
    %v113 = vld [vmem:[%s1 + $0x2b0] sm:$0xff]
    %v114 = vld [vmem:[%s1 + $0x2b8] sm:$0xff]
    %v115 = vld [vmem:[%s1 + $0x2c0] sm:$0xff]
    %v116 = vld [vmem:[%s1 + $0x2c8] sm:$0xff]
    %v117 = vld [vmem:[%s1 + $0x2d0] sm:$0xff]
    %v118 = vld [vmem:[%s1 + $0x2d8] sm:$0xff]
    %v119 = vld [vmem:[%s1 + $0x2e0] sm:$0xff]
    %v120 = vld [vmem:[%s1 + $0x2e8] sm:$0xff]
    %v121 = vld [vmem:[%s1 + $0x2f0] sm:$0xff]
    %v122 = vld [vmem:[%s1 + $0x2f8] sm:$0xff]
    %v123 = vld [vmem:[%s1 + $0x300] sm:$0xff]
    %v124 = vld [vmem:[%s1 + $0x308] sm:$0xff]
    %v125 = vld [vmem:[%s1 + $0x310] sm:$0xff]
    %v126 = vld [vmem:[%s1 + $0x318] sm:$0xff]
    %v127 = vld [vmem:[%s1 + $0x320] sm:$0xff]
    %v128 = vld [vmem:[%s1 + $0x328] sm:$0xff]
    %v129 = vld [vmem:[%s1 + $0x330] sm:$0xff]
    %v130 = vld [vmem:[%s1 + $0x338] sm:$0xff]
    %v131 = vld [vmem:[%s1 + $0x340] sm:$0xff]
    %v132 = vld [vmem:[%s1 + $0x348] sm:$0xff]
    %v133 = vld [vmem:[%s1 + $0x350] sm:$0xff]
    %v134 = vld [vmem:[%s1 + $0x358] sm:$0xff]
    %v135 = vld [vmem:[%s1 + $0x360] sm:$0xff]
    %v136 = vld [vmem:[%s1 + $0x368] sm:$0xff]
    %v137 = vld [vmem:[%s1 + $0x370] sm:$0xff]
    %v138 = vld [vmem:[%s1 + $0x378] sm:$0xff]
    %v139 = vld [vmem:[%s1 + $0x380] sm:$0xff]
    %v140 = vld [vmem:[%s1 + $0x388] sm:$0xff]
    %v141 = vld [vmem:[%s1 + $0x390] sm:$0xff]
    %v142 = vld [vmem:[%s1 + $0x398] sm:$0xff]
    %v143 = vld [vmem:[%s1 + $0x3a0] sm:$0xff]
    %v144 = vld [vmem:[%s1 + $0x3a8] sm:$0xff]
    %v145 = vld [vmem:[%s1 + $0x3b0] sm:$0xff]
    %v146 = vld [vmem:[%s1 + $0x3b8] sm:$0xff]
    %v147 = vld [vmem:[%s1 + $0x3c0] sm:$0xff]
    %v148 = vld [vmem:[%s1 + $0x3c8] sm:$0xff]
    %v149 = vld [vmem:[%s1 + $0x3d0] sm:$0xff]
    %v150 = vld [vmem:[%s1 + $0x3d8] sm:$0xff]
    %v151 = vld [vmem:[%s1 + $0x3e0] sm:$0xff]
    %v152 = vld [vmem:[%s1 + $0x3e8] sm:$0xff]
    %v153 = vld [vmem:[%s1 + $0x3f0] sm:$0xff]
    %v154 = vld [vmem:[%s1 + $0x3f8] sm:$0xff]
    %v155 = vld [vmem:[%s1 + $0x400] sm:$0xff]
    %v156 = vld [vmem:[%s1 + $0x408] sm:$0xff]
    %v157 = vld [vmem:[%s1 + $0x410] sm:$0xff]
    %v158 = vld [vmem:[%s1 + $0x418] sm:$0xff]
    %v159 = vld [vmem:[%s1 + $0x420] sm:$0xff]
    %v160 = vld [vmem:[%s1 + $0x428] sm:$0xff]
    %v161 = vld [vmem:[%s1 + $0x430] sm:$0xff]
    %v162 = vld [vmem:[%s1 + $0x438] sm:$0xff]
    %v163 = vld [vmem:[%s1 + $0x440] sm:$0xff]
    %v164 = vld [vmem:[%s1 + $0x448] sm:$0xff]
    %v165 = vld [vmem:[%s1 + $0x450] sm:$0xff]
    %v166 = vld [vmem:[%s1 + $0x458] sm:$0xff]
    %v167 = vld [vmem:[%s1 + $0x460] sm:$0xff]
    %v168 = vld [vmem:[%s1 + $0x468] sm:$0xff]
    %v169 = vld [vmem:[%s1 + $0x470] sm:$0xff]
    %v170 = vld [vmem:[%s1 + $0x478] sm:$0xff]
    %v171 = vld [vmem:[%s1 + $0x480] sm:$0xff]
    %v172 = vld [vmem:[%s1 + $0x488] sm:$0xff]
    %v173 = vld [vmem:[%s1 + $0x490] sm:$0xff]
    %v174 = vld [vmem:[%s1 + $0x498] sm:$0xff]
    %v175 = vld [vmem:[%s1 + $0x4a0] sm:$0xff]
    %v176 = vld [vmem:[%s1 + $0x4a8] sm:$0xff]
    %v177 = vld [vmem:[%s1 + $0x4b0] sm:$0xff]
    %v178 = vld [vmem:[%s1 + $0x4b8] sm:$0xff]
    %v179 = vld [vmem:[%s1 + $0x4c0] sm:$0xff]
    %v180 = vld [vmem:[%s1 + $0x4c8] sm:$0xff]
    %v181 = vld [vmem:[%s1 + $0x4d0] sm:$0xff]
    %v182 = vld [vmem:[%s1 + $0x4d8] sm:$0xff]
    %v183 = vld [vmem:[%s1 + $0x4e0] sm:$0xff]
    %v184 = vld [vmem:[%s1 + $0x4e8] sm:$0xff]
    %v185 = vld [vmem:[%s1 + $0x4f0] sm:$0xff]
    %v186 = vld [vmem:[%s1 + $0x4f8] sm:$0xff]
    %v187 = vld [vmem:[%s2] sm:$0x1]
    %v190 = vlaneseq
    %v191 = vshrl.u32 %v190, 7
    %v192 = vsub.s32 0, %v191
    %v193 = vrot.slane %v19, %v192
    %v194 = vlaneseq
    %v195 = vshrl.u32 %v194, 7
    %v196 = vsub.s32 1, %v195
    %v197 = vrot.slane %v19, %v196
    %v198 = vlaneseq
    %v199 = vshrl.u32 %v198, 7
    %v200 = vsub.s32 2, %v199
    %v201 = vrot.slane %v19, %v200
    %v202 = vlaneseq
    %v203 = vshrl.u32 %v202, 7
    %v204 = vsub.s32 3, %v203
    %v205 = vrot.slane %v19, %v204
    %v206 = vlaneseq
    %v207 = vshrl.u32 %v206, 7
    %v208 = vsub.s32 4, %v207
    %v209 = vrot.slane %v19, %v208
    %v210 = vlaneseq
    %v211 = vshrl.u32 %v210, 7
    %v212 = vsub.s32 5, %v211
    %v213 = vrot.slane %v19, %v212
    %v214 = vlaneseq
    %v215 = vshrl.u32 %v214, 7
    %v216 = vsub.s32 6, %v215
    %v217 = vrot.slane %v19, %v216
    %v218 = vlaneseq
    %v219 = vshrl.u32 %v218, 7
    %v220 = vsub.s32 7, %v219
    %v221 = vrot.slane %v19, %v220
    %v222 = vlaneseq
    %v223 = vshrl.u32 %v222, 7
    %v224 = vsub.s32 0, %v223
    %v225 = vrot.slane %v26, %v224
    %v226 = vlaneseq
    %v227 = vshrl.u32 %v226, 7
    %v228 = vsub.s32 1, %v227
    %v229 = vrot.slane %v26, %v228
    %240 = vmatprep.subr.mxu0 0.0
    %241 = vmatpush1.msra.mxu0 %v27
    %242 = vmatprep.subr.mxu0 0.0
    %243 = vmatpush1.msra.mxu0 %v28
    %244 = vmatprep.subr.mxu0 0.0
    %245 = vmatpush1.msra.mxu0 %v29
    %246 = vmatprep.subr.mxu0 0.0
    %247 = vmatpush1.msra.mxu0 %v30
    %248 = vmatprep.subr.mxu0 0.0
    %249 = vmatpush1.msra.mxu0 %v31
    %250 = vmatprep.subr.mxu0 0.0
    %251 = vmatpush1.msra.mxu0 %v32
    %252 = vmatprep.subr.mxu0 0.0
    %253 = vmatpush1.msra.mxu0 %v33
    %254 = vmatprep.subr.mxu0 0.0
    %255 = vmatpush1.msra.mxu0 %v34
    %256 = vmatprep.subr.mxu0 0.0
    %257 = vmatpush1.msra.mxu0 %v35
    %258 = vmatprep.subr.mxu0 0.0
    %259 = vmatpush1.msra.mxu0 %v36
    %260 = vmatprep.subr.mxu0 0.0
    %261 = vmatpush1.msra.mxu0 %v37
    %262 = vmatprep.subr.mxu0 0.0
    %263 = vmatpush1.msra.mxu0 %v38
    %264 = vmatprep.subr.mxu0 0.0
    %265 = vmatpush1.msra.mxu0 %v39
    %266 = vmatprep.subr.mxu0 0.0
    %267 = vmatpush1.msra.mxu0 %v40
    %268 = vmatprep.subr.mxu0 0.0
    %269 = vmatpush1.msra.mxu0 %v41
    %270 = vmatprep.subr.mxu0 0.0
    %271 = vmatpush1.msra.mxu0 %v42
    %272 = vmatprep.subr.mxu0 0.0
    %273 = vmatpush1.msra.mxu0 %v43
    %274 = vmatprep.subr.mxu0 0.0
    %275 = vmatpush1.msra.mxu0 %v44
    %276 = vmatprep.subr.mxu0 0.0
    %277 = vmatpush1.msra.mxu0 %v45
    %278 = vmatprep.subr.mxu0 0.0
    %279 = vmatpush1.msra.mxu0 %v46
    %280 = vmatprep.subr.mxu0 0.0
    %281 = vmatpush1.msra.mxu0 %v47
    %282 = vmatprep.subr.mxu0 0.0
    %283 = vmatpush1.msra.mxu0 %v48
    %284 = vmatprep.subr.mxu0 0.0
    %285 = vmatpush1.msra.mxu0 %v49
    %286 = vmatprep.subr.mxu0 0.0
    %287 = vmatpush1.msra.mxu0 %v50
    %288 = vmatprep.subr.mxu0 0.0
    %289 = vmatpush1.msra.mxu0 %v51
    %290 = vmatprep.subr.mxu0 0.0
    %291 = vmatpush1.msra.mxu0 %v52
    %292 = vmatprep.subr.mxu0 0.0
    %293 = vmatpush1.msra.mxu0 %v53
    %294 = vmatprep.subr.mxu0 0.0
    %295 = vmatpush1.msra.mxu0 %v54
    %296 = vmatprep.subr.mxu0 0.0
    %297 = vmatpush1.msra.mxu0 %v55
    %298 = vmatprep.subr.mxu0 0.0
    %299 = vmatpush1.msra.mxu0 %v56
    %300 = vmatprep.subr.mxu0 0.0
    %301 = vmatpush1.msra.mxu0 %v57
    %302 = vmatprep.subr.mxu0 0.0
    %303 = vmatpush1.msra.mxu0 %v58
    %304 = vmatprep.mubr.f32.mxu0 %v197
    %305 = vmatmul.mubr.f32.gmra.mrb[0].mxu0 %v193
    %v306 = vpop.f32.mrb[0].mxu0
    %v307 = vadd.f32 %v187, %v306
    %v308 = vpop.f32.mrb[0].mxu0
    %309 = vdwg.mxu0
    %310 = vmatprep.subr.mxu0 0.0
    %311 = vmatpush1.msra.mxu0 %v59
    %312 = vmatprep.subr.mxu0 0.0
    %313 = vmatpush1.msra.mxu0 %v60
    %314 = vmatprep.subr.mxu0 0.0
    %315 = vmatpush1.msra.mxu0 %v61
    %316 = vmatprep.subr.mxu0 0.0
    %317 = vmatpush1.msra.mxu0 %v62
    %318 = vmatprep.subr.mxu0 0.0
    %319 = vmatpush1.msra.mxu0 %v63
    %320 = vmatprep.subr.mxu0 0.0
    %321 = vmatpush1.msra.mxu0 %v64
    %322 = vmatprep.subr.mxu0 0.0
    %323 = vmatpush1.msra.mxu0 %v65
    %324 = vmatprep.subr.mxu0 0.0
    %325 = vmatpush1.msra.mxu0 %v66
    %326 = vmatprep.subr.mxu0 0.0
    %327 = vmatpush1.msra.mxu0 %v67
    %328 = vmatprep.subr.mxu0 0.0
    %329 = vmatpush1.msra.mxu0 %v68
    %330 = vmatprep.subr.mxu0 0.0
    %331 = vmatpush1.msra.mxu0 %v69
    %332 = vmatprep.subr.mxu0 0.0
    %333 = vmatpush1.msra.mxu0 %v70
    %334 = vmatprep.subr.mxu0 0.0
    %335 = vmatpush1.msra.mxu0 %v71
    %336 = vmatprep.subr.mxu0 0.0
    %337 = vmatpush1.msra.mxu0 %v72
    %338 = vmatprep.subr.mxu0 0.0
    %339 = vmatpush1.msra.mxu0 %v73
    %340 = vmatprep.subr.mxu0 0.0
    %341 = vmatpush1.msra.mxu0 %v74
    %342 = vmatprep.subr.mxu0 0.0
    %343 = vmatpush1.msra.mxu0 %v75
    %344 = vmatprep.subr.mxu0 0.0
    %345 = vmatpush1.msra.mxu0 %v76
    %346 = vmatprep.subr.mxu0 0.0
    %347 = vmatpush1.msra.mxu0 %v77
    %348 = vmatprep.subr.mxu0 0.0
    %349 = vmatpush1.msra.mxu0 %v78
    %350 = vmatprep.subr.mxu0 0.0
    %351 = vmatpush1.msra.mxu0 %v79
    %352 = vmatprep.subr.mxu0 0.0
    %353 = vmatpush1.msra.mxu0 %v80
    %354 = vmatprep.subr.mxu0 0.0
    %355 = vmatpush1.msra.mxu0 %v81
    %356 = vmatprep.subr.mxu0 0.0
    %357 = vmatpush1.msra.mxu0 %v82
    %358 = vmatprep.subr.mxu0 0.0
    %359 = vmatpush1.msra.mxu0 %v83
    %360 = vmatprep.subr.mxu0 0.0
    %361 = vmatpush1.msra.mxu0 %v84
    %362 = vmatprep.subr.mxu0 0.0
    %363 = vmatpush1.msra.mxu0 %v85
    %364 = vmatprep.subr.mxu0 0.0
    %365 = vmatpush1.msra.mxu0 %v86
    %366 = vmatprep.subr.mxu0 0.0
    %367 = vmatpush1.msra.mxu0 %v87
    %368 = vmatprep.subr.mxu0 0.0
    %369 = vmatpush1.msra.mxu0 %v88
    %370 = vmatprep.subr.mxu0 0.0
    %371 = vmatpush1.msra.mxu0 %v89
    %372 = vmatprep.subr.mxu0 0.0
    %373 = vmatpush1.msra.mxu0 %v90
    %374 = vmatprep.mubr.f32.mxu0 %v205
    %375 = vmatmul.mubr.f32.gmra.mrb[0].mxu0 %v201
    %v376 = vpop.f32.mrb[0].mxu0
    %v377 = vadd.f32 %v307, %v376
    %v378 = vpop.f32.mrb[0].mxu0
    %379 = vdwg.mxu0
    %380 = vmatprep.subr.mxu0 0.0
    %381 = vmatpush1.msra.mxu0 %v91
    %382 = vmatprep.subr.mxu0 0.0
    %383 = vmatpush1.msra.mxu0 %v92
    %384 = vmatprep.subr.mxu0 0.0
    %385 = vmatpush1.msra.mxu0 %v93
    %386 = vmatprep.subr.mxu0 0.0
    %387 = vmatpush1.msra.mxu0 %v94
    %388 = vmatprep.subr.mxu0 0.0
    %389 = vmatpush1.msra.mxu0 %v95
    %390 = vmatprep.subr.mxu0 0.0
    %391 = vmatpush1.msra.mxu0 %v96
    %392 = vmatprep.subr.mxu0 0.0
    %393 = vmatpush1.msra.mxu0 %v97
    %394 = vmatprep.subr.mxu0 0.0
    %395 = vmatpush1.msra.mxu0 %v98
    %396 = vmatprep.subr.mxu0 0.0
    %397 = vmatpush1.msra.mxu0 %v99
    %398 = vmatprep.subr.mxu0 0.0
    %399 = vmatpush1.msra.mxu0 %v100
    %400 = vmatprep.subr.mxu0 0.0
    %401 = vmatpush1.msra.mxu0 %v101
    %402 = vmatprep.subr.mxu0 0.0
    %403 = vmatpush1.msra.mxu0 %v102
    %404 = vmatprep.subr.mxu0 0.0
    %405 = vmatpush1.msra.mxu0 %v103
    %406 = vmatprep.subr.mxu0 0.0
    %407 = vmatpush1.msra.mxu0 %v104
    %408 = vmatprep.subr.mxu0 0.0
    %409 = vmatpush1.msra.mxu0 %v105
    %410 = vmatprep.subr.mxu0 0.0
    %411 = vmatpush1.msra.mxu0 %v106
    %412 = vmatprep.subr.mxu0 0.0
    %413 = vmatpush1.msra.mxu0 %v107
    %414 = vmatprep.subr.mxu0 0.0
    %415 = vmatpush1.msra.mxu0 %v108
    %416 = vmatprep.subr.mxu0 0.0
    %417 = vmatpush1.msra.mxu0 %v109
    %418 = vmatprep.subr.mxu0 0.0
    %419 = vmatpush1.msra.mxu0 %v110
    %420 = vmatprep.subr.mxu0 0.0
    %421 = vmatpush1.msra.mxu0 %v111
    %422 = vmatprep.subr.mxu0 0.0
    %423 = vmatpush1.msra.mxu0 %v112
    %424 = vmatprep.subr.mxu0 0.0
    %425 = vmatpush1.msra.mxu0 %v113
    %426 = vmatprep.subr.mxu0 0.0
    %427 = vmatpush1.msra.mxu0 %v114
    %428 = vmatprep.subr.mxu0 0.0
    %429 = vmatpush1.msra.mxu0 %v115
    %430 = vmatprep.subr.mxu0 0.0
    %431 = vmatpush1.msra.mxu0 %v116
    %432 = vmatprep.subr.mxu0 0.0
    %433 = vmatpush1.msra.mxu0 %v117
    %434 = vmatprep.subr.mxu0 0.0
    %435 = vmatpush1.msra.mxu0 %v118
    %436 = vmatprep.subr.mxu0 0.0
    %437 = vmatpush1.msra.mxu0 %v119
    %438 = vmatprep.subr.mxu0 0.0
    %439 = vmatpush1.msra.mxu0 %v120
    %440 = vmatprep.subr.mxu0 0.0
    %441 = vmatpush1.msra.mxu0 %v121
    %442 = vmatprep.subr.mxu0 0.0
    %443 = vmatpush1.msra.mxu0 %v122
    %444 = vmatprep.mubr.f32.mxu0 %v213
    %445 = vmatmul.mubr.f32.gmra.mrb[0].mxu0 %v209
    %v446 = vpop.f32.mrb[0].mxu0
    %v447 = vadd.f32 %v377, %v446
    %v448 = vpop.f32.mrb[0].mxu0
    %449 = vdwg.mxu0
    %450 = vmatprep.subr.mxu0 0.0
    %451 = vmatpush1.msra.mxu0 %v123
    %452 = vmatprep.subr.mxu0 0.0
    %453 = vmatpush1.msra.mxu0 %v124
    %454 = vmatprep.subr.mxu0 0.0
    %455 = vmatpush1.msra.mxu0 %v125
    %456 = vmatprep.subr.mxu0 0.0
    %457 = vmatpush1.msra.mxu0 %v126
    %458 = vmatprep.subr.mxu0 0.0
    %459 = vmatpush1.msra.mxu0 %v127
    %460 = vmatprep.subr.mxu0 0.0
    %461 = vmatpush1.msra.mxu0 %v128
    %462 = vmatprep.subr.mxu0 0.0
    %463 = vmatpush1.msra.mxu0 %v129
    %464 = vmatprep.subr.mxu0 0.0
    %465 = vmatpush1.msra.mxu0 %v130
    %466 = vmatprep.subr.mxu0 0.0
    %467 = vmatpush1.msra.mxu0 %v131
    %468 = vmatprep.subr.mxu0 0.0
    %469 = vmatpush1.msra.mxu0 %v132
    %470 = vmatprep.subr.mxu0 0.0
    %471 = vmatpush1.msra.mxu0 %v133
    %472 = vmatprep.subr.mxu0 0.0
    %473 = vmatpush1.msra.mxu0 %v134
    %474 = vmatprep.subr.mxu0 0.0
    %475 = vmatpush1.msra.mxu0 %v135
    %476 = vmatprep.subr.mxu0 0.0
    %477 = vmatpush1.msra.mxu0 %v136
    %478 = vmatprep.subr.mxu0 0.0
    %479 = vmatpush1.msra.mxu0 %v137
    %480 = vmatprep.subr.mxu0 0.0
    %481 = vmatpush1.msra.mxu0 %v138
    %482 = vmatprep.subr.mxu0 0.0
    %483 = vmatpush1.msra.mxu0 %v139
    %484 = vmatprep.subr.mxu0 0.0
    %485 = vmatpush1.msra.mxu0 %v140
    %486 = vmatprep.subr.mxu0 0.0
    %487 = vmatpush1.msra.mxu0 %v141
    %488 = vmatprep.subr.mxu0 0.0
    %489 = vmatpush1.msra.mxu0 %v142
    %490 = vmatprep.subr.mxu0 0.0
    %491 = vmatpush1.msra.mxu0 %v143
    %492 = vmatprep.subr.mxu0 0.0
    %493 = vmatpush1.msra.mxu0 %v144
    %494 = vmatprep.subr.mxu0 0.0
    %495 = vmatpush1.msra.mxu0 %v145
    %496 = vmatprep.subr.mxu0 0.0
    %497 = vmatpush1.msra.mxu0 %v146
    %498 = vmatprep.subr.mxu0 0.0
    %499 = vmatpush1.msra.mxu0 %v147
    %500 = vmatprep.subr.mxu0 0.0
    %501 = vmatpush1.msra.mxu0 %v148
    %502 = vmatprep.subr.mxu0 0.0
    %503 = vmatpush1.msra.mxu0 %v149
    %504 = vmatprep.subr.mxu0 0.0
    %505 = vmatpush1.msra.mxu0 %v150
    %506 = vmatprep.subr.mxu0 0.0
    %507 = vmatpush1.msra.mxu0 %v151
    %508 = vmatprep.subr.mxu0 0.0
    %509 = vmatpush1.msra.mxu0 %v152
    %510 = vmatprep.subr.mxu0 0.0
    %511 = vmatpush1.msra.mxu0 %v153
    %512 = vmatprep.subr.mxu0 0.0
    %513 = vmatpush1.msra.mxu0 %v154
    %514 = vmatprep.mubr.f32.mxu0 %v221
    %515 = vmatmul.mubr.f32.gmra.mrb[0].mxu0 %v217
    %v516 = vpop.f32.mrb[0].mxu0
    %v517 = vadd.f32 %v447, %v516
    %v518 = vpop.f32.mrb[0].mxu0
    %519 = vdwg.mxu0
    %520 = vmatprep.subr.mxu0 0.0
    %521 = vmatpush1.msra.mxu0 %v155
    %522 = vmatprep.subr.mxu0 0.0
    %523 = vmatpush1.msra.mxu0 %v156
    %524 = vmatprep.subr.mxu0 0.0
    %525 = vmatpush1.msra.mxu0 %v157
    %526 = vmatprep.subr.mxu0 0.0
    %527 = vmatpush1.msra.mxu0 %v158
    %528 = vmatprep.subr.mxu0 0.0
    %529 = vmatpush1.msra.mxu0 %v159
    %530 = vmatprep.subr.mxu0 0.0
    %531 = vmatpush1.msra.mxu0 %v160
    %532 = vmatprep.subr.mxu0 0.0
    %533 = vmatpush1.msra.mxu0 %v161
    %534 = vmatprep.subr.mxu0 0.0
    %535 = vmatpush1.msra.mxu0 %v162
    %536 = vmatprep.subr.mxu0 0.0
    %537 = vmatpush1.msra.mxu0 %v163
    %538 = vmatprep.subr.mxu0 0.0
    %539 = vmatpush1.msra.mxu0 %v164
    %540 = vmatprep.subr.mxu0 0.0
    %541 = vmatpush1.msra.mxu0 %v165
    %542 = vmatprep.subr.mxu0 0.0
    %543 = vmatpush1.msra.mxu0 %v166
    %544 = vmatprep.subr.mxu0 0.0
    %545 = vmatpush1.msra.mxu0 %v167
    %546 = vmatprep.subr.mxu0 0.0
    %547 = vmatpush1.msra.mxu0 %v168
    %548 = vmatprep.subr.mxu0 0.0
    %549 = vmatpush1.msra.mxu0 %v169
    %550 = vmatprep.subr.mxu0 0.0
    %551 = vmatpush1.msra.mxu0 %v170
    %552 = vmatprep.subr.mxu0 0.0
    %553 = vmatpush1.msra.mxu0 %v171
    %554 = vmatprep.subr.mxu0 0.0
    %555 = vmatpush1.msra.mxu0 %v172
    %556 = vmatprep.subr.mxu0 0.0
    %557 = vmatpush1.msra.mxu0 %v173
    %558 = vmatprep.subr.mxu0 0.0
    %559 = vmatpush1.msra.mxu0 %v174
    %560 = vmatprep.subr.mxu0 0.0
    %561 = vmatpush1.msra.mxu0 %v175
    %562 = vmatprep.subr.mxu0 0.0
    %563 = vmatpush1.msra.mxu0 %v176
    %564 = vmatprep.subr.mxu0 0.0
    %565 = vmatpush1.msra.mxu0 %v177
    %566 = vmatprep.subr.mxu0 0.0
    %567 = vmatpush1.msra.mxu0 %v178
    %568 = vmatprep.subr.mxu0 0.0
    %569 = vmatpush1.msra.mxu0 %v179
    %570 = vmatprep.subr.mxu0 0.0
    %571 = vmatpush1.msra.mxu0 %v180
    %572 = vmatprep.subr.mxu0 0.0
    %573 = vmatpush1.msra.mxu0 %v181
    %574 = vmatprep.subr.mxu0 0.0
    %575 = vmatpush1.msra.mxu0 %v182
    %576 = vmatprep.subr.mxu0 0.0
    %577 = vmatpush1.msra.mxu0 %v183
    %578 = vmatprep.subr.mxu0 0.0
    %579 = vmatpush1.msra.mxu0 %v184
    %580 = vmatprep.subr.mxu0 0.0
    %581 = vmatpush1.msra.mxu0 %v185
    %582 = vmatprep.subr.mxu0 0.0
    %583 = vmatpush1.msra.mxu0 %v186
    %584 = vmatprep.mubr.f32.mxu0 %v229
    %585 = vmatmul.mubr.f32.gmra.mrb[0].mxu0 %v225
    %v586 = vpop.f32.mrb[0].mxu0
    %v587 = vadd.f32 %v517, %v586
    %v588 = vpop.f32.mrb[0].mxu0
    %589 = vdwg.mxu0
    %590 = vst [vmem:[#allocation2] sm:$0x1] %v587
    // Predicated region
    $region14: #{covnet_effi_forward.3} parent=1 // pred_check
      _
    $region15: #{covnet_effi_forward.3} parent=1 // pred_check_branch
      %592 = sbr.rel (0) target = $region17
    $region16: #{covnet_effi_forward.3} parent=1 // pred_region
      %s594 = ssub.s32 16, 16
      %595 = vsyncadd [#allocation3], %s594
      %s597 = sshll.u32 [#allocation2], 4
      %s598 = int_to_ptr.vmem [resolvable:$true] %s597
      %600 = dma.vmem_to_hbm [thread:$0]  %s598, 16, %s3, [#allocation3]
    $region17: #{covnet_effi_forward.3} parent=1 // pred_fallthru
      _
    // Predicated region
    $region18: #{covnet_effi_forward.3} parent=1 // pred_check
      _
    $region19: #{covnet_effi_forward.3} parent=1 // pred_check_branch
      %602 = sbr.rel (0) target = $region21
    $region20: #{covnet_effi_forward.3} parent=1 // pred_region
      %603 = dma.done [#allocation3], 16
    $region21: #{covnet_effi_forward.3} parent=1 // pred_fallthru
      _
    %604 = vsyncpa [#allocation3], 1

// kernel: covnet_effi_forward.2
$region0: #{covnet_effi_forward.2}
  #allocation0 [shape = 'u32[]', space=smem, size = 0x4, offset = 0x4, fixed_abs, tag = 'smem constant byte address 0x4 - core index']
  #allocation1 [shape = 'u32[144,128]{1,0:T(1,128)}', space=vmem, size = 0x12000, scoped, tag = 'internal scratch']
  #allocation2 [shape = 'bf16[256,32]{1,0:T(16,128)(2,1)}', space=vmem, size = 0x10000, scoped, tag = 'scratch operand']
  %s0 = inlined_call_operand.vmem [shape: f32[2,17,17,16], index: 0, kind: input, shape index: {}]
  %s1 = inlined_call_operand.vmem [shape: bf16[4,16,32], index: 1, kind: input, shape index: {}]
  %s2 = inlined_call_operand.vmem [shape: f32[1,32], index: 2, kind: input, shape index: {}]
  %s3 = inlined_call_operand.vmem [shape: bf16[32,1280], index: 3, kind: input, shape index: {}]
  %s4 = inlined_call_operand.vmem [shape: f32[1,1280], index: 4, kind: input, shape index: {}]
  %s5 = inlined_call_operand.vmem [shape: f32[2,1,1280], index: 5, kind: output, shape index: {}]
  %s6 = sld [smem:[#allocation0]]
  $region95: #{covnet_effi_forward.2} parent=0
    _
  %s8 = ssub.s32 1, %s6
  %s9 = scalar_select 0, %s8, %s6
  $region1: #{covnet_effi_forward.2} parent=0
    #allocation3 [shape = 'u8[32768]{0}', space=vmem, size = 0x8000, scoped, tag = 'input window, operand 3']
    loop: start=0, step=1, limit=12
    $region2: #{covnet_effi_forward.2} parent=1 // loop_pre_header
      _
    $region3: #{covnet_effi_forward.2} parent=1 // loop_header
      %s11 = sphi 0, %s15
      %p12 = scmp.ge.s32.totalorder %s11, 12
      %s18 = sphi 0, %s30
      %s19 = sphi 0, %s26
      %s20 = sphi 0, %s18
      %s21 = sphi 0, %s19
      %s22 = sphi 0, %s20
      %s23 = sphi 0, %s21
      %s33 = sphi 0, %s35
      %s36 = sphi 0, %s33
      %s37 = sphi 0, %s36
      %s53 = sphi 0, %s37
      %s57 = sphi 0, %s57
      %s59 = sphi 0, %s57
      %s60 = sphi 0, %s59
      %s74 = sphi 0, %s60
      %s78 = sphi 0, %s78
      %s80 = sphi 0, %s78
      %s81 = sphi 0, %s80
      %s95 = sphi 0, %s81
      %s101 = sphi 0, %s103
      %s104 = sphi 0, %s101
      %s105 = sphi 0, %s104
      %s121 = sphi 0, %s105
      %s127 = sphi 0, %s129
      %s130 = sphi 0, %s127
      %s131 = sphi 0, %s130
      %s147 = sphi 0, %s131
      %s155 = sphi 0, %s157
      %s158 = sphi 0, %s155
      %s159 = sphi 0, %s158
      %s175 = sphi 0, %s159
    $region4: #{covnet_effi_forward.2} parent=1 // loop_header_branch
      %14 = sbr.rel (%p12) target = $region8
    $region5: #{covnet_effi_forward.2} parent=1 // loop_body
      %s16 = ssub.s32 %s11, 1
      %s17 = ssub.s32 %s11, 2
      %s24 = sadd.s32 1, %s19
      %p25 = scmp.ge.s32.totalorder %s24, 5
      %s26 = scalar_select %p25, 0, %s24
      %s27 = sadd.s32 1, %s18
      %s28 = scalar_select %p25, %s27, %s18
      %p29 = scmp.ge.s32.totalorder %s28, 2
      %s30 = scalar_select %p29, 0, %s28
      %s31 = ssub.s32 %s18, %s30
      %p32 = scmp.eq.s32.totalorder %s31, 0
      %s34 = sadd.s32 %s33, 1
      %s35 = scalar_select %p32, %s33, %s34
      %p38 = pneg %p32
      %p39 = scmp.eq.s32.totalorder %s11, 9
      %p40 = por %p38, %p39
      %p41 = scmp.ne.s32.totalorder %s33, %s36
      %p42 = scmp.eq.s32.totalorder %s11, 0
      %p43 = por %p41, %p42
      %p44 = scmp.ne.s32.totalorder %s33, %s36
      %p45 = scmp.eq.s32.totalorder %s16, 9
      %p46 = por %p44, %p45
      %p47 = scmp.ne.s32.totalorder %s36, %s37
      %p48 = scmp.eq.s32.totalorder %s16, 0
      %p49 = por %p47, %p48
      %p50 = scmp.ne.s32.totalorder %s36, %s37
      %p51 = scmp.eq.s32.totalorder %s17, 9
      %p52 = por %p50, %p51
      %p54 = scmp.ne.s32.totalorder %s37, %s53
      %p55 = scmp.eq.s32.totalorder %s17, 0
      %p56 = por %p54, %p55
      %s58 = sadd.s32 %s57, 1
      %p61 = scmp.eq.s32.totalorder %s11, 9
      %p62 = scmp.ne.s32.totalorder %s57, %s59
      %p63 = scmp.eq.s32.totalorder %s11, 0
      %p64 = por %p62, %p63
      %p65 = scmp.ne.s32.totalorder %s57, %s59
      %p66 = scmp.eq.s32.totalorder %s16, 9
      %p67 = por %p65, %p66
      %p68 = scmp.ne.s32.totalorder %s59, %s60
      %p69 = scmp.eq.s32.totalorder %s16, 0
      %p70 = por %p68, %p69
      %p71 = scmp.ne.s32.totalorder %s59, %s60
      %p72 = scmp.eq.s32.totalorder %s17, 9
      %p73 = por %p71, %p72
      %p75 = scmp.ne.s32.totalorder %s60, %s74
      %p76 = scmp.eq.s32.totalorder %s17, 0
      %p77 = por %p75, %p76
      %s79 = sadd.s32 %s78, 1
      %p82 = scmp.eq.s32.totalorder %s11, 9
      %p83 = scmp.ne.s32.totalorder %s78, %s80
      %p84 = scmp.eq.s32.totalorder %s11, 0
      %p85 = por %p83, %p84
      %p86 = scmp.ne.s32.totalorder %s78, %s80
      %p87 = scmp.eq.s32.totalorder %s16, 9
      %p88 = por %p86, %p87
      %p89 = scmp.ne.s32.totalorder %s80, %s81
      %p90 = scmp.eq.s32.totalorder %s16, 0
      %p91 = por %p89, %p90
      %p92 = scmp.ne.s32.totalorder %s80, %s81
      %p93 = scmp.eq.s32.totalorder %s17, 9
      %p94 = por %p92, %p93
      %p96 = scmp.ne.s32.totalorder %s81, %s95
      %p97 = scmp.eq.s32.totalorder %s17, 0
      %p98 = por %p96, %p97
      %s99 = ssub.s32 %s19, %s26
      %p100 = scmp.eq.s32.totalorder %s99, 0
      %s102 = sadd.s32 %s101, 1
      %s103 = scalar_select %p100, %s101, %s102
      %p106 = pneg %p100
      %p107 = scmp.eq.s32.totalorder %s11, 9
      %p108 = por %p106, %p107
      %p109 = scmp.ne.s32.totalorder %s101, %s104
      %p110 = scmp.eq.s32.totalorder %s11, 0
      %p111 = por %p109, %p110
      %p112 = scmp.ne.s32.totalorder %s101, %s104
      %p113 = scmp.eq.s32.totalorder %s16, 9
      %p114 = por %p112, %p113
      %p115 = scmp.ne.s32.totalorder %s104, %s105
      %p116 = scmp.eq.s32.totalorder %s16, 0
      %p117 = por %p115, %p116
      %p118 = scmp.ne.s32.totalorder %s104, %s105
      %p119 = scmp.eq.s32.totalorder %s17, 9
      %p120 = por %p118, %p119
      %p122 = scmp.ne.s32.totalorder %s105, %s121
      %p123 = scmp.eq.s32.totalorder %s17, 0
      %p124 = por %p122, %p123
      %s125 = ssub.s32 %s19, %s26
      %p126 = scmp.eq.s32.totalorder %s125, 0
      %s128 = sadd.s32 %s127, 1
      %s129 = scalar_select %p126, %s127, %s128
      %p132 = pneg %p126
      %p133 = scmp.eq.s32.totalorder %s11, 9
      %p134 = por %p132, %p133
      %p135 = scmp.ne.s32.totalorder %s127, %s130
      %p136 = scmp.eq.s32.totalorder %s11, 0
      %p137 = por %p135, %p136
      %p138 = scmp.ne.s32.totalorder %s127, %s130
      %p139 = scmp.eq.s32.totalorder %s16, 9
      %p140 = por %p138, %p139
      %p141 = scmp.ne.s32.totalorder %s130, %s131
      %p142 = scmp.eq.s32.totalorder %s16, 0
      %p143 = por %p141, %p142
      %p144 = scmp.ne.s32.totalorder %s130, %s131
      %p145 = scmp.eq.s32.totalorder %s17, 9
      %p146 = por %p144, %p145
      %p148 = scmp.ne.s32.totalorder %s131, %s147
      %p149 = scmp.eq.s32.totalorder %s17, 0
      %p150 = por %p148, %p149
      %s151 = ssub.s32 %s18, %s30
      %s152 = ssub.s32 %s19, %s26
      %s153 = sor.u32 %s151, %s152
      %p154 = scmp.eq.s32.totalorder %s153, 0
      %s156 = sadd.s32 %s155, 1
      %s157 = scalar_select %p154, %s155, %s156
      %p160 = pneg %p154
      %p161 = scmp.eq.s32.totalorder %s11, 9
      %p162 = por %p160, %p161
      %p163 = scmp.ne.s32.totalorder %s155, %s158
      %p164 = scmp.eq.s32.totalorder %s11, 0
      %p165 = por %p163, %p164
      %p166 = scmp.ne.s32.totalorder %s155, %s158
      %p167 = scmp.eq.s32.totalorder %s16, 9
      %p168 = por %p166, %p167
      %p169 = scmp.ne.s32.totalorder %s158, %s159
      %p170 = scmp.eq.s32.totalorder %s16, 0
      %p171 = por %p169, %p170
      %p172 = scmp.ne.s32.totalorder %s158, %s159
      %p173 = scmp.eq.s32.totalorder %s17, 9
      %p174 = por %p172, %p173
      %p176 = scmp.ne.s32.totalorder %s159, %s175
      %p177 = scmp.eq.s32.totalorder %s17, 0
      %p178 = por %p176, %p177
      %p179 = scmp.le.s32.totalorder 1, %s11
      %p180 = scmp.lt.s32.totalorder %s11, 11
      %p181 = pnand %p179, %p180
      %p182 = pneg %p181
      // Predicated region
      $region9: #{covnet_effi_forward.2} parent=5 // pred_check
        _
      $region10: #{covnet_effi_forward.2} parent=5 // pred_check_branch
        %184 = sbr.rel (%p181) target = $region12
      $region11: #{covnet_effi_forward.2} parent=5 // pred_region
        %s185 = ssub.s32 %s11, 1
        // Predicated region
        $region13: #{covnet_effi_forward.2} parent=11 // pred_check
          %p186 = pneg %p70
        $region14: #{covnet_effi_forward.2} parent=11 // pred_check_branch
          %188 = sbr.rel (%p186) target = $region16
        $region15: #{covnet_effi_forward.2} parent=11 // pred_region
          _
        $region16: #{covnet_effi_forward.2} parent=11 // pred_fallthru
          _
        // Predicated region
        $region17: #{covnet_effi_forward.2} parent=11 // pred_check
          %p189 = pneg %p91
        $region18: #{covnet_effi_forward.2} parent=11 // pred_check_branch
          %191 = sbr.rel (%p189) target = $region20
        $region19: #{covnet_effi_forward.2} parent=11 // pred_region
          _
        $region20: #{covnet_effi_forward.2} parent=11 // pred_fallthru
          _
      $region12: #{covnet_effi_forward.2} parent=5 // pred_fallthru
        _
      %p192 = scmp.lt.s32.totalorder %s11, 10
      // Predicated region
      $region21: #{covnet_effi_forward.2} parent=5 // pred_check
        %p193 = pneg %p192
      $region22: #{covnet_effi_forward.2} parent=5 // pred_check_branch
        %195 = sbr.rel (%p193) target = $region24
      $region23: #{covnet_effi_forward.2} parent=5 // pred_region
        // Predicated region
        $region25: #{covnet_effi_forward.2} parent=23 // pred_check
          %p196 = pneg %p43
        $region26: #{covnet_effi_forward.2} parent=23 // pred_check_branch
          %198 = sbr.rel (%p196) target = $region28
        $region27: #{covnet_effi_forward.2} parent=23 // pred_region
          %p199 = scmp.lt.s32.totalorder %s18, 1
          %s200 = scalar_select %p199, %s18, 1
          %s201 = smul.addr %s200, 51
          %s202 = smul.addr %s201, 8
          %s203 = scalar_lea.vmem %s0, %s202
        $region28: #{covnet_effi_forward.2} parent=23 // pred_fallthru
          _
        // Predicated region
        $region29: #{covnet_effi_forward.2} parent=23 // pred_check
          %p204 = pneg %p111
        $region30: #{covnet_effi_forward.2} parent=23 // pred_check_branch
          %206 = sbr.rel (%p204) target = $region32
        $region31: #{covnet_effi_forward.2} parent=23 // pred_region
          %s207 = sand.u32 %s101, 1
          %s208 = sand.u32 %s101, 1
          %s209 = smul.addr %s208, 32
          %s210 = scalar_lea.vmem [#allocation3], %s209
          %s211 = smul.u32 2, %s19
          %s212 = smul.addr %s211, 4
          %s213 = scalar_lea.vmem %s3, %s212
          // Predicated region
          $region33: #{covnet_effi_forward.2} parent=31 // pred_check
            _
          $region34: #{covnet_effi_forward.2} parent=31 // pred_check_branch
            %215 = sbr.rel (0) target = $region36
          $region35: #{covnet_effi_forward.2} parent=31 // pred_region
            // Predicated region
            $region37: #{covnet_effi_forward.2} parent=35 // pred_check
              _
            $region38: #{covnet_effi_forward.2} parent=35 // pred_check_branch
              %217 = sbr.rel (0) target = $region40
            $region39: #{covnet_effi_forward.2} parent=35 // pred_region
              // Predicated region
              $region52: #{covnet_effi_forward.2} parent=39 // pred_check
                _
              $region53: #{covnet_effi_forward.2} parent=39 // pred_check_branch
                %238 = sbr.rel (0) target = $region55
              $region54: #{covnet_effi_forward.2} parent=39 // pred_region
                loop: start=0, step=1, limit=1
                $region56: #{covnet_effi_forward.2} parent=54 // loop_pre_header
                  _
                $region57: #{covnet_effi_forward.2} parent=54 // loop_header
                  %s240 = sphi 0, %s244
                  %p241 = scmp.ge.s32.totalorder %s240, 1
                  %s245 = sphi %s213, %s213
                  %s246 = sphi %s210, %s210
                $region58: #{covnet_effi_forward.2} parent=54 // loop_header_branch
                  %243 = sbr.rel (%p241) target = $region62
                $region59: #{covnet_effi_forward.2} parent=54 // loop_body
                  %v247 = vld [vmem:[%s245] sm:$0xff]
                  %248 = vst [vmem:[%s246] sm:$0xff] %v247
                  %v249 = vld [vmem:[%s245 + $0x28] sm:$0xff]
                  %250 = vst [vmem:[%s246 + $0x8] sm:$0xff] %v249
                  %v251 = vld [vmem:[%s245 + $0x50] sm:$0xff]
                  %252 = vst [vmem:[%s246 + $0x10] sm:$0xff] %v251
                  %v253 = vld [vmem:[%s245 + $0x78] sm:$0xff]
                  %254 = vst [vmem:[%s246 + $0x18] sm:$0xff] %v253
                $region60: #{covnet_effi_forward.2} parent=54 // loop_footer
                  %s244 = sadd.s32 1, %s240
                $region61: #{covnet_effi_forward.2} parent=54 // loop_footer_branch
                  %239 = sbr.rel target = $region57
                $region62: #{covnet_effi_forward.2} parent=54 // loop_exit
                  _
              $region55: #{covnet_effi_forward.2} parent=39 // pred_fallthru
                _
              // Predicated region
              $region63: #{covnet_effi_forward.2} parent=39 // pred_check
                _
              $region64: #{covnet_effi_forward.2} parent=39 // pred_check_branch
                %256 = sbr.rel target = $region66
              $region65: #{covnet_effi_forward.2} parent=39 // pred_region
                _
              $region66: #{covnet_effi_forward.2} parent=39 // pred_fallthru
                _
            $region40: #{covnet_effi_forward.2} parent=35 // pred_fallthru
              _
            // Predicated region
            $region41: #{covnet_effi_forward.2} parent=35 // pred_check
              _
            $region42: #{covnet_effi_forward.2} parent=35 // pred_check_branch
              %219 = sbr.rel target = $region44
            $region43: #{covnet_effi_forward.2} parent=35 // pred_region
              loop: start=0, step=1, limit=1
              $region45: #{covnet_effi_forward.2} parent=43 // loop_pre_header
                _
              $region46: #{covnet_effi_forward.2} parent=43 // loop_header
                %s222 = sphi 0, %s226
                %p223 = scmp.ge.s32.totalorder %s222, 1
                %s227 = sphi %s213, %s213
                %s228 = sphi %s210, %s210
              $region47: #{covnet_effi_forward.2} parent=43 // loop_header_branch
                %225 = sbr.rel (%p223) target = $region51
              $region48: #{covnet_effi_forward.2} parent=43 // loop_body
                %v229 = vld [vmem:[%s227] sm:$0xff]
                %230 = vst [vmem:[%s228] sm:$0xff] %v229
                %v231 = vld [vmem:[%s227 + $0x28] sm:$0xff]
                %232 = vst [vmem:[%s228 + $0x8] sm:$0xff] %v231
                %v233 = vld [vmem:[%s227 + $0x50] sm:$0xff]
                %234 = vst [vmem:[%s228 + $0x10] sm:$0xff] %v233
                %v235 = vld [vmem:[%s227 + $0x78] sm:$0xff]
                %236 = vst [vmem:[%s228 + $0x18] sm:$0xff] %v235
              $region49: #{covnet_effi_forward.2} parent=43 // loop_footer
                %s226 = sadd.s32 1, %s222
              $region50: #{covnet_effi_forward.2} parent=43 // loop_footer_branch
                %221 = sbr.rel target = $region46
              $region51: #{covnet_effi_forward.2} parent=43 // loop_exit
                _
            $region44: #{covnet_effi_forward.2} parent=35 // pred_fallthru
              _
          $region36: #{covnet_effi_forward.2} parent=31 // pred_fallthru
            _
          %257 = vnop
        $region32: #{covnet_effi_forward.2} parent=23 // pred_fallthru
          _
        // Predicated region
        $region67: #{covnet_effi_forward.2} parent=23 // pred_check
          %p258 = pneg %p137
        $region68: #{covnet_effi_forward.2} parent=23 // pred_check_branch
          %260 = sbr.rel (%p258) target = $region70
        $region69: #{covnet_effi_forward.2} parent=23 // pred_region
          %s261 = smul.u32 2, %s19
          %p262 = scmp.lt.s32.totalorder %s261, 9
          %s263 = scalar_select %p262, %s261, 9
          %s264 = scalar_lea.vmem %s4, %s263
          %s265 = smul.u32 2, %s19
        $region70: #{covnet_effi_forward.2} parent=23 // pred_fallthru
          _
      $region24: #{covnet_effi_forward.2} parent=5 // pred_fallthru
        _
      %p266 = scmp.le.s32.totalorder 1, %s11
      %p267 = scmp.lt.s32.totalorder %s11, 11
      %p268 = pnand %p266, %p267
      %p269 = pneg %p268
      // Predicated region
      $region71: #{covnet_effi_forward.2} parent=5 // pred_check
        _
      $region72: #{covnet_effi_forward.2} parent=5 // pred_check_branch
        %271 = sbr.rel (%p268) target = $region74
      $region73: #{covnet_effi_forward.2} parent=5 // pred_region
        %s272 = ssub.s32 %s11, 1
        %s273 = sand.u32 %s104, 1
        %s274 = sand.u32 %s104, 1
        %s275 = smul.addr %s274, 32
        %s276 = scalar_lea.vmem [#allocation3], %s275
        // Predicated region
        $region75: #{covnet_effi_forward.2} parent=73 // pred_check
          %p277 = pneg %p117
        $region76: #{covnet_effi_forward.2} parent=73 // pred_check_branch
          %279 = sbr.rel (%p277) target = $region78
        $region77: #{covnet_effi_forward.2} parent=73 // pred_region
          _
        $region78: #{covnet_effi_forward.2} parent=73 // pred_fallthru
          _
        %p280 = scmp.lt.s32.totalorder %s20, 1
        %s281 = scalar_select %p280, %s20, 1
        %s282 = smul.addr %s281, 51
        %s283 = smul.addr %s282, 8
        %s284 = scalar_lea.vmem %s0, %s283
        %p285 = pneg %p49
        %p286 = pneg %p46
        %p287 = pneg %p70
        %p288 = pneg %p67
        %p289 = pneg %p91
        %p290 = pneg %p88
        %s291 = sand.u32 %s104, 1
        %s292 = sand.u32 %s104, 1
        %s293 = smul.addr %s292, 32
        %s294 = scalar_lea.vmem [#allocation3], %s293
        %p295 = pneg %p117
        %p296 = pneg %p114
        %s297 = smul.u32 2, %s21
        %p298 = scmp.lt.s32.totalorder %s297, 9
        %s299 = scalar_select %p298, %s297, 9
        %s300 = scalar_lea.vmem %s4, %s299
        %p301 = pneg %p143
        %p302 = pneg %p140
        %p303 = pneg %p171
        %p304 = pneg %p168
        %s305 = smul.u32 2, %s21
        %p306 = scmp.lt.s32.totalorder %s20, 1
        %s307 = scalar_select %p306, %s20, 1
        %p308 = scmp.lt.s32.totalorder %s305, 9
        %s309 = scalar_select %p308, %s305, 9
        %s310 = smul.addr %s307, 10
        %s311 = sadd.s32 %s309, %s310
        %s312 = scalar_lea.vmem %s5, %s311
        %p313 = scmp.lt.s32.totalorder %s20, 1
        %s314 = scalar_select %p313, %s20, 1
        %s315 = smul.addr %s314, 51
        %s316 = smul.addr %s315, 8
        %s317 = scalar_lea.vmem %s0, %s316
        %s318 = smul.u32 2, %s21
        %s319 = smul.u32 2, %s21
        %p320 = scmp.lt.s32.totalorder %s319, 9
        %s321 = scalar_select %p320, %s319, 9
        %s322 = scalar_lea.vmem %s4, %s321
        %s323 = smul.u32 2, %s21
        %s324 = smul.u32 2, %s21
        %p325 = scmp.lt.s32.totalorder %s20, 1
        %s326 = scalar_select %p325, %s20, 1
        %p327 = scmp.lt.s32.totalorder %s324, 9
        %s328 = scalar_select %p327, %s324, 9
        %s329 = smul.addr %s326, 10
        %s330 = sadd.s32 %s328, %s329
        %s331 = scalar_lea.vmem %s5, %s330
        %s332 = smul.u32 2, %s21
        %p334 = scmp.eq.s32.totalorder %s21, 0
        // Predicated region
        $region79: #{covnet_effi_forward.2} parent=73 // pred_check
          %p335 = pneg %p334
        $region80: #{covnet_effi_forward.2} parent=73 // pred_check_branch
          %337 = sbr.rel (%p335) target = $region82
        $region81: #{covnet_effi_forward.2} parent=73 // pred_region
          %v338 = vld [vmem:[%s317] sm:$0xff]
          %v339 = vld [vmem:[%s317 + $0x8] sm:$0xff]
          %v340 = vld [vmem:[%s317 + $0x18] sm:$0xff]
          %v341 = vld [vmem:[%s317 + $0x20] sm:$0xff]
          %v342 = vld [vmem:[%s317 + $0x30] sm:$0xff]
          %v343 = vld [vmem:[%s317 + $0x38] sm:$0xff]
          %v344 = vld [vmem:[%s317 + $0x48] sm:$0xff]
          %v345 = vld [vmem:[%s317 + $0x50] sm:$0xff]
          %v346 = vld [vmem:[%s317 + $0x60] sm:$0xff]
          %v347 = vld [vmem:[%s317 + $0x68] sm:$0xff]
          %v348 = vld [vmem:[%s317 + $0x78] sm:$0xff]
          %v349 = vld [vmem:[%s317 + $0x80] sm:$0xff]
          %v350 = vld [vmem:[%s317 + $0x90] sm:$0xff]
          %v351 = vld [vmem:[%s317 + $0x98] sm:$0xff]
          %v352 = vld [vmem:[%s317 + $0xa8] sm:$0xff]
          %v353 = vld [vmem:[%s317 + $0xb0] sm:$0xff]
          %v354 = vld [vmem:[%s317 + $0xc0] sm:$0xff]
          %v355 = vld [vmem:[%s317 + $0xc8] sm:$0xff]
          %v356 = vld [vmem:[%s317 + $0xd8] sm:$0xff]
          %v357 = vld [vmem:[%s317 + $0xe0] sm:$0xff]
          %v358 = vld [vmem:[%s317 + $0xf0] sm:$0xff]
          %v359 = vld [vmem:[%s317 + $0xf8] sm:$0xff]
          %v360 = vld [vmem:[%s317 + $0x108] sm:$0xff]
          %v361 = vld [vmem:[%s317 + $0x110] sm:$0xff]
          %v362 = vld [vmem:[%s317 + $0x120] sm:$0xff]
          %v363 = vld [vmem:[%s317 + $0x128] sm:$0xff]
          %v364 = vld [vmem:[%s317 + $0x138] sm:$0xff]
          %v365 = vld [vmem:[%s317 + $0x140] sm:$0xff]
          %v366 = vld [vmem:[%s317 + $0x150] sm:$0xff]
          %v367 = vld [vmem:[%s317 + $0x158] sm:$0xff]
          %v368 = vld [vmem:[%s317 + $0x168] sm:$0xff]
          %v369 = vld [vmem:[%s317 + $0x170] sm:$0xff]
          %v370 = vpack.c.bf16 %v339, %v338
          %v371 = vpack.c.bf16 %v341, %v340
          %v372 = vpack.c.bf16 %v343, %v342
          %v373 = vpack.c.bf16 %v345, %v344
          %v374 = vpack.c.bf16 %v347, %v346
          %v375 = vpack.c.bf16 %v349, %v348
          %v376 = vpack.c.bf16 %v351, %v350
          %v377 = vpack.c.bf16 %v353, %v352
          %v378 = vpack.c.bf16 %v355, %v354
          %v379 = vpack.c.bf16 %v357, %v356
          %v380 = vpack.c.bf16 %v359, %v358
          %v381 = vpack.c.bf16 %v361, %v360
          %v382 = vpack.c.bf16 %v363, %v362
          %v383 = vpack.c.bf16 %v365, %v364
          %v384 = vpack.c.bf16 %v367, %v366
          %v385 = vpack.c.bf16 %v369, %v368
          %v386 = vld [vmem:[%s1] sm:$0xf]
          %v387 = vld [vmem:[%s1 + $0x4] sm:$0xf]
          %v388 = vld [vmem:[%s317 + $0x1] sm:$0xff]
          %v389 = vld [vmem:[%s317 + $0x9] sm:$0xff]
          %v390 = vld [vmem:[%s317 + $0x19] sm:$0xff]
          %v391 = vld [vmem:[%s317 + $0x21] sm:$0xff]
          %v392 = vld [vmem:[%s317 + $0x31] sm:$0xff]
          %v393 = vld [vmem:[%s317 + $0x39] sm:$0xff]
          %v394 = vld [vmem:[%s317 + $0x49] sm:$0xff]
          %v395 = vld [vmem:[%s317 + $0x51] sm:$0xff]
          %v396 = vld [vmem:[%s317 + $0x61] sm:$0xff]
          %v397 = vld [vmem:[%s317 + $0x69] sm:$0xff]
          %v398 = vld [vmem:[%s317 + $0x79] sm:$0xff]
          %v399 = vld [vmem:[%s317 + $0x81] sm:$0xff]
          %v400 = vld [vmem:[%s317 + $0x91] sm:$0xff]
          %v401 = vld [vmem:[%s317 + $0x99] sm:$0xff]
          %v402 = vld [vmem:[%s317 + $0xa9] sm:$0xff]
          %v403 = vld [vmem:[%s317 + $0xb1] sm:$0xff]
          %v404 = vld [vmem:[%s317 + $0xc1] sm:$0xff]
          %v405 = vld [vmem:[%s317 + $0xc9] sm:$0xff]
          %v406 = vld [vmem:[%s317 + $0xd9] sm:$0xff]
          %v407 = vld [vmem:[%s317 + $0xe1] sm:$0xff]
          %v408 = vld [vmem:[%s317 + $0xf1] sm:$0xff]
          %v409 = vld [vmem:[%s317 + $0xf9] sm:$0xff]
          %v410 = vld [vmem:[%s317 + $0x109] sm:$0xff]
          %v411 = vld [vmem:[%s317 + $0x111] sm:$0xff]
          %v412 = vld [vmem:[%s317 + $0x121] sm:$0xff]
          %v413 = vld [vmem:[%s317 + $0x129] sm:$0xff]
          %v414 = vld [vmem:[%s317 + $0x139] sm:$0xff]
          %v415 = vld [vmem:[%s317 + $0x141] sm:$0xff]
          %v416 = vld [vmem:[%s317 + $0x151] sm:$0xff]
          %v417 = vld [vmem:[%s317 + $0x159] sm:$0xff]
          %v418 = vld [vmem:[%s317 + $0x169] sm:$0xff]
          %v419 = vld [vmem:[%s317 + $0x171] sm:$0xff]
          %v420 = vpack.c.bf16 %v389, %v388
          %v421 = vpack.c.bf16 %v391, %v390
          %v422 = vpack.c.bf16 %v393, %v392
          %v423 = vpack.c.bf16 %v395, %v394
          %v424 = vpack.c.bf16 %v397, %v396
          %v425 = vpack.c.bf16 %v399, %v398
          %v426 = vpack.c.bf16 %v401, %v400
          %v427 = vpack.c.bf16 %v403, %v402
          %v428 = vpack.c.bf16 %v405, %v404
          %v429 = vpack.c.bf16 %v407, %v406
          %v430 = vpack.c.bf16 %v409, %v408
          %v431 = vpack.c.bf16 %v411, %v410
          %v432 = vpack.c.bf16 %v413, %v412
          %v433 = vpack.c.bf16 %v415, %v414
          %v434 = vpack.c.bf16 %v417, %v416
          %v435 = vpack.c.bf16 %v419, %v418
          %s436 = scalar_lea.vmem %s1, 8
          %v437 = vld [vmem:[%s436] sm:$0xf]
          %v438 = vld [vmem:[%s436 + $0x4] sm:$0xf]
          %v441 = vunpack.c.l.b16 %v437
          %v442 = vunpack.c.l.b16 %v438
          %v443 = vpack.c.b16 %v442, %v441
          %vm445 = vcmask 130048
          %v447 = vsel %vm445, %v420, 0
          %v450 = vsel %vm445, %v421, 0
          %v453 = vsel %vm445, %v422, 0
          %v456 = vsel %vm445, %v423, 0
          %v459 = vsel %vm445, %v424, 0
          %v462 = vsel %vm445, %v425, 0
          %v465 = vsel %vm445, %v426, 0
          %v468 = vsel %vm445, %v427, 0
          %v471 = vsel %vm445, %v428, 0
          %v474 = vsel %vm445, %v429, 0
          %v477 = vsel %vm445, %v430, 0
          %v480 = vsel %vm445, %v431, 0
          %v483 = vsel %vm445, %v432, 0
          %v486 = vsel %vm445, %v433, 0
          %v489 = vsel %vm445, %v434, 0
          %v492 = vsel %vm445, %v435, 0
          %494 = vmatprep.subr.bf16.mxu0 0
          %495 = vmatpush1.bf16.msra.mxu0 %v443
          %496 = vmatprep.subr.bf16.mxu0 0
          %497 = vmatpush1.bf16.msra.mxu0 0
          %498 = vmatprep.subr.bf16.mxu0 0
          %499 = vmatpush1.bf16.msra.mxu0 0
          %500 = vmatprep.subr.bf16.mxu0 0
          %501 = vmatpush1.bf16.msra.mxu0 0
          %502 = vmatprep.subr.bf16.mxu0 0
          %503 = vmatpush1.bf16.msra.mxu0 0
          %504 = vmatprep.subr.bf16.mxu0 0
          %505 = vmatpush1.bf16.msra.mxu0 0
          %506 = vmatprep.subr.bf16.mxu0 0
          %507 = vmatpush1.bf16.msra.mxu0 0
          %508 = vmatprep.subr.bf16.mxu0 0
          %509 = vmatpush1.bf16.msra.mxu0 0
          %510 = vmatprep.subr.bf16.mxu0 0
          %511 = vmatpush1.bf16.msra.mxu0 0
          %512 = vmatprep.subr.bf16.mxu0 0
          %513 = vmatpush1.bf16.msra.mxu0 0
          %514 = vmatprep.subr.bf16.mxu0 0
          %515 = vmatpush1.bf16.msra.mxu0 0
          %516 = vmatprep.subr.bf16.mxu0 0
          %517 = vmatpush1.bf16.msra.mxu0 0
          %518 = vmatprep.subr.bf16.mxu0 0
          %519 = vmatpush1.bf16.msra.mxu0 0
          %520 = vmatprep.subr.bf16.mxu0 0
          %521 = vmatpush1.bf16.msra.mxu0 0
          %522 = vmatprep.subr.bf16.mxu0 0
          %523 = vmatpush1.bf16.msra.mxu0 0
          %524 = vmatprep.subr.bf16.mxu0 0
          %525 = vmatpush1.bf16.msra.mxu0 0
          %526 = vmatprep.mubr.bf16.mxu0 0
          %527 = vmatmul.mubr.bf16.gmra.mrb[0].mxu0 %v447
          %v528 = vpop.f32.mrb[0].mxu0
          %v529 = vadd.f32 0.0, %v528
          %v530 = vpop.f32.mrb[0].mxu0
          %v531 = vpop.f32.mrb[0].mxu0
          %v532 = vadd.f32 0.0, %v531
          %v533 = vpop.f32.mrb[0].mxu0
          %534 = vmatprep.mubr.bf16.mxu0 0
          %535 = vmatmul.mubr.bf16.gmra.mrb[0].mxu0 %v450
          %v536 = vpop.f32.mrb[0].mxu0
          %v537 = vadd.f32 0.0, %v536
          %v538 = vpop.f32.mrb[0].mxu0
          %v539 = vpop.f32.mrb[0].mxu0
          %v540 = vadd.f32 0.0, %v539
          %v541 = vpop.f32.mrb[0].mxu0
          %542 = vmatprep.mubr.bf16.mxu0 0
          %543 = vmatmul.mubr.bf16.gmra.mrb[0].mxu0 %v453
          %v544 = vpop.f32.mrb[0].mxu0
          %v545 = vadd.f32 0.0, %v544
          %v546 = vpop.f32.mrb[0].mxu0
          %v547 = vpop.f32.mrb[0].mxu0
          %v548 = vadd.f32 0.0, %v547
          %v549 = vpop.f32.mrb[0].mxu0
          %550 = vmatprep.mubr.bf16.mxu0 0
          %551 = vmatmul.mubr.bf16.gmra.mrb[0].mxu0 %v456
          %v552 = vpop.f32.mrb[0].mxu0
          %v553 = vadd.f32 0.0, %v552
          %v554 = vpop.f32.mrb[0].mxu0
          %v555 = vpop.f32.mrb[0].mxu0
          %v556 = vadd.f32 0.0, %v555
          %v557 = vpop.f32.mrb[0].mxu0
          %558 = vmatprep.mubr.bf16.mxu0 0
          %559 = vmatmul.mubr.bf16.gmra.mrb[0].mxu0 %v459
          %v560 = vpop.f32.mrb[0].mxu0
          %v561 = vadd.f32 0.0, %v560
          %v562 = vpop.f32.mrb[0].mxu0
          %v563 = vpop.f32.mrb[0].mxu0
          %v564 = vadd.f32 0.0, %v563
          %v565 = vpop.f32.mrb[0].mxu0
          %566 = vmatprep.mubr.bf16.mxu0 0
          %567 = vmatmul.mubr.bf16.gmra.mrb[0].mxu0 %v462
          %v568 = vpop.f32.mrb[0].mxu0
          %v569 = vadd.f32 0.0, %v568
          %v570 = vpop.f32.mrb[0].mxu0
          %v571 = vpop.f32.mrb[0].mxu0
          %v572 = vadd.f32 0.0, %v571
          %v573 = vpop.f32.mrb[0].mxu0
          %574 = vmatprep.mubr.bf16.mxu0 0
          %575 = vmatmul.mubr.bf16.gmra.mrb[0].mxu0 %v465
          %v576 = vpop.f32.mrb[0].mxu0
          %v577 = vadd.f32 0.0, %v576
          %v578 = vpop.f32.mrb[0].mxu0
          %v579 = vpop.f32.mrb[0].mxu0
          %v580 = vadd.f32 0.0, %v579
          %v581 = vpop.f32.mrb[0].mxu0
          %582 = vmatprep.mubr.bf16.mxu0 0
          %583 = vmatmul.mubr.bf16.gmra.mrb[0].mxu0 %v468
          %v584 = vpop.f32.mrb[0].mxu0
          %v585 = vadd.f32 0.0, %v584
          %v586 = vpop.f32.mrb[0].mxu0
          %v587 = vpop.f32.mrb[0].mxu0
          %v588 = vadd.f32 0.0, %v587
          %v589 = vpop.f32.mrb[0].mxu0
          %590 = vmatprep.mubr.bf16.mxu0 0
          %591 = vmatmul.mubr.bf16.gmra.mrb[0].mxu0 %v471
          %v592 = vpop.f32.mrb[0].mxu0
          %v593 = vadd.f32 0.0, %v592
          %v594 = vpop.f32.mrb[0].mxu0
          %v595 = vpop.f32.mrb[0].mxu0
          %v596 = vadd.f32 0.0, %v595
          %v597 = vpop.f32.mrb[0].mxu0
          %598 = vmatprep.mubr.bf16.mxu0 0
          %599 = vmatmul.mubr.bf16.gmra.mrb[0].mxu0 %v474
          %v600 = vpop.f32.mrb[0].mxu0
          %v601 = vadd.f32 0.0, %v600
          %v602 = vpop.f32.mrb[0].mxu0
          %v603 = vpop.f32.mrb[0].mxu0
          %v604 = vadd.f32 0.0, %v603
          %v605 = vpop.f32.mrb[0].mxu0
          %606 = vmatprep.mubr.bf16.mxu0 0
          %607 = vmatmul.mubr.bf16.gmra.mrb[0].mxu0 %v477
          %v608 = vpop.f32.mrb[0].mxu0
          %v609 = vadd.f32 0.0, %v608
          %v610 = vpop.f32.mrb[0].mxu0
          %v611 = vpop.f32.mrb[0].mxu0
          %v612 = vadd.f32 0.0, %v611
          %v613 = vpop.f32.mrb[0].mxu0
          %614 = vmatprep.mubr.bf16.mxu0 0
          %615 = vmatmul.mubr.bf16.gmra.mrb[0].mxu0 %v480
          %v616 = vpop.f32.mrb[0].mxu0
          %v617 = vadd.f32 0.0, %v616
          %v618 = vpop.f32.mrb[0].mxu0
          %v619 = vpop.f32.mrb[0].mxu0
          %v620 = vadd.f32 0.0, %v619
          %v621 = vpop.f32.mrb[0].mxu0
          %622 = vmatprep.mubr.bf16.mxu0 0
          %623 = vmatmul.mubr.bf16.gmra.mrb[0].mxu0 %v483
          %v624 = vpop.f32.mrb[0].mxu0
          %v625 = vadd.f32 0.0, %v624
          %v626 = vpop.f32.mrb[0].mxu0
          %v627 = vpop.f32.mrb[0].mxu0
          %v628 = vadd.f32 0.0, %v627
          %v629 = vpop.f32.mrb[0].mxu0
          %630 = vmatprep.mubr.bf16.mxu0 0
          %631 = vmatmul.mubr.bf16.gmra.mrb[0].mxu0 %v486
          %v632 = vpop.f32.mrb[0].mxu0
          %v633 = vadd.f32 0.0, %v632
          %v634 = vpop.f32.mrb[0].mxu0
          %v635 = vpop.f32.mrb[0].mxu0
          %v636 = vadd.f32 0.0, %v635
          %v637 = vpop.f32.mrb[0].mxu0
          %638 = vmatprep.mubr.bf16.mxu0 0
          %639 = vmatmul.mubr.bf16.gmra.mrb[0].mxu0 %v489
          %v640 = vpop.f32.mrb[0].mxu0
          %v641 = vadd.f32 0.0, %v640
          %v642 = vpop.f32.mrb[0].mxu0
          %v643 = vpop.f32.mrb[0].mxu0
          %v644 = vadd.f32 0.0, %v643
          %v645 = vpop.f32.mrb[0].mxu0
          %646 = vmatprep.mubr.bf16.mxu0 0
          %647 = vmatmul.mubr.bf16.gmra.mrb[0].mxu0 %v492
          %v648 = vpop.f32.mrb[0].mxu0
          %v649 = vadd.f32 0.0, %v648
          %v650 = vpop.f32.mrb[0].mxu0
          %v651 = vpop.f32.mrb[0].mxu0
          %v652 = vadd.f32 0.0, %v651
          %v653 = vpop.f32.mrb[0].mxu0
          %654 = vdwg.mxu0
          %v657 = vunpack.c.l.b16 %v386
          %v658 = vunpack.c.l.b16 %v387
          %v659 = vpack.c.b16 %v658, %v657
          %v662 = vsel %vm445, %v370, 0
          %v665 = vsel %vm445, %v371, 0
          %v668 = vsel %vm445, %v372, 0
          %v671 = vsel %vm445, %v373, 0
          %v674 = vsel %vm445, %v374, 0
          %v677 = vsel %vm445, %v375, 0
          %v680 = vsel %vm445, %v376, 0
          %v683 = vsel %vm445, %v377, 0
          %v686 = vsel %vm445, %v378, 0
          %v689 = vsel %vm445, %v379, 0
          %v692 = vsel %vm445, %v380, 0
          %v695 = vsel %vm445, %v381, 0
          %v698 = vsel %vm445, %v382, 0
          %v701 = vsel %vm445, %v383, 0
          %v704 = vsel %vm445, %v384, 0
          %v707 = vsel %vm445, %v385, 0
          %709 = vmatprep.subr.bf16.mxu0 0
          %710 = vmatpush1.bf16.msra.mxu0 %v659
          %711 = vmatprep.subr.bf16.mxu0 0
          %712 = vmatpush1.bf16.msra.mxu0 0
          %713 = vmatprep.subr.bf16.mxu0 0
          %714 = vmatpush1.bf16.msra.mxu0 0
          %715 = vmatprep.subr.bf16.mxu0 0
          %716 = vmatpush1.bf16.msra.mxu0 0
          %717 = vmatprep.subr.bf16.mxu0 0
          %718 = vmatpush1.bf16.msra.mxu0 0
          %719 = vmatprep.subr.bf16.mxu0 0
          %720 = vmatpush1.bf16.msra.mxu0 0
          %721 = vmatprep.subr.bf16.mxu0 0
          %722 = vmatpush1.bf16.msra.mxu0 0
          %723 = vmatprep.subr.bf16.mxu0 0
          %724 = vmatpush1.bf16.msra.mxu0 0
          %725 = vmatprep.subr.bf16.mxu0 0
          %726 = vmatpush1.bf16.msra.mxu0 0
          %727 = vmatprep.subr.bf16.mxu0 0
          %728 = vmatpush1.bf16.msra.mxu0 0
          %729 = vmatprep.subr.bf16.mxu0 0
          %730 = vmatpush1.bf16.msra.mxu0 0
          %731 = vmatprep.subr.bf16.mxu0 0
          %732 = vmatpush1.bf16.msra.mxu0 0
          %733 = vmatprep.subr.bf16.mxu0 0
          %734 = vmatpush1.bf16.msra.mxu0 0
          %735 = vmatprep.subr.bf16.mxu0 0
          %736 = vmatpush1.bf16.msra.mxu0 0
          %737 = vmatprep.subr.bf16.mxu0 0
          %738 = vmatpush1.bf16.msra.mxu0 0
          %739 = vmatprep.subr.bf16.mxu0 0
          %740 = vmatpush1.bf16.msra.mxu0 0
          %741 = vmatprep.mubr.bf16.mxu0 0
          %742 = vmatmul.mubr.bf16.gmra.mrb[0].mxu0 %v662
          %v743 = vpop.f32.mrb[0].mxu0
          %v744 = vadd.f32 %v529, %v743
          %v745 = vpop.f32.mrb[0].mxu0
          %v746 = vpop.f32.mrb[0].mxu0
          %v747 = vadd.f32 %v532, %v746
          %v748 = vpop.f32.mrb[0].mxu0
          %749 = vmatprep.mubr.bf16.mxu0 0
          %750 = vmatmul.mubr.bf16.gmra.mrb[0].mxu0 %v665
          %v751 = vpop.f32.mrb[0].mxu0
          %v752 = vadd.f32 %v537, %v751
          %v753 = vpop.f32.mrb[0].mxu0
          %v754 = vpop.f32.mrb[0].mxu0
          %v755 = vadd.f32 %v540, %v754
          %v756 = vpop.f32.mrb[0].mxu0
          %757 = vmatprep.mubr.bf16.mxu0 0
          %758 = vmatmul.mubr.bf16.gmra.mrb[0].mxu0 %v668
          %v759 = vpop.f32.mrb[0].mxu0
          %v760 = vadd.f32 %v545, %v759
          %v761 = vpop.f32.mrb[0].mxu0
          %v762 = vpop.f32.mrb[0].mxu0
          %v763 = vadd.f32 %v548, %v762
          %v764 = vpop.f32.mrb[0].mxu0
          %765 = vmatprep.mubr.bf16.mxu0 0
          %766 = vmatmul.mubr.bf16.gmra.mrb[0].mxu0 %v671
          %v767 = vpop.f32.mrb[0].mxu0
          %v768 = vadd.f32 %v553, %v767
          %v769 = vpop.f32.mrb[0].mxu0
          %v770 = vpop.f32.mrb[0].mxu0
          %v771 = vadd.f32 %v556, %v770
          %v772 = vpop.f32.mrb[0].mxu0
          %773 = vmatprep.mubr.bf16.mxu0 0
          %774 = vmatmul.mubr.bf16.gmra.mrb[0].mxu0 %v674
          %v775 = vpop.f32.mrb[0].mxu0
          %v776 = vadd.f32 %v561, %v775
          %v777 = vpop.f32.mrb[0].mxu0
          %v778 = vpop.f32.mrb[0].mxu0
          %v779 = vadd.f32 %v564, %v778
          %v780 = vpop.f32.mrb[0].mxu0
          %781 = vmatprep.mubr.bf16.mxu0 0
          %782 = vmatmul.mubr.bf16.gmra.mrb[0].mxu0 %v677
          %v783 = vpop.f32.mrb[0].mxu0
          %v784 = vadd.f32 %v569, %v783
          %v785 = vpop.f32.mrb[0].mxu0
          %v786 = vpop.f32.mrb[0].mxu0
          %v787 = vadd.f32 %v572, %v786
          %v788 = vpop.f32.mrb[0].mxu0
          %789 = vmatprep.mubr.bf16.mxu0 0
          %790 = vmatmul.mubr.bf16.gmra.mrb[0].mxu0 %v680
          %v791 = vpop.f32.mrb[0].mxu0
          %v792 = vadd.f32 %v577, %v791
          %v793 = vpop.f32.mrb[0].mxu0
          %v794 = vpop.f32.mrb[0].mxu0
          %v795 = vadd.f32 %v580, %v794
          %v796 = vpop.f32.mrb[0].mxu0
          %797 = vmatprep.mubr.bf16.mxu0 0
          %798 = vmatmul.mubr.bf16.gmra.mrb[0].mxu0 %v683
          %v799 = vpop.f32.mrb[0].mxu0
          %v800 = vadd.f32 %v585, %v799
          %v801 = vpop.f32.mrb[0].mxu0
          %v802 = vpop.f32.mrb[0].mxu0
          %v803 = vadd.f32 %v588, %v802
          %v804 = vpop.f32.mrb[0].mxu0
          %805 = vmatprep.mubr.bf16.mxu0 0
          %806 = vmatmul.mubr.bf16.gmra.mrb[0].mxu0 %v686
          %v807 = vpop.f32.mrb[0].mxu0
          %v808 = vadd.f32 %v593, %v807
          %v809 = vpop.f32.mrb[0].mxu0
          %v810 = vpop.f32.mrb[0].mxu0
          %v811 = vadd.f32 %v596, %v810
          %v812 = vpop.f32.mrb[0].mxu0
          %813 = vmatprep.mubr.bf16.mxu0 0
          %814 = vmatmul.mubr.bf16.gmra.mrb[0].mxu0 %v689
          %v815 = vpop.f32.mrb[0].mxu0
          %v816 = vadd.f32 %v601, %v815
          %v817 = vpop.f32.mrb[0].mxu0
          %v818 = vpop.f32.mrb[0].mxu0
          %v819 = vadd.f32 %v604, %v818
          %v820 = vpop.f32.mrb[0].mxu0
          %821 = vmatprep.mubr.bf16.mxu0 0
          %822 = vmatmul.mubr.bf16.gmra.mrb[0].mxu0 %v692
          %v823 = vpop.f32.mrb[0].mxu0
          %v824 = vadd.f32 %v609, %v823
          %v825 = vpop.f32.mrb[0].mxu0
          %v826 = vpop.f32.mrb[0].mxu0
          %v827 = vadd.f32 %v612, %v826
          %v828 = vpop.f32.mrb[0].mxu0
          %829 = vmatprep.mubr.bf16.mxu0 0
          %830 = vmatmul.mubr.bf16.gmra.mrb[0].mxu0 %v695
          %v831 = vpop.f32.mrb[0].mxu0
          %v832 = vadd.f32 %v617, %v831
          %v833 = vpop.f32.mrb[0].mxu0
          %v834 = vpop.f32.mrb[0].mxu0
          %v835 = vadd.f32 %v620, %v834
          %v836 = vpop.f32.mrb[0].mxu0
          %837 = vmatprep.mubr.bf16.mxu0 0
          %838 = vmatmul.mubr.bf16.gmra.mrb[0].mxu0 %v698
          %v839 = vpop.f32.mrb[0].mxu0
          %v840 = vadd.f32 %v625, %v839
          %v841 = vpop.f32.mrb[0].mxu0
          %v842 = vpop.f32.mrb[0].mxu0
          %v843 = vadd.f32 %v628, %v842
          %v844 = vpop.f32.mrb[0].mxu0
          %845 = vmatprep.mubr.bf16.mxu0 0
          %846 = vmatmul.mubr.bf16.gmra.mrb[0].mxu0 %v701
          %v847 = vpop.f32.mrb[0].mxu0
          %v848 = vadd.f32 %v633, %v847
          %v849 = vpop.f32.mrb[0].mxu0
          %v850 = vpop.f32.mrb[0].mxu0
          %v851 = vadd.f32 %v636, %v850
          %v852 = vpop.f32.mrb[0].mxu0
          %853 = vmatprep.mubr.bf16.mxu0 0
          %854 = vmatmul.mubr.bf16.gmra.mrb[0].mxu0 %v704
          %v855 = vpop.f32.mrb[0].mxu0
          %v856 = vadd.f32 %v641, %v855
          %v857 = vpop.f32.mrb[0].mxu0
          %v858 = vpop.f32.mrb[0].mxu0
          %v859 = vadd.f32 %v644, %v858
          %v860 = vpop.f32.mrb[0].mxu0
          %861 = vmatprep.mubr.bf16.mxu0 0
          %862 = vmatmul.mubr.bf16.gmra.mrb[0].mxu0 %v707
          %v863 = vpop.f32.mrb[0].mxu0
          %v864 = vadd.f32 %v649, %v863
          %v865 = vpop.f32.mrb[0].mxu0
          %v866 = vpop.f32.mrb[0].mxu0
          %v867 = vadd.f32 %v652, %v866
          %v868 = vpop.f32.mrb[0].mxu0
          %869 = vdwg.mxu0
          %s870 = scalar_lea.vmem %s317, 24
          %v871 = vld [vmem:[%s870] sm:$0xff]
          %v872 = vld [vmem:[%s870 + $0x8] sm:$0xff]
          %v873 = vld [vmem:[%s870 + $0x18] sm:$0xff]
          %v874 = vld [vmem:[%s870 + $0x20] sm:$0xff]
          %v875 = vld [vmem:[%s870 + $0x30] sm:$0xff]
          %v876 = vld [vmem:[%s870 + $0x38] sm:$0xff]
          %v877 = vld [vmem:[%s870 + $0x48] sm:$0xff]
          %v878 = vld [vmem:[%s870 + $0x50] sm:$0xff]
          %v879 = vld [vmem:[%s870 + $0x60] sm:$0xff]
          %v880 = vld [vmem:[%s870 + $0x68] sm:$0xff]
          %v881 = vld [vmem:[%s870 + $0x78] sm:$0xff]
          %v882 = vld [vmem:[%s870 + $0x80] sm:$0xff]
          %v883 = vld [vmem:[%s870 + $0x90] sm:$0xff]
          %v884 = vld [vmem:[%s870 + $0x98] sm:$0xff]
          %v885 = vld [vmem:[%s870 + $0xa8] sm:$0xff]
          %v886 = vld [vmem:[%s870 + $0xb0] sm:$0xff]
          %v887 = vld [vmem:[%s870 + $0xc0] sm:$0xff]
          %v888 = vld [vmem:[%s870 + $0xc8] sm:$0xff]
          %v889 = vld [vmem:[%s870 + $0xd8] sm:$0xff]
          %v890 = vld [vmem:[%s870 + $0xe0] sm:$0xff]
          %v891 = vld [vmem:[%s870 + $0xf0] sm:$0xff]
          %v892 = vld [vmem:[%s870 + $0xf8] sm:$0xff]
          %v893 = vld [vmem:[%s870 + $0x108] sm:$0xff]
          %v894 = vld [vmem:[%s870 + $0x110] sm:$0xff]
          %v895 = vld [vmem:[%s870 + $0x120] sm:$0xff]
          %v896 = vld [vmem:[%s870 + $0x128] sm:$0xff]
          %v897 = vld [vmem:[%s870 + $0x138] sm:$0xff]
          %v898 = vld [vmem:[%s870 + $0x140] sm:$0xff]
          %v899 = vld [vmem:[%s870 + $0x150] sm:$0xff]
          %v900 = vld [vmem:[%s870 + $0x158] sm:$0xff]
          %v901 = vld [vmem:[%s870 + $0x168] sm:$0xff]
          %v902 = vld [vmem:[%s870 + $0x170] sm:$0xff]
          %v903 = vpack.c.bf16 %v872, %v871
          %v904 = vpack.c.bf16 %v874, %v873
          %v905 = vpack.c.bf16 %v876, %v875
          %v906 = vpack.c.bf16 %v878, %v877
          %v907 = vpack.c.bf16 %v880, %v879
          %v908 = vpack.c.bf16 %v882, %v881
          %v909 = vpack.c.bf16 %v884, %v883
          %v910 = vpack.c.bf16 %v886, %v885
          %v911 = vpack.c.bf16 %v888, %v887
          %v912 = vpack.c.bf16 %v890, %v889
          %v913 = vpack.c.bf16 %v892, %v891
          %v914 = vpack.c.bf16 %v894, %v893
          %v915 = vpack.c.bf16 %v896, %v895
          %v916 = vpack.c.bf16 %v898, %v897
          %v917 = vpack.c.bf16 %v900, %v899
          %v918 = vpack.c.bf16 %v902, %v901
          %s919 = scalar_lea.vmem %s1, 16
          %v920 = vld [vmem:[%s919] sm:$0xf]
          %v921 = vld [vmem:[%s919 + $0x4] sm:$0xf]
          %v924 = vunpack.c.l.b16 %v920
          %v925 = vunpack.c.l.b16 %v921
          %v926 = vpack.c.b16 %v925, %v924
          %v929 = vsel %vm445, %v903, 0
          %v932 = vsel %vm445, %v904, 0
          %v935 = vsel %vm445, %v905, 0
          %v938 = vsel %vm445, %v906, 0
          %v941 = vsel %vm445, %v907, 0
          %v944 = vsel %vm445, %v908, 0
          %v947 = vsel %vm445, %v909, 0
          %v950 = vsel %vm445, %v910, 0
          %v953 = vsel %vm445, %v911, 0
          %v956 = vsel %vm445, %v912, 0
          %v959 = vsel %vm445, %v913, 0
          %v962 = vsel %vm445, %v914, 0
          %v965 = vsel %vm445, %v915, 0
          %v968 = vsel %vm445, %v916, 0
          %v971 = vsel %vm445, %v917, 0
          %v974 = vsel %vm445, %v918, 0
          %976 = vmatprep.subr.bf16.mxu0 0
          %977 = vmatpush1.bf16.msra.mxu0 %v926
          %978 = vmatprep.subr.bf16.mxu0 0
          %979 = vmatpush1.bf16.msra.mxu0 0
          %980 = vmatprep.subr.bf16.mxu0 0
          %981 = vmatpush1.bf16.msra.mxu0 0
          %982 = vmatprep.subr.bf16.mxu0 0
          %983 = vmatpush1.bf16.msra.mxu0 0
          %984 = vmatprep.subr.bf16.mxu0 0
          %985 = vmatpush1.bf16.msra.mxu0 0
          %986 = vmatprep.subr.bf16.mxu0 0
          %987 = vmatpush1.bf16.msra.mxu0 0
          %988 = vmatprep.subr.bf16.mxu0 0
          %989 = vmatpush1.bf16.msra.mxu0 0
          %990 = vmatprep.subr.bf16.mxu0 0
          %991 = vmatpush1.bf16.msra.mxu0 0
          %992 = vmatprep.subr.bf16.mxu0 0
          %993 = vmatpush1.bf16.msra.mxu0 0
          %994 = vmatprep.subr.bf16.mxu0 0
          %995 = vmatpush1.bf16.msra.mxu0 0
          %996 = vmatprep.subr.bf16.mxu0 0
          %997 = vmatpush1.bf16.msra.mxu0 0
          %998 = vmatprep.subr.bf16.mxu0 0
          %999 = vmatpush1.bf16.msra.mxu0 0
          %1000 = vmatprep.subr.bf16.mxu0 0
          %1001 = vmatpush1.bf16.msra.mxu0 0
          %1002 = vmatprep.subr.bf16.mxu0 0
          %1003 = vmatpush1.bf16.msra.mxu0 0
          %1004 = vmatprep.subr.bf16.mxu0 0
          %1005 = vmatpush1.bf16.msra.mxu0 0
          %1006 = vmatprep.subr.bf16.mxu0 0
          %1007 = vmatpush1.bf16.msra.mxu0 0
          %1008 = vmatprep.mubr.bf16.mxu0 0
          %1009 = vmatmul.mubr.bf16.gmra.mrb[0].mxu0 %v929
          %v1010 = vpop.f32.mrb[0].mxu0
          %v1011 = vadd.f32 0.0, %v1010
          %v1012 = vpop.f32.mrb[0].mxu0
          %v1013 = vpop.f32.mrb[0].mxu0
          %v1014 = vadd.f32 0.0, %v1013
          %v1015 = vpop.f32.mrb[0].mxu0
          %1016 = vmatprep.mubr.bf16.mxu0 0
          %1017 = vmatmul.mubr.bf16.gmra.mrb[0].mxu0 %v932
          %v1018 = vpop.f32.mrb[0].mxu0
          %v1019 = vadd.f32 0.0, %v1018
          %v1020 = vpop.f32.mrb[0].mxu0
          %v1021 = vpop.f32.mrb[0].mxu0
          %v1022 = vadd.f32 0.0, %v1021
          %v1023 = vpop.f32.mrb[0].mxu0
          %1024 = vmatprep.mubr.bf16.mxu0 0
          %1025 = vmatmul.mubr.bf16.gmra.mrb[0].mxu0 %v935
          %v1026 = vpop.f32.mrb[0].mxu0
          %v1027 = vadd.f32 0.0, %v1026
          %v1028 = vpop.f32.mrb[0].mxu0
          %v1029 = vpop.f32.mrb[0].mxu0
          %v1030 = vadd.f32 0.0, %v1029
          %v1031 = vpop.f32.mrb[0].mxu0
          %1032 = vmatprep.mubr.bf16.mxu0 0
          %1033 = vmatmul.mubr.bf16.gmra.mrb[0].mxu0 %v938
          %v1034 = vpop.f32.mrb[0].mxu0
          %v1035 = vadd.f32 0.0, %v1034
          %v1036 = vpop.f32.mrb[0].mxu0
          %v1037 = vpop.f32.mrb[0].mxu0
          %v1038 = vadd.f32 0.0, %v1037
          %v1039 = vpop.f32.mrb[0].mxu0
          %1040 = vmatprep.mubr.bf16.mxu0 0
          %1041 = vmatmul.mubr.bf16.gmra.mrb[0].mxu0 %v941
          %v1042 = vpop.f32.mrb[0].mxu0
          %v1043 = vadd.f32 0.0, %v1042
          %v1044 = vpop.f32.mrb[0].mxu0
          %v1045 = vpop.f32.mrb[0].mxu0
          %v1046 = vadd.f32 0.0, %v1045
          %v1047 = vpop.f32.mrb[0].mxu0
          %1048 = vmatprep.mubr.bf16.mxu0 0
          %1049 = vmatmul.mubr.bf16.gmra.mrb[0].mxu0 %v944
          %v1050 = vpop.f32.mrb[0].mxu0
          %v1051 = vadd.f32 0.0, %v1050
          %v1052 = vpop.f32.mrb[0].mxu0
          %v1053 = vpop.f32.mrb[0].mxu0
          %v1054 = vadd.f32 0.0, %v1053
          %v1055 = vpop.f32.mrb[0].mxu0
          %1056 = vmatprep.mubr.bf16.mxu0 0
          %1057 = vmatmul.mubr.bf16.gmra.mrb[0].mxu0 %v947
          %v1058 = vpop.f32.mrb[0].mxu0
          %v1059 = vadd.f32 0.0, %v1058
          %v1060 = vpop.f32.mrb[0].mxu0
          %v1061 = vpop.f32.mrb[0].mxu0
          %v1062 = vadd.f32 0.0, %v1061
          %v1063 = vpop.f32.mrb[0].mxu0
          %1064 = vmatprep.mubr.bf16.mxu0 0
          %1065 = vmatmul.mubr.bf16.gmra.mrb[0].mxu0 %v950
          %v1066 = vpop.f32.mrb[0].mxu0
          %v1067 = vadd.f32 0.0, %v1066
          %v1068 = vpop.f32.mrb[0].mxu0
          %v1069 = vpop.f32.mrb[0].mxu0
          %v1070 = vadd.f32 0.0, %v1069
          %v1071 = vpop.f32.mrb[0].mxu0
          %1072 = vmatprep.mubr.bf16.mxu0 0
          %1073 = vmatmul.mubr.bf16.gmra.mrb[0].mxu0 %v953
          %v1074 = vpop.f32.mrb[0].mxu0
          %v1075 = vadd.f32 0.0, %v1074
          %v1076 = vpop.f32.mrb[0].mxu0
          %v1077 = vpop.f32.mrb[0].mxu0
          %v1078 = vadd.f32 0.0, %v1077
          %v1079 = vpop.f32.mrb[0].mxu0
          %1080 = vmatprep.mubr.bf16.mxu0 0
          %1081 = vmatmul.mubr.bf16.gmra.mrb[0].mxu0 %v956
          %v1082 = vpop.f32.mrb[0].mxu0
          %v1083 = vadd.f32 0.0, %v1082
          %v1084 = vpop.f32.mrb[0].mxu0
          %v1085 = vpop.f32.mrb[0].mxu0
          %v1086 = vadd.f32 0.0, %v1085
          %v1087 = vpop.f32.mrb[0].mxu0
          %1088 = vmatprep.mubr.bf16.mxu0 0
          %1089 = vmatmul.mubr.bf16.gmra.mrb[0].mxu0 %v959
          %v1090 = vpop.f32.mrb[0].mxu0
          %v1091 = vadd.f32 0.0, %v1090
          %v1092 = vpop.f32.mrb[0].mxu0
          %v1093 = vpop.f32.mrb[0].mxu0
          %v1094 = vadd.f32 0.0, %v1093
          %v1095 = vpop.f32.mrb[0].mxu0
          %1096 = vmatprep.mubr.bf16.mxu0 0
          %1097 = vmatmul.mubr.bf16.gmra.mrb[0].mxu0 %v962
          %v1098 = vpop.f32.mrb[0].mxu0
          %v1099 = vadd.f32 0.0, %v1098
          %v1100 = vpop.f32.mrb[0].mxu0
          %v1101 = vpop.f32.mrb[0].mxu0
          %v1102 = vadd.f32 0.0, %v1101
          %v1103 = vpop.f32.mrb[0].mxu0
          %1104 = vmatprep.mubr.bf16.mxu0 0
          %1105 = vmatmul.mubr.bf16.gmra.mrb[0].mxu0 %v965
          %v1106 = vpop.f32.mrb[0].mxu0
          %v1107 = vadd.f32 0.0, %v1106
          %v1108 = vpop.f32.mrb[0].mxu0
          %v1109 = vpop.f32.mrb[0].mxu0
          %v1110 = vadd.f32 0.0, %v1109
          %v1111 = vpop.f32.mrb[0].mxu0
          %1112 = vmatprep.mubr.bf16.mxu0 0
          %1113 = vmatmul.mubr.bf16.gmra.mrb[0].mxu0 %v968
          %v1114 = vpop.f32.mrb[0].mxu0
          %v1115 = vadd.f32 0.0, %v1114
          %v1116 = vpop.f32.mrb[0].mxu0
          %v1117 = vpop.f32.mrb[0].mxu0
          %v1118 = vadd.f32 0.0, %v1117
          %v1119 = vpop.f32.mrb[0].mxu0
          %1120 = vmatprep.mubr.bf16.mxu0 0
          %1121 = vmatmul.mubr.bf16.gmra.mrb[0].mxu0 %v971
          %v1122 = vpop.f32.mrb[0].mxu0
          %v1123 = vadd.f32 0.0, %v1122
          %v1124 = vpop.f32.mrb[0].mxu0
          %v1125 = vpop.f32.mrb[0].mxu0
          %v1126 = vadd.f32 0.0, %v1125
          %v1127 = vpop.f32.mrb[0].mxu0
          %1128 = vmatprep.mubr.bf16.mxu0 0
          %1129 = vmatmul.mubr.bf16.gmra.mrb[0].mxu0 %v974
          %v1130 = vpop.f32.mrb[0].mxu0
          %v1131 = vadd.f32 0.0, %v1130
          %v1132 = vpop.f32.mrb[0].mxu0
          %v1133 = vpop.f32.mrb[0].mxu0
          %v1134 = vadd.f32 0.0, %v1133
          %v1135 = vpop.f32.mrb[0].mxu0
          %1136 = vdwg.mxu0
          %v1137 = vadd.f32 %v744, %v1011
          %v1138 = vadd.f32 %v747, %v1014
          %v1139 = vadd.f32 %v752, %v1019
          %v1140 = vadd.f32 %v755, %v1022
          %v1141 = vadd.f32 %v760, %v1027
          %v1142 = vadd.f32 %v763, %v1030
          %v1143 = vadd.f32 %v768, %v1035
          %v1144 = vadd.f32 %v771, %v1038
          %v1145 = vadd.f32 %v776, %v1043
          %v1146 = vadd.f32 %v779, %v1046
          %v1147 = vadd.f32 %v784, %v1051
          %v1148 = vadd.f32 %v787, %v1054
          %v1149 = vadd.f32 %v792, %v1059
          %v1150 = vadd.f32 %v795, %v1062
          %v1151 = vadd.f32 %v800, %v1067
          %v1152 = vadd.f32 %v803, %v1070
          %v1153 = vadd.f32 %v808, %v1075
          %v1154 = vadd.f32 %v811, %v1078
          %v1155 = vadd.f32 %v816, %v1083
          %v1156 = vadd.f32 %v819, %v1086
          %v1157 = vadd.f32 %v824, %v1091
          %v1158 = vadd.f32 %v827, %v1094
          %v1159 = vadd.f32 %v832, %v1099
          %v1160 = vadd.f32 %v835, %v1102
          %v1161 = vadd.f32 %v840, %v1107
          %v1162 = vadd.f32 %v843, %v1110
          %v1163 = vadd.f32 %v848, %v1115
          %v1164 = vadd.f32 %v851, %v1118
          %v1165 = vadd.f32 %v856, %v1123
          %v1166 = vadd.f32 %v859, %v1126
          %v1167 = vadd.f32 %v864, %v1131
          %v1168 = vadd.f32 %v867, %v1134
          %v1169 = vld [vmem:[%s870 + $0x1] sm:$0xff]
          %v1170 = vld [vmem:[%s870 + $0x9] sm:$0xff]
          %v1171 = vld [vmem:[%s870 + $0x19] sm:$0xff]
          %v1172 = vld [vmem:[%s870 + $0x21] sm:$0xff]
          %v1173 = vld [vmem:[%s870 + $0x31] sm:$0xff]
          %v1174 = vld [vmem:[%s870 + $0x39] sm:$0xff]
          %v1175 = vld [vmem:[%s870 + $0x49] sm:$0xff]
          %v1176 = vld [vmem:[%s870 + $0x51] sm:$0xff]
          %v1177 = vld [vmem:[%s870 + $0x61] sm:$0xff]
          %v1178 = vld [vmem:[%s870 + $0x69] sm:$0xff]
          %v1179 = vld [vmem:[%s870 + $0x79] sm:$0xff]
          %v1180 = vld [vmem:[%s870 + $0x81] sm:$0xff]
          %v1181 = vld [vmem:[%s870 + $0x91] sm:$0xff]
          %v1182 = vld [vmem:[%s870 + $0x99] sm:$0xff]
          %v1183 = vld [vmem:[%s870 + $0xa9] sm:$0xff]
          %v1184 = vld [vmem:[%s870 + $0xb1] sm:$0xff]
          %v1185 = vld [vmem:[%s870 + $0xc1] sm:$0xff]
          %v1186 = vld [vmem:[%s870 + $0xc9] sm:$0xff]
          %v1187 = vld [vmem:[%s870 + $0xd9] sm:$0xff]
          %v1188 = vld [vmem:[%s870 + $0xe1] sm:$0xff]
          %v1189 = vld [vmem:[%s870 + $0xf1] sm:$0xff]
          %v1190 = vld [vmem:[%s870 + $0xf9] sm:$0xff]
          %v1191 = vld [vmem:[%s870 + $0x109] sm:$0xff]
          %v1192 = vld [vmem:[%s870 + $0x111] sm:$0xff]
          %v1193 = vld [vmem:[%s870 + $0x121] sm:$0xff]
          %v1194 = vld [vmem:[%s870 + $0x129] sm:$0xff]
          %v1195 = vld [vmem:[%s870 + $0x139] sm:$0xff]
          %v1196 = vld [vmem:[%s870 + $0x141] sm:$0xff]
          %v1197 = vld [vmem:[%s870 + $0x151] sm:$0xff]
          %v1198 = vld [vmem:[%s870 + $0x159] sm:$0xff]
          %v1199 = vld [vmem:[%s870 + $0x169] sm:$0xff]
          %v1200 = vld [vmem:[%s870 + $0x171] sm:$0xff]
          %v1201 = vpack.c.bf16 %v1170, %v1169
          %v1202 = vpack.c.bf16 %v1172, %v1171
          %v1203 = vpack.c.bf16 %v1174, %v1173
          %v1204 = vpack.c.bf16 %v1176, %v1175
          %v1205 = vpack.c.bf16 %v1178, %v1177
          %v1206 = vpack.c.bf16 %v1180, %v1179
          %v1207 = vpack.c.bf16 %v1182, %v1181
          %v1208 = vpack.c.bf16 %v1184, %v1183
          %v1209 = vpack.c.bf16 %v1186, %v1185
          %v1210 = vpack.c.bf16 %v1188, %v1187
          %v1211 = vpack.c.bf16 %v1190, %v1189
          %v1212 = vpack.c.bf16 %v1192, %v1191
          %v1213 = vpack.c.bf16 %v1194, %v1193
          %v1214 = vpack.c.bf16 %v1196, %v1195
          %v1215 = vpack.c.bf16 %v1198, %v1197
          %v1216 = vpack.c.bf16 %v1200, %v1199
          %s1217 = scalar_lea.vmem %s1, 24
          %v1218 = vld [vmem:[%s1217] sm:$0xf]
          %v1219 = vld [vmem:[%s1217 + $0x4] sm:$0xf]
          %v1222 = vunpack.c.l.b16 %v1218
          %v1223 = vunpack.c.l.b16 %v1219
          %v1224 = vpack.c.b16 %v1223, %v1222
          %v1227 = vsel %vm445, %v1201, 0
          %v1230 = vsel %vm445, %v1202, 0
          %v1233 = vsel %vm445, %v1203, 0
          %v1236 = vsel %vm445, %v1204, 0
          %v1239 = vsel %vm445, %v1205, 0
          %v1242 = vsel %vm445, %v1206, 0
          %v1245 = vsel %vm445, %v1207, 0
          %v1248 = vsel %vm445, %v1208, 0
          %v1251 = vsel %vm445, %v1209, 0
          %v1254 = vsel %vm445, %v1210, 0
          %v1257 = vsel %vm445, %v1211, 0
          %v1260 = vsel %vm445, %v1212, 0
          %v1263 = vsel %vm445, %v1213, 0
          %v1266 = vsel %vm445, %v1214, 0
          %v1269 = vsel %vm445, %v1215, 0
          %v1272 = vsel %vm445, %v1216, 0
          %1274 = vmatprep.subr.bf16.mxu0 0
          %1275 = vmatpush1.bf16.msra.mxu0 %v1224
          %1276 = vmatprep.subr.bf16.mxu0 0
          %1277 = vmatpush1.bf16.msra.mxu0 0
          %1278 = vmatprep.subr.bf16.mxu0 0
          %1279 = vmatpush1.bf16.msra.mxu0 0
          %1280 = vmatprep.subr.bf16.mxu0 0
          %1281 = vmatpush1.bf16.msra.mxu0 0
          %1282 = vmatprep.subr.bf16.mxu0 0
          %1283 = vmatpush1.bf16.msra.mxu0 0
          %1284 = vmatprep.subr.bf16.mxu0 0
          %1285 = vmatpush1.bf16.msra.mxu0 0
          %1286 = vmatprep.subr.bf16.mxu0 0
          %1287 = vmatpush1.bf16.msra.mxu0 0
          %1288 = vmatprep.subr.bf16.mxu0 0
          %1289 = vmatpush1.bf16.msra.mxu0 0
          %1290 = vmatprep.subr.bf16.mxu0 0
          %1291 = vmatpush1.bf16.msra.mxu0 0
          %1292 = vmatprep.subr.bf16.mxu0 0
          %1293 = vmatpush1.bf16.msra.mxu0 0
          %1294 = vmatprep.subr.bf16.mxu0 0
          %1295 = vmatpush1.bf16.msra.mxu0 0
          %1296 = vmatprep.subr.bf16.mxu0 0
          %1297 = vmatpush1.bf16.msra.mxu0 0
          %1298 = vmatprep.subr.bf16.mxu0 0
          %1299 = vmatpush1.bf16.msra.mxu0 0
          %1300 = vmatprep.subr.bf16.mxu0 0
          %1301 = vmatpush1.bf16.msra.mxu0 0
          %1302 = vmatprep.subr.bf16.mxu0 0
          %1303 = vmatpush1.bf16.msra.mxu0 0
          %1304 = vmatprep.subr.bf16.mxu0 0
          %1305 = vmatpush1.bf16.msra.mxu0 0
          %1306 = vmatprep.mubr.bf16.mxu0 0
          %1307 = vmatmul.mubr.bf16.gmra.mrb[0].mxu0 %v1227
          %v1308 = vpop.f32.mrb[0].mxu0
          %v1309 = vadd.f32 0.0, %v1308
          %v1310 = vpop.f32.mrb[0].mxu0
          %v1311 = vpop.f32.mrb[0].mxu0
          %v1312 = vadd.f32 0.0, %v1311
          %v1313 = vpop.f32.mrb[0].mxu0
          %1314 = vmatprep.mubr.bf16.mxu0 0
          %1315 = vmatmul.mubr.bf16.gmra.mrb[0].mxu0 %v1230
          %v1316 = vpop.f32.mrb[0].mxu0
          %v1317 = vadd.f32 0.0, %v1316
          %v1318 = vpop.f32.mrb[0].mxu0
          %v1319 = vpop.f32.mrb[0].mxu0
          %v1320 = vadd.f32 0.0, %v1319
          %v1321 = vpop.f32.mrb[0].mxu0
          %1322 = vmatprep.mubr.bf16.mxu0 0
          %1323 = vmatmul.mubr.bf16.gmra.mrb[0].mxu0 %v1233
          %v1324 = vpop.f32.mrb[0].mxu0
          %v1325 = vadd.f32 0.0, %v1324
          %v1326 = vpop.f32.mrb[0].mxu0
          %v1327 = vpop.f32.mrb[0].mxu0
          %v1328 = vadd.f32 0.0, %v1327
          %v1329 = vpop.f32.mrb[0].mxu0
          %1330 = vmatprep.mubr.bf16.mxu0 0
          %1331 = vmatmul.mubr.bf16.gmra.mrb[0].mxu0 %v1236
          %v1332 = vpop.f32.mrb[0].mxu0
          %v1333 = vadd.f32 0.0, %v1332
          %v1334 = vpop.f32.mrb[0].mxu0
          %v1335 = vpop.f32.mrb[0].mxu0
          %v1336 = vadd.f32 0.0, %v1335
          %v1337 = vpop.f32.mrb[0].mxu0
          %1338 = vmatprep.mubr.bf16.mxu0 0
          %1339 = vmatmul.mubr.bf16.gmra.mrb[0].mxu0 %v1239
          %v1340 = vpop.f32.mrb[0].mxu0
          %v1341 = vadd.f32 0.0, %v1340
          %v1342 = vpop.f32.mrb[0].mxu0
          %v1343 = vpop.f32.mrb[0].mxu0
          %v1344 = vadd.f32 0.0, %v1343
          %v1345 = vpop.f32.mrb[0].mxu0
          %1346 = vmatprep.mubr.bf16.mxu0 0
          %1347 = vmatmul.mubr.bf16.gmra.mrb[0].mxu0 %v1242
          %v1348 = vpop.f32.mrb[0].mxu0
          %v1349 = vadd.f32 0.0, %v1348
          %v1350 = vpop.f32.mrb[0].mxu0
          %v1351 = vpop.f32.mrb[0].mxu0
          %v1352 = vadd.f32 0.0, %v1351
          %v1353 = vpop.f32.mrb[0].mxu0
          %1354 = vmatprep.mubr.bf16.mxu0 0
          %1355 = vmatmul.mubr.bf16.gmra.mrb[0].mxu0 %v1245
          %v1356 = vpop.f32.mrb[0].mxu0
          %v1357 = vadd.f32 0.0, %v1356
          %v1358 = vpop.f32.mrb[0].mxu0
          %v1359 = vpop.f32.mrb[0].mxu0
          %v1360 = vadd.f32 0.0, %v1359
          %v1361 = vpop.f32.mrb[0].mxu0
          %1362 = vmatprep.mubr.bf16.mxu0 0
          %1363 = vmatmul.mubr.bf16.gmra.mrb[0].mxu0 %v1248
          %v1364 = vpop.f32.mrb[0].mxu0
          %v1365 = vadd.f32 0.0, %v1364
          %v1366 = vpop.f32.mrb[0].mxu0
          %v1367 = vpop.f32.mrb[0].mxu0
          %v1368 = vadd.f32 0.0, %v1367
          %v1369 = vpop.f32.mrb[0].mxu0
          %1370 = vmatprep.mubr.bf16.mxu0 0
          %1371 = vmatmul.mubr.bf16.gmra.mrb[0].mxu0 %v1251
          %v1372 = vpop.f32.mrb[0].mxu0
          %v1373 = vadd.f32 0.0, %v1372
          %v1374 = vpop.f32.mrb[0].mxu0
          %v1375 = vpop.f32.mrb[0].mxu0
          %v1376 = vadd.f32 0.0, %v1375
          %v1377 = vpop.f32.mrb[0].mxu0
          %1378 = vmatprep.mubr.bf16.mxu0 0
          %1379 = vmatmul.mubr.bf16.gmra.mrb[0].mxu0 %v1254
          %v1380 = vpop.f32.mrb[0].mxu0
          %v1381 = vadd.f32 0.0, %v1380
          %v1382 = vpop.f32.mrb[0].mxu0
          %v1383 = vpop.f32.mrb[0].mxu0
          %v1384 = vadd.f32 0.0, %v1383
          %v1385 = vpop.f32.mrb[0].mxu0
          %1386 = vmatprep.mubr.bf16.mxu0 0
          %1387 = vmatmul.mubr.bf16.gmra.mrb[0].mxu0 %v1257
          %v1388 = vpop.f32.mrb[0].mxu0
          %v1389 = vadd.f32 0.0, %v1388
          %v1390 = vpop.f32.mrb[0].mxu0
          %v1391 = vpop.f32.mrb[0].mxu0
          %v1392 = vadd.f32 0.0, %v1391
          %v1393 = vpop.f32.mrb[0].mxu0
          %1394 = vmatprep.mubr.bf16.mxu0 0
          %1395 = vmatmul.mubr.bf16.gmra.mrb[0].mxu0 %v1260
          %v1396 = vpop.f32.mrb[0].mxu0
          %v1397 = vadd.f32 0.0, %v1396
          %v1398 = vpop.f32.mrb[0].mxu0
          %v1399 = vpop.f32.mrb[0].mxu0
          %v1400 = vadd.f32 0.0, %v1399
          %v1401 = vpop.f32.mrb[0].mxu0
          %1402 = vmatprep.mubr.bf16.mxu0 0
          %1403 = vmatmul.mubr.bf16.gmra.mrb[0].mxu0 %v1263
          %v1404 = vpop.f32.mrb[0].mxu0
          %v1405 = vadd.f32 0.0, %v1404
          %v1406 = vpop.f32.mrb[0].mxu0
          %v1407 = vpop.f32.mrb[0].mxu0
          %v1408 = vadd.f32 0.0, %v1407
          %v1409 = vpop.f32.mrb[0].mxu0
          %1410 = vmatprep.mubr.bf16.mxu0 0
          %1411 = vmatmul.mubr.bf16.gmra.mrb[0].mxu0 %v1266
          %v1412 = vpop.f32.mrb[0].mxu0
          %v1413 = vadd.f32 0.0, %v1412
          %v1414 = vpop.f32.mrb[0].mxu0
          %v1415 = vpop.f32.mrb[0].mxu0
          %v1416 = vadd.f32 0.0, %v1415
          %v1417 = vpop.f32.mrb[0].mxu0
          %1418 = vmatprep.mubr.bf16.mxu0 0
          %1419 = vmatmul.mubr.bf16.gmra.mrb[0].mxu0 %v1269
          %v1420 = vpop.f32.mrb[0].mxu0
          %v1421 = vadd.f32 0.0, %v1420
          %v1422 = vpop.f32.mrb[0].mxu0
          %v1423 = vpop.f32.mrb[0].mxu0
          %v1424 = vadd.f32 0.0, %v1423
          %v1425 = vpop.f32.mrb[0].mxu0
          %1426 = vmatprep.mubr.bf16.mxu0 0
          %1427 = vmatmul.mubr.bf16.gmra.mrb[0].mxu0 %v1272
          %v1428 = vpop.f32.mrb[0].mxu0
          %v1429 = vadd.f32 0.0, %v1428
          %v1430 = vpop.f32.mrb[0].mxu0
          %v1431 = vpop.f32.mrb[0].mxu0
          %v1432 = vadd.f32 0.0, %v1431
          %v1433 = vpop.f32.mrb[0].mxu0
          %1434 = vdwg.mxu0
          %v1435 = vadd.f32 %v1137, %v1309
          %v1436 = vadd.f32 %v1138, %v1312
          %v1437 = vadd.f32 %v1139, %v1317
          %v1438 = vadd.f32 %v1140, %v1320
          %v1439 = vadd.f32 %v1141, %v1325
          %v1440 = vadd.f32 %v1142, %v1328
          %v1441 = vadd.f32 %v1143, %v1333
          %v1442 = vadd.f32 %v1144, %v1336
          %v1443 = vadd.f32 %v1145, %v1341
          %v1444 = vadd.f32 %v1146, %v1344
          %v1445 = vadd.f32 %v1147, %v1349
          %v1446 = vadd.f32 %v1148, %v1352
          %v1447 = vadd.f32 %v1149, %v1357
          %v1448 = vadd.f32 %v1150, %v1360
          %v1449 = vadd.f32 %v1151, %v1365
          %v1450 = vadd.f32 %v1152, %v1368
          %v1451 = vadd.f32 %v1153, %v1373
          %v1452 = vadd.f32 %v1154, %v1376
          %v1453 = vadd.f32 %v1155, %v1381
          %v1454 = vadd.f32 %v1156, %v1384
          %v1455 = vadd.f32 %v1157, %v1389
          %v1456 = vadd.f32 %v1158, %v1392
          %v1457 = vadd.f32 %v1159, %v1397
          %v1458 = vadd.f32 %v1160, %v1400
          %v1459 = vadd.f32 %v1161, %v1405
          %v1460 = vadd.f32 %v1162, %v1408
          %v1461 = vadd.f32 %v1163, %v1413
          %v1462 = vadd.f32 %v1164, %v1416
          %v1463 = vadd.f32 %v1165, %v1421
          %v1464 = vadd.f32 %v1166, %v1424
          %v1465 = vadd.f32 %v1167, %v1429
          %v1466 = vadd.f32 %v1168, %v1432
          %v1467 = vld [vmem:[%s2] sm:$0x1]
          %v1469 = vlaneseq
          %v1470 = vshrl.u32 %v1469, 7
          %v1471 = vsub.s32 0, %v1470
          %v1472 = vrot.slane %v1467, %v1471
          %v1474 = vadd.f32 %v1435, %v1472
          %v1475 = vadd.f32 %v1436, %v1472
          %v1476 = vadd.f32 %v1437, %v1472
          %v1477 = vadd.f32 %v1438, %v1472
          %v1478 = vadd.f32 %v1439, %v1472
          %v1479 = vadd.f32 %v1440, %v1472
          %v1480 = vadd.f32 %v1441, %v1472
          %v1481 = vadd.f32 %v1442, %v1472
          %v1482 = vadd.f32 %v1443, %v1472
          %v1483 = vadd.f32 %v1444, %v1472
          %v1484 = vadd.f32 %v1445, %v1472
          %v1485 = vadd.f32 %v1446, %v1472
          %v1486 = vadd.f32 %v1447, %v1472
          %v1487 = vadd.f32 %v1448, %v1472
          %v1488 = vadd.f32 %v1449, %v1472
          %v1489 = vadd.f32 %v1450, %v1472
          %v1490 = vadd.f32 %v1451, %v1472
          %v1491 = vadd.f32 %v1452, %v1472
          %v1492 = vadd.f32 %v1453, %v1472
          %v1493 = vadd.f32 %v1454, %v1472
          %v1494 = vadd.f32 %v1455, %v1472
          %v1495 = vadd.f32 %v1456, %v1472
          %v1496 = vadd.f32 %v1457, %v1472
          %v1497 = vadd.f32 %v1458, %v1472
          %v1498 = vadd.f32 %v1459, %v1472
          %v1499 = vadd.f32 %v1460, %v1472
          %v1500 = vadd.f32 %v1461, %v1472
          %v1501 = vadd.f32 %v1462, %v1472
          %v1502 = vadd.f32 %v1463, %v1472
          %v1503 = vadd.f32 %v1464, %v1472
          %v1504 = vadd.f32 %v1465, %v1472
          %v1505 = vadd.f32 %v1466, %v1472
          %v1506 = vxor.u32 %v1474, 2147483648
          %v1507 = vxor.u32 %v1475, 2147483648
          %v1508 = vxor.u32 %v1476, 2147483648
          %v1509 = vxor.u32 %v1477, 2147483648
          %v1510 = vxor.u32 %v1478, 2147483648
          %v1511 = vxor.u32 %v1479, 2147483648
          %v1512 = vxor.u32 %v1480, 2147483648
          %v1513 = vxor.u32 %v1481, 2147483648
          %v1514 = vxor.u32 %v1482, 2147483648
          %v1515 = vxor.u32 %v1483, 2147483648
          %v1516 = vxor.u32 %v1484, 2147483648
          %v1517 = vxor.u32 %v1485, 2147483648
          %v1518 = vxor.u32 %v1486, 2147483648
          %v1519 = vxor.u32 %v1487, 2147483648
          %v1520 = vxor.u32 %v1488, 2147483648
          %v1521 = vxor.u32 %v1489, 2147483648
          %v1522 = vxor.u32 %v1490, 2147483648
          %v1523 = vxor.u32 %v1491, 2147483648
          %v1524 = vxor.u32 %v1492, 2147483648
          %v1525 = vxor.u32 %v1493, 2147483648
          %v1526 = vxor.u32 %v1494, 2147483648
          %v1527 = vxor.u32 %v1495, 2147483648
          %v1528 = vxor.u32 %v1496, 2147483648
          %v1529 = vxor.u32 %v1497, 2147483648
          %v1530 = vxor.u32 %v1498, 2147483648
          %v1531 = vxor.u32 %v1499, 2147483648
          %v1532 = vxor.u32 %v1500, 2147483648
          %v1533 = vxor.u32 %v1501, 2147483648
          %v1534 = vxor.u32 %v1502, 2147483648
          %v1535 = vxor.u32 %v1503, 2147483648
          %v1536 = vxor.u32 %v1504, 2147483648
          %v1537 = vxor.u32 %v1505, 2147483648
          %v1538 = vmul.f32 %v1506, 1.442695
          %v1539 = vpow.pop %v1538
          %v1540 = vmul.f32 %v1507, 1.442695
          %v1541 = vpow.pop %v1540
          %v1542 = vmul.f32 %v1508, 1.442695
          %v1543 = vpow.pop %v1542
          %v1544 = vmul.f32 %v1509, 1.442695
          %v1545 = vpow.pop %v1544
          %v1546 = vmul.f32 %v1510, 1.442695
          %v1547 = vpow.pop %v1546
          %v1548 = vmul.f32 %v1511, 1.442695
          %v1549 = vpow.pop %v1548
          %v1550 = vmul.f32 %v1512, 1.442695
          %v1551 = vpow.pop %v1550
          %v1552 = vmul.f32 %v1513, 1.442695
          %v1553 = vpow.pop %v1552
          %v1554 = vmul.f32 %v1514, 1.442695
          %v1555 = vpow.pop %v1554
          %v1556 = vmul.f32 %v1515, 1.442695
          %v1557 = vpow.pop %v1556
          %v1558 = vmul.f32 %v1516, 1.442695
          %v1559 = vpow.pop %v1558
          %v1560 = vmul.f32 %v1517, 1.442695
          %v1561 = vpow.pop %v1560
          %v1562 = vmul.f32 %v1518, 1.442695
          %v1563 = vpow.pop %v1562
          %v1564 = vmul.f32 %v1519, 1.442695
          %v1565 = vpow.pop %v1564
          %v1566 = vmul.f32 %v1520, 1.442695
          %v1567 = vpow.pop %v1566
          %v1568 = vmul.f32 %v1521, 1.442695
          %v1569 = vpow.pop %v1568
          %v1570 = vmul.f32 %v1522, 1.442695
          %v1571 = vpow.pop %v1570
          %v1572 = vmul.f32 %v1523, 1.442695
          %v1573 = vpow.pop %v1572
          %v1574 = vmul.f32 %v1524, 1.442695
          %v1575 = vpow.pop %v1574
          %v1576 = vmul.f32 %v1525, 1.442695
          %v1577 = vpow.pop %v1576
          %v1578 = vmul.f32 %v1526, 1.442695
          %v1579 = vpow.pop %v1578
          %v1580 = vmul.f32 %v1527, 1.442695
          %v1581 = vpow.pop %v1580
          %v1582 = vmul.f32 %v1528, 1.442695
          %v1583 = vpow.pop %v1582
          %v1584 = vmul.f32 %v1529, 1.442695
          %v1585 = vpow.pop %v1584
          %v1586 = vmul.f32 %v1530, 1.442695
          %v1587 = vpow.pop %v1586
          %v1588 = vmul.f32 %v1531, 1.442695
          %v1589 = vpow.pop %v1588
          %v1590 = vmul.f32 %v1532, 1.442695
          %v1591 = vpow.pop %v1590
          %v1592 = vmul.f32 %v1533, 1.442695
          %v1593 = vpow.pop %v1592
          %v1594 = vmul.f32 %v1534, 1.442695
          %v1595 = vpow.pop %v1594
          %v1596 = vmul.f32 %v1535, 1.442695
          %v1597 = vpow.pop %v1596
          %v1598 = vmul.f32 %v1536, 1.442695
          %v1599 = vpow.pop %v1598
          %v1600 = vmul.f32 %v1537, 1.442695
          %v1601 = vpow.pop %v1600
          %v1602 = vadd.f32 %v1539, 1.0
          %v1603 = vadd.f32 %v1541, 1.0
          %v1604 = vadd.f32 %v1543, 1.0
          %v1605 = vadd.f32 %v1545, 1.0
          %v1606 = vadd.f32 %v1547, 1.0
          %v1607 = vadd.f32 %v1549, 1.0
          %v1608 = vadd.f32 %v1551, 1.0
          %v1609 = vadd.f32 %v1553, 1.0
          %v1610 = vadd.f32 %v1555, 1.0
          %v1611 = vadd.f32 %v1557, 1.0
          %v1612 = vadd.f32 %v1559, 1.0
          %v1613 = vadd.f32 %v1561, 1.0
          %v1614 = vadd.f32 %v1563, 1.0
          %v1615 = vadd.f32 %v1565, 1.0
          %v1616 = vadd.f32 %v1567, 1.0
          %v1617 = vadd.f32 %v1569, 1.0
          %v1618 = vadd.f32 %v1571, 1.0
          %v1619 = vadd.f32 %v1573, 1.0
          %v1620 = vadd.f32 %v1575, 1.0
          %v1621 = vadd.f32 %v1577, 1.0
          %v1622 = vadd.f32 %v1579, 1.0
          %v1623 = vadd.f32 %v1581, 1.0
          %v1624 = vadd.f32 %v1583, 1.0
          %v1625 = vadd.f32 %v1585, 1.0
          %v1626 = vadd.f32 %v1587, 1.0
          %v1627 = vadd.f32 %v1589, 1.0
          %v1628 = vadd.f32 %v1591, 1.0
          %v1629 = vadd.f32 %v1593, 1.0
          %v1630 = vadd.f32 %v1595, 1.0
          %v1631 = vadd.f32 %v1597, 1.0
          %v1632 = vadd.f32 %v1599, 1.0
          %v1633 = vadd.f32 %v1601, 1.0
          %v1634 = vrcp.pop %v1602
          %v1635 = vmul.f32 1.0, %v1634
          %v1636 = vrcp.pop %v1603
          %v1637 = vmul.f32 1.0, %v1636
          %v1638 = vrcp.pop %v1604
          %v1639 = vmul.f32 1.0, %v1638
          %v1640 = vrcp.pop %v1605
          %v1641 = vmul.f32 1.0, %v1640
          %v1642 = vrcp.pop %v1606
          %v1643 = vmul.f32 1.0, %v1642
          %v1644 = vrcp.pop %v1607
          %v1645 = vmul.f32 1.0, %v1644
          %v1646 = vrcp.pop %v1608
          %v1647 = vmul.f32 1.0, %v1646
          %v1648 = vrcp.pop %v1609
          %v1649 = vmul.f32 1.0, %v1648
          %v1650 = vrcp.pop %v1610
          %v1651 = vmul.f32 1.0, %v1650
          %v1652 = vrcp.pop %v1611
          %v1653 = vmul.f32 1.0, %v1652
          %v1654 = vrcp.pop %v1612
          %v1655 = vmul.f32 1.0, %v1654
          %v1656 = vrcp.pop %v1613
          %v1657 = vmul.f32 1.0, %v1656
          %v1658 = vrcp.pop %v1614
          %v1659 = vmul.f32 1.0, %v1658
          %v1660 = vrcp.pop %v1615
          %v1661 = vmul.f32 1.0, %v1660
          %v1662 = vrcp.pop %v1616
          %v1663 = vmul.f32 1.0, %v1662
          %v1664 = vrcp.pop %v1617
          %v1665 = vmul.f32 1.0, %v1664
          %v1666 = vrcp.pop %v1618
          %v1667 = vmul.f32 1.0, %v1666
          %v1668 = vrcp.pop %v1619
          %v1669 = vmul.f32 1.0, %v1668
          %v1670 = vrcp.pop %v1620
          %v1671 = vmul.f32 1.0, %v1670
          %v1672 = vrcp.pop %v1621
          %v1673 = vmul.f32 1.0, %v1672
          %v1674 = vrcp.pop %v1622
          %v1675 = vmul.f32 1.0, %v1674
          %v1676 = vrcp.pop %v1623
          %v1677 = vmul.f32 1.0, %v1676
          %v1678 = vrcp.pop %v1624
          %v1679 = vmul.f32 1.0, %v1678
          %v1680 = vrcp.pop %v1625
          %v1681 = vmul.f32 1.0, %v1680
          %v1682 = vrcp.pop %v1626
          %v1683 = vmul.f32 1.0, %v1682
          %v1684 = vrcp.pop %v1627
          %v1685 = vmul.f32 1.0, %v1684
          %v1686 = vrcp.pop %v1628
          %v1687 = vmul.f32 1.0, %v1686
          %v1688 = vrcp.pop %v1629
          %v1689 = vmul.f32 1.0, %v1688
          %v1690 = vrcp.pop %v1630
          %v1691 = vmul.f32 1.0, %v1690
          %v1692 = vrcp.pop %v1631
          %v1693 = vmul.f32 1.0, %v1692
          %v1694 = vrcp.pop %v1632
          %v1695 = vmul.f32 1.0, %v1694
          %v1696 = vrcp.pop %v1633
          %v1697 = vmul.f32 1.0, %v1696
          %v1698 = vmul.f32 %v1474, %v1635
          %v1699 = vmul.f32 %v1475, %v1637
          %v1700 = vmul.f32 %v1476, %v1639
          %v1701 = vmul.f32 %v1477, %v1641
          %v1702 = vmul.f32 %v1478, %v1643
          %v1703 = vmul.f32 %v1479, %v1645
          %v1704 = vmul.f32 %v1480, %v1647
          %v1705 = vmul.f32 %v1481, %v1649
          %v1706 = vmul.f32 %v1482, %v1651
          %v1707 = vmul.f32 %v1483, %v1653
          %v1708 = vmul.f32 %v1484, %v1655
          %v1709 = vmul.f32 %v1485, %v1657
          %v1710 = vmul.f32 %v1486, %v1659
          %v1711 = vmul.f32 %v1487, %v1661
          %v1712 = vmul.f32 %v1488, %v1663
          %v1713 = vmul.f32 %v1489, %v1665
          %v1714 = vmul.f32 %v1490, %v1667
          %v1715 = vmul.f32 %v1491, %v1669
          %v1716 = vmul.f32 %v1492, %v1671
          %v1717 = vmul.f32 %v1493, %v1673
          %v1718 = vmul.f32 %v1494, %v1675
          %v1719 = vmul.f32 %v1495, %v1677
          %v1720 = vmul.f32 %v1496, %v1679
          %v1721 = vmul.f32 %v1497, %v1681
          %v1722 = vmul.f32 %v1498, %v1683
          %v1723 = vmul.f32 %v1499, %v1685
          %v1724 = vmul.f32 %v1500, %v1687
          %v1725 = vmul.f32 %v1501, %v1689
          %v1726 = vmul.f32 %v1502, %v1691
          %v1727 = vmul.f32 %v1503, %v1693
          %v1728 = vmul.f32 %v1504, %v1695
          %v1729 = vmul.f32 %v1505, %v1697
          %v1730 = vpack.c.bf16 %v1699, %v1698
          %v1731 = vpack.c.bf16 %v1701, %v1700
          %v1732 = vpack.c.bf16 %v1703, %v1702
          %v1733 = vpack.c.bf16 %v1705, %v1704
          %v1734 = vpack.c.bf16 %v1707, %v1706
          %v1735 = vpack.c.bf16 %v1709, %v1708
          %v1736 = vpack.c.bf16 %v1711, %v1710
          %v1737 = vpack.c.bf16 %v1713, %v1712
          %v1738 = vpack.c.bf16 %v1715, %v1714
          %v1739 = vpack.c.bf16 %v1717, %v1716
          %v1740 = vpack.c.bf16 %v1719, %v1718
          %v1741 = vpack.c.bf16 %v1721, %v1720
          %v1742 = vpack.c.bf16 %v1723, %v1722
          %v1743 = vpack.c.bf16 %v1725, %v1724
          %v1744 = vpack.c.bf16 %v1727, %v1726
          %v1745 = vpack.c.bf16 %v1729, %v1728
          %vm1746 = vcmask 261120
          %1747 = vst.msk [vmem:[#allocation2] sm:$0xff] %vm1746, %v1730
          %1748 = vst.msk [vmem:[#allocation2 + $0x8] sm:$0xff] %vm1746, %v1731
          %1749 = vst.msk [vmem:[#allocation2 + $0x10] sm:$0xff] %vm1746, %v1732
          %1750 = vst.msk [vmem:[#allocation2 + $0x18] sm:$0xff] %vm1746, %v1733
          %1751 = vst.msk [vmem:[#allocation2 + $0x20] sm:$0xff] %vm1746, %v1734
          %1752 = vst.msk [vmem:[#allocation2 + $0x28] sm:$0xff] %vm1746, %v1735
          %1753 = vst.msk [vmem:[#allocation2 + $0x30] sm:$0xff] %vm1746, %v1736
          %1754 = vst.msk [vmem:[#allocation2 + $0x38] sm:$0xff] %vm1746, %v1737
          %1755 = vst.msk [vmem:[#allocation2 + $0x40] sm:$0xff] %vm1746, %v1738
          %1756 = vst.msk [vmem:[#allocation2 + $0x48] sm:$0xff] %vm1746, %v1739
          %1757 = vst.msk [vmem:[#allocation2 + $0x50] sm:$0xff] %vm1746, %v1740
          %1758 = vst.msk [vmem:[#allocation2 + $0x58] sm:$0xff] %vm1746, %v1741
          %1759 = vst.msk [vmem:[#allocation2 + $0x60] sm:$0xff] %vm1746, %v1742
          %1760 = vst.msk [vmem:[#allocation2 + $0x68] sm:$0xff] %vm1746, %v1743
          %1761 = vst.msk [vmem:[#allocation2 + $0x70] sm:$0xff] %vm1746, %v1744
          %1762 = vst.msk [vmem:[#allocation2 + $0x78] sm:$0xff] %vm1746, %v1745
        $region82: #{covnet_effi_forward.2} parent=73 // pred_fallthru
          _
        %v1763 = vld [vmem:[#allocation2] sm:$0xff]
        %v1764 = vld [vmem:[#allocation2 + $0x8] sm:$0xff]
        %v1765 = vld [vmem:[#allocation2 + $0x10] sm:$0xff]
        %v1766 = vld [vmem:[#allocation2 + $0x18] sm:$0xff]
        %v1767 = vld [vmem:[#allocation2 + $0x20] sm:$0xff]
        %v1768 = vld [vmem:[#allocation2 + $0x28] sm:$0xff]
        %v1769 = vld [vmem:[#allocation2 + $0x30] sm:$0xff]
        %v1770 = vld [vmem:[#allocation2 + $0x38] sm:$0xff]
        %v1771 = vld [vmem:[#allocation2 + $0x40] sm:$0xff]
        %v1772 = vld [vmem:[#allocation2 + $0x48] sm:$0xff]
        %v1773 = vld [vmem:[#allocation2 + $0x50] sm:$0xff]
        %v1774 = vld [vmem:[#allocation2 + $0x58] sm:$0xff]
        %v1775 = vld [vmem:[#allocation2 + $0x60] sm:$0xff]
        %v1776 = vld [vmem:[#allocation2 + $0x68] sm:$0xff]
        %v1777 = vld [vmem:[#allocation2 + $0x70] sm:$0xff]
        %v1778 = vld [vmem:[#allocation2 + $0x78] sm:$0xff]
        %v1779 = vld [vmem:[%s276] sm:$0xff]
        %v1780 = vld [vmem:[%s276 + $0x8] sm:$0xff]
        %v1781 = vld [vmem:[%s276 + $0x10] sm:$0xff]
        %v1782 = vld [vmem:[%s276 + $0x18] sm:$0xff]
        %v1783 = vld [vmem:[%s322] sm:$0x3]
        %v1785 = vlaneseq
        %v1786 = vshrl.u32 %v1785, 7
        %v1787 = vsub.s32 0, %v1786
        %v1788 = vrot.slane %v1783, %v1787
        %v1789 = vlaneseq
        %v1790 = vshrl.u32 %v1789, 7
        %v1791 = vsub.s32 1, %v1790
        %v1792 = vrot.slane %v1783, %v1791
        %v1799 = vunpack.c.l.b16 %v1779
        %v1800 = vunpack.c.h.b16 %v1779
        %v1801 = vunpack.c.l.b16 %v1780
        %v1802 = vunpack.c.h.b16 %v1780
        %v1803 = vunpack.c.l.b16 %v1781
        %v1804 = vunpack.c.h.b16 %v1781
        %v1805 = vunpack.c.l.b16 %v1782
        %v1806 = vunpack.c.h.b16 %v1782
        %v1807 = vpack.c.b16 %v1801, %v1799
        %v1808 = vpack.c.b16 %v1802, %v1800
        %v1809 = vpack.c.b16 %v1805, %v1803
        %v1810 = vpack.c.b16 %v1806, %v1804
        %vm1815 = vcmask 261120
        %v1817 = vsel %vm1815, %v1763, 0
        %v1820 = vsel %vm1815, %v1764, 0
        %v1823 = vsel %vm1815, %v1765, 0
        %v1826 = vsel %vm1815, %v1766, 0
        %v1829 = vsel %vm1815, %v1767, 0
        %v1832 = vsel %vm1815, %v1768, 0
        %v1835 = vsel %vm1815, %v1769, 0
        %v1838 = vsel %vm1815, %v1770, 0
        %v1841 = vsel %vm1815, %v1771, 0
        %v1844 = vsel %vm1815, %v1772, 0
        %v1847 = vsel %vm1815, %v1773, 0
        %v1850 = vsel %vm1815, %v1774, 0
        %v1853 = vsel %vm1815, %v1775, 0
        %v1856 = vsel %vm1815, %v1776, 0
        %v1859 = vsel %vm1815, %v1777, 0
        %v1862 = vsel %vm1815, %v1778, 0
        %1864 = vmatprep.subr.bf16.mxu0 %v1808
        %1865 = vmatpush1.bf16.msra.mxu0 %v1807
        %1866 = vmatprep.subr.bf16.mxu0 %v1810
        %1867 = vmatpush1.bf16.msra.mxu0 %v1809
        %1868 = vmatprep.subr.bf16.mxu0 0
        %1869 = vmatpush1.bf16.msra.mxu0 0
        %1870 = vmatprep.subr.bf16.mxu0 0
        %1871 = vmatpush1.bf16.msra.mxu0 0
        %1872 = vmatprep.subr.bf16.mxu0 0
        %1873 = vmatpush1.bf16.msra.mxu0 0
        %1874 = vmatprep.subr.bf16.mxu0 0
        %1875 = vmatpush1.bf16.msra.mxu0 0
        %1876 = vmatprep.subr.bf16.mxu0 0
        %1877 = vmatpush1.bf16.msra.mxu0 0
        %1878 = vmatprep.subr.bf16.mxu0 0
        %1879 = vmatpush1.bf16.msra.mxu0 0
        %1880 = vmatprep.subr.bf16.mxu0 0
        %1881 = vmatpush1.bf16.msra.mxu0 0
        %1882 = vmatprep.subr.bf16.mxu0 0
        %1883 = vmatpush1.bf16.msra.mxu0 0
        %1884 = vmatprep.subr.bf16.mxu0 0
        %1885 = vmatpush1.bf16.msra.mxu0 0
        %1886 = vmatprep.subr.bf16.mxu0 0
        %1887 = vmatpush1.bf16.msra.mxu0 0
        %1888 = vmatprep.subr.bf16.mxu0 0
        %1889 = vmatpush1.bf16.msra.mxu0 0
        %1890 = vmatprep.subr.bf16.mxu0 0
        %1891 = vmatpush1.bf16.msra.mxu0 0
        %1892 = vmatprep.subr.bf16.mxu0 0
        %1893 = vmatpush1.bf16.msra.mxu0 0
        %1894 = vmatprep.subr.bf16.mxu0 0
        %1895 = vmatpush1.bf16.msra.mxu0 0
        %1896 = vmatprep.mubr.bf16.mxu0 0
        %1897 = vmatmul.mubr.bf16.gmra.mrb[0].mxu0 %v1817
        %v1898 = vpop.f32.mrb[0].mxu0
        %v1899 = vadd.f32 %v1788, %v1898
        %v1900 = vpop.f32.mrb[0].mxu0
        %v1901 = vadd.f32 %v1792, %v1900
        %v1902 = vpop.f32.mrb[0].mxu0
        %v1903 = vadd.f32 %v1788, %v1902
        %v1904 = vpop.f32.mrb[0].mxu0
        %v1905 = vadd.f32 %v1792, %v1904
        %1906 = vmatprep.mubr.bf16.mxu0 0
        %1907 = vmatmul.mubr.bf16.gmra.mrb[0].mxu0 %v1820
        %v1908 = vpop.f32.mrb[0].mxu0
        %v1909 = vadd.f32 %v1788, %v1908
        %v1910 = vpop.f32.mrb[0].mxu0
        %v1911 = vadd.f32 %v1792, %v1910
        %v1912 = vpop.f32.mrb[0].mxu0
        %v1913 = vadd.f32 %v1788, %v1912
        %v1914 = vpop.f32.mrb[0].mxu0
        %v1915 = vadd.f32 %v1792, %v1914
        %1916 = vmatprep.mubr.bf16.mxu0 0
        %1917 = vmatmul.mubr.bf16.gmra.mrb[0].mxu0 %v1823
        %v1918 = vpop.f32.mrb[0].mxu0
        %v1919 = vadd.f32 %v1788, %v1918
        %v1920 = vpop.f32.mrb[0].mxu0
        %v1921 = vadd.f32 %v1792, %v1920
        %v1922 = vpop.f32.mrb[0].mxu0
        %v1923 = vadd.f32 %v1788, %v1922
        %v1924 = vpop.f32.mrb[0].mxu0
        %v1925 = vadd.f32 %v1792, %v1924
        %1926 = vmatprep.mubr.bf16.mxu0 0
        %1927 = vmatmul.mubr.bf16.gmra.mrb[0].mxu0 %v1826
        %v1928 = vpop.f32.mrb[0].mxu0
        %v1929 = vadd.f32 %v1788, %v1928
        %v1930 = vpop.f32.mrb[0].mxu0
        %v1931 = vadd.f32 %v1792, %v1930
        %v1932 = vpop.f32.mrb[0].mxu0
        %v1933 = vadd.f32 %v1788, %v1932
        %v1934 = vpop.f32.mrb[0].mxu0
        %v1935 = vadd.f32 %v1792, %v1934
        %1936 = vmatprep.mubr.bf16.mxu0 0
        %1937 = vmatmul.mubr.bf16.gmra.mrb[0].mxu0 %v1829
        %v1938 = vpop.f32.mrb[0].mxu0
        %v1939 = vadd.f32 %v1788, %v1938
        %v1940 = vpop.f32.mrb[0].mxu0
        %v1941 = vadd.f32 %v1792, %v1940
        %v1942 = vpop.f32.mrb[0].mxu0
        %v1943 = vadd.f32 %v1788, %v1942
        %v1944 = vpop.f32.mrb[0].mxu0
        %v1945 = vadd.f32 %v1792, %v1944
        %1946 = vmatprep.mubr.bf16.mxu0 0
        %1947 = vmatmul.mubr.bf16.gmra.mrb[0].mxu0 %v1832
        %v1948 = vpop.f32.mrb[0].mxu0
        %v1949 = vadd.f32 %v1788, %v1948
        %v1950 = vpop.f32.mrb[0].mxu0
        %v1951 = vadd.f32 %v1792, %v1950
        %v1952 = vpop.f32.mrb[0].mxu0
        %v1953 = vadd.f32 %v1788, %v1952
        %v1954 = vpop.f32.mrb[0].mxu0
        %v1955 = vadd.f32 %v1792, %v1954
        %1956 = vmatprep.mubr.bf16.mxu0 0
        %1957 = vmatmul.mubr.bf16.gmra.mrb[0].mxu0 %v1835
        %v1958 = vpop.f32.mrb[0].mxu0
        %v1959 = vadd.f32 %v1788, %v1958
        %v1960 = vpop.f32.mrb[0].mxu0
        %v1961 = vadd.f32 %v1792, %v1960
        %v1962 = vpop.f32.mrb[0].mxu0
        %v1963 = vadd.f32 %v1788, %v1962
        %v1964 = vpop.f32.mrb[0].mxu0
        %v1965 = vadd.f32 %v1792, %v1964
        %1966 = vmatprep.mubr.bf16.mxu0 0
        %1967 = vmatmul.mubr.bf16.gmra.mrb[0].mxu0 %v1838
        %v1968 = vpop.f32.mrb[0].mxu0
        %v1969 = vadd.f32 %v1788, %v1968
        %v1970 = vpop.f32.mrb[0].mxu0
        %v1971 = vadd.f32 %v1792, %v1970
        %v1972 = vpop.f32.mrb[0].mxu0
        %v1973 = vadd.f32 %v1788, %v1972
        %v1974 = vpop.f32.mrb[0].mxu0
        %v1975 = vadd.f32 %v1792, %v1974
        %1976 = vmatprep.mubr.bf16.mxu0 0
        %1977 = vmatmul.mubr.bf16.gmra.mrb[0].mxu0 %v1841
        %v1978 = vpop.f32.mrb[0].mxu0
        %v1979 = vadd.f32 %v1788, %v1978
        %v1980 = vpop.f32.mrb[0].mxu0
        %v1981 = vadd.f32 %v1792, %v1980
        %v1982 = vpop.f32.mrb[0].mxu0
        %v1983 = vadd.f32 %v1788, %v1982
        %v1984 = vpop.f32.mrb[0].mxu0
        %v1985 = vadd.f32 %v1792, %v1984
        %1986 = vmatprep.mubr.bf16.mxu0 0
        %1987 = vmatmul.mubr.bf16.gmra.mrb[0].mxu0 %v1844
        %v1988 = vpop.f32.mrb[0].mxu0
        %v1989 = vadd.f32 %v1788, %v1988
        %v1990 = vpop.f32.mrb[0].mxu0
        %v1991 = vadd.f32 %v1792, %v1990
        %v1992 = vpop.f32.mrb[0].mxu0
        %v1993 = vadd.f32 %v1788, %v1992
        %v1994 = vpop.f32.mrb[0].mxu0
        %v1995 = vadd.f32 %v1792, %v1994
        %1996 = vmatprep.mubr.bf16.mxu0 0
        %1997 = vmatmul.mubr.bf16.gmra.mrb[0].mxu0 %v1847
        %v1998 = vpop.f32.mrb[0].mxu0
        %v1999 = vadd.f32 %v1788, %v1998
        %v2000 = vpop.f32.mrb[0].mxu0
        %v2001 = vadd.f32 %v1792, %v2000
        %v2002 = vpop.f32.mrb[0].mxu0
        %v2003 = vadd.f32 %v1788, %v2002
        %v2004 = vpop.f32.mrb[0].mxu0
        %v2005 = vadd.f32 %v1792, %v2004
        %2006 = vmatprep.mubr.bf16.mxu0 0
        %2007 = vmatmul.mubr.bf16.gmra.mrb[0].mxu0 %v1850
        %v2008 = vpop.f32.mrb[0].mxu0
        %v2009 = vadd.f32 %v1788, %v2008
        %v2010 = vpop.f32.mrb[0].mxu0
        %v2011 = vadd.f32 %v1792, %v2010
        %v2012 = vpop.f32.mrb[0].mxu0
        %v2013 = vadd.f32 %v1788, %v2012
        %v2014 = vpop.f32.mrb[0].mxu0
        %v2015 = vadd.f32 %v1792, %v2014
        %2016 = vmatprep.mubr.bf16.mxu0 0
        %2017 = vmatmul.mubr.bf16.gmra.mrb[0].mxu0 %v1853
        %v2018 = vpop.f32.mrb[0].mxu0
        %v2019 = vadd.f32 %v1788, %v2018
        %v2020 = vpop.f32.mrb[0].mxu0
        %v2021 = vadd.f32 %v1792, %v2020
        %v2022 = vpop.f32.mrb[0].mxu0
        %v2023 = vadd.f32 %v1788, %v2022
        %v2024 = vpop.f32.mrb[0].mxu0
        %v2025 = vadd.f32 %v1792, %v2024
        %2026 = vmatprep.mubr.bf16.mxu0 0
        %2027 = vmatmul.mubr.bf16.gmra.mrb[0].mxu0 %v1856
        %v2028 = vpop.f32.mrb[0].mxu0
        %v2029 = vadd.f32 %v1788, %v2028
        %v2030 = vpop.f32.mrb[0].mxu0
        %v2031 = vadd.f32 %v1792, %v2030
        %v2032 = vpop.f32.mrb[0].mxu0
        %v2033 = vadd.f32 %v1788, %v2032
        %v2034 = vpop.f32.mrb[0].mxu0
        %v2035 = vadd.f32 %v1792, %v2034
        %2036 = vmatprep.mubr.bf16.mxu0 0
        %2037 = vmatmul.mubr.bf16.gmra.mrb[0].mxu0 %v1859
        %v2038 = vpop.f32.mrb[0].mxu0
        %v2039 = vadd.f32 %v1788, %v2038
        %v2040 = vpop.f32.mrb[0].mxu0
        %v2041 = vadd.f32 %v1792, %v2040
        %v2042 = vpop.f32.mrb[0].mxu0
        %v2043 = vadd.f32 %v1788, %v2042
        %v2044 = vpop.f32.mrb[0].mxu0
        %v2045 = vadd.f32 %v1792, %v2044
        %2046 = vmatprep.mubr.bf16.mxu0 0
        %2047 = vmatmul.mubr.bf16.gmra.mrb[0].mxu0 %v1862
        %v2048 = vpop.f32.mrb[0].mxu0
        %v2049 = vadd.f32 %v1788, %v2048
        %v2050 = vpop.f32.mrb[0].mxu0
        %v2051 = vadd.f32 %v1792, %v2050
        %v2052 = vpop.f32.mrb[0].mxu0
        %v2053 = vadd.f32 %v1788, %v2052
        %v2054 = vpop.f32.mrb[0].mxu0
        %v2055 = vadd.f32 %v1792, %v2054
        %2056 = vdwg.mxu0
        %v2057 = vxor.u32 %v1899, 2147483648
        %v2058 = vxor.u32 %v1901, 2147483648
        %v2059 = vxor.u32 %v1903, 2147483648
        %v2060 = vxor.u32 %v1905, 2147483648
        %v2061 = vxor.u32 %v1909, 2147483648
        %v2062 = vxor.u32 %v1911, 2147483648
        %v2063 = vxor.u32 %v1913, 2147483648
        %v2064 = vxor.u32 %v1915, 2147483648
        %v2065 = vxor.u32 %v1919, 2147483648
        %v2066 = vxor.u32 %v1921, 2147483648
        %v2067 = vxor.u32 %v1923, 2147483648
        %v2068 = vxor.u32 %v1925, 2147483648
        %v2069 = vxor.u32 %v1929, 2147483648
        %v2070 = vxor.u32 %v1931, 2147483648
        %v2071 = vxor.u32 %v1933, 2147483648
        %v2072 = vxor.u32 %v1935, 2147483648
        %v2073 = vxor.u32 %v1939, 2147483648
        %v2074 = vxor.u32 %v1941, 2147483648
        %v2075 = vxor.u32 %v1943, 2147483648
        %v2076 = vxor.u32 %v1945, 2147483648
        %v2077 = vxor.u32 %v1949, 2147483648
        %v2078 = vxor.u32 %v1951, 2147483648
        %v2079 = vxor.u32 %v1953, 2147483648
        %v2080 = vxor.u32 %v1955, 2147483648
        %v2081 = vxor.u32 %v1959, 2147483648
        %v2082 = vxor.u32 %v1961, 2147483648
        %v2083 = vxor.u32 %v1963, 2147483648
        %v2084 = vxor.u32 %v1965, 2147483648
        %v2085 = vxor.u32 %v1969, 2147483648
        %v2086 = vxor.u32 %v1971, 2147483648
        %v2087 = vxor.u32 %v1973, 2147483648
        %v2088 = vxor.u32 %v1975, 2147483648
        %v2089 = vxor.u32 %v1979, 2147483648
        %v2090 = vxor.u32 %v1981, 2147483648
        %v2091 = vxor.u32 %v1983, 2147483648
        %v2092 = vxor.u32 %v1985, 2147483648
        %v2093 = vxor.u32 %v1989, 2147483648
        %v2094 = vxor.u32 %v1991, 2147483648
        %v2095 = vxor.u32 %v1993, 2147483648
        %v2096 = vxor.u32 %v1995, 2147483648
        %v2097 = vxor.u32 %v1999, 2147483648
        %v2098 = vxor.u32 %v2001, 2147483648
        %v2099 = vxor.u32 %v2003, 2147483648
        %v2100 = vxor.u32 %v2005, 2147483648
        %v2101 = vxor.u32 %v2009, 2147483648
        %v2102 = vxor.u32 %v2011, 2147483648
        %v2103 = vxor.u32 %v2013, 2147483648
        %v2104 = vxor.u32 %v2015, 2147483648
        %v2105 = vxor.u32 %v2019, 2147483648
        %v2106 = vxor.u32 %v2021, 2147483648
        %v2107 = vxor.u32 %v2023, 2147483648
        %v2108 = vxor.u32 %v2025, 2147483648
        %v2109 = vxor.u32 %v2029, 2147483648
        %v2110 = vxor.u32 %v2031, 2147483648
        %v2111 = vxor.u32 %v2033, 2147483648
        %v2112 = vxor.u32 %v2035, 2147483648
        %v2113 = vxor.u32 %v2039, 2147483648
        %v2114 = vxor.u32 %v2041, 2147483648
        %v2115 = vxor.u32 %v2043, 2147483648
        %v2116 = vxor.u32 %v2045, 2147483648
        %v2117 = vxor.u32 %v2049, 2147483648
        %v2118 = vxor.u32 %v2051, 2147483648
        %v2119 = vxor.u32 %v2053, 2147483648
        %v2120 = vxor.u32 %v2055, 2147483648
        %v2121 = vmul.f32 %v2057, 1.442695
        %v2122 = vpow.pop %v2121
        %v2123 = vmul.f32 %v2058, 1.442695
        %v2124 = vpow.pop %v2123
        %v2125 = vmul.f32 %v2059, 1.442695
        %v2126 = vpow.pop %v2125
        %v2127 = vmul.f32 %v2060, 1.442695
        %v2128 = vpow.pop %v2127
        %v2129 = vmul.f32 %v2061, 1.442695
        %v2130 = vpow.pop %v2129
        %v2131 = vmul.f32 %v2062, 1.442695
        %v2132 = vpow.pop %v2131
        %v2133 = vmul.f32 %v2063, 1.442695
        %v2134 = vpow.pop %v2133
        %v2135 = vmul.f32 %v2064, 1.442695
        %v2136 = vpow.pop %v2135
        %v2137 = vmul.f32 %v2065, 1.442695
        %v2138 = vpow.pop %v2137
        %v2139 = vmul.f32 %v2066, 1.442695
        %v2140 = vpow.pop %v2139
        %v2141 = vmul.f32 %v2067, 1.442695
        %v2142 = vpow.pop %v2141
        %v2143 = vmul.f32 %v2068, 1.442695
        %v2144 = vpow.pop %v2143
        %v2145 = vmul.f32 %v2069, 1.442695
        %v2146 = vpow.pop %v2145
        %v2147 = vmul.f32 %v2070, 1.442695
        %v2148 = vpow.pop %v2147
        %v2149 = vmul.f32 %v2071, 1.442695
        %v2150 = vpow.pop %v2149
        %v2151 = vmul.f32 %v2072, 1.442695
        %v2152 = vpow.pop %v2151
        %v2153 = vmul.f32 %v2073, 1.442695
        %v2154 = vpow.pop %v2153
        %v2155 = vmul.f32 %v2074, 1.442695
        %v2156 = vpow.pop %v2155
        %v2157 = vmul.f32 %v2075, 1.442695
        %v2158 = vpow.pop %v2157
        %v2159 = vmul.f32 %v2076, 1.442695
        %v2160 = vpow.pop %v2159
        %v2161 = vmul.f32 %v2077, 1.442695
        %v2162 = vpow.pop %v2161
        %v2163 = vmul.f32 %v2078, 1.442695
        %v2164 = vpow.pop %v2163
        %v2165 = vmul.f32 %v2079, 1.442695
        %v2166 = vpow.pop %v2165
        %v2167 = vmul.f32 %v2080, 1.442695
        %v2168 = vpow.pop %v2167
        %v2169 = vmul.f32 %v2081, 1.442695
        %v2170 = vpow.pop %v2169
        %v2171 = vmul.f32 %v2082, 1.442695
        %v2172 = vpow.pop %v2171
        %v2173 = vmul.f32 %v2083, 1.442695
        %v2174 = vpow.pop %v2173
        %v2175 = vmul.f32 %v2084, 1.442695
        %v2176 = vpow.pop %v2175
        %v2177 = vmul.f32 %v2085, 1.442695
        %v2178 = vpow.pop %v2177
        %v2179 = vmul.f32 %v2086, 1.442695
        %v2180 = vpow.pop %v2179
        %v2181 = vmul.f32 %v2087, 1.442695
        %v2182 = vpow.pop %v2181
        %v2183 = vmul.f32 %v2088, 1.442695
        %v2184 = vpow.pop %v2183
        %v2185 = vmul.f32 %v2089, 1.442695
        %v2186 = vpow.pop %v2185
        %v2187 = vmul.f32 %v2090, 1.442695
        %v2188 = vpow.pop %v2187
        %v2189 = vmul.f32 %v2091, 1.442695
        %v2190 = vpow.pop %v2189
        %v2191 = vmul.f32 %v2092, 1.442695
        %v2192 = vpow.pop %v2191
        %v2193 = vmul.f32 %v2093, 1.442695
        %v2194 = vpow.pop %v2193
        %v2195 = vmul.f32 %v2094, 1.442695
        %v2196 = vpow.pop %v2195
        %v2197 = vmul.f32 %v2095, 1.442695
        %v2198 = vpow.pop %v2197
        %v2199 = vmul.f32 %v2096, 1.442695
        %v2200 = vpow.pop %v2199
        %v2201 = vmul.f32 %v2097, 1.442695
        %v2202 = vpow.pop %v2201
        %v2203 = vmul.f32 %v2098, 1.442695
        %v2204 = vpow.pop %v2203
        %v2205 = vmul.f32 %v2099, 1.442695
        %v2206 = vpow.pop %v2205
        %v2207 = vmul.f32 %v2100, 1.442695
        %v2208 = vpow.pop %v2207
        %v2209 = vmul.f32 %v2101, 1.442695
        %v2210 = vpow.pop %v2209
        %v2211 = vmul.f32 %v2102, 1.442695
        %v2212 = vpow.pop %v2211
        %v2213 = vmul.f32 %v2103, 1.442695
        %v2214 = vpow.pop %v2213
        %v2215 = vmul.f32 %v2104, 1.442695
        %v2216 = vpow.pop %v2215
        %v2217 = vmul.f32 %v2105, 1.442695
        %v2218 = vpow.pop %v2217
        %v2219 = vmul.f32 %v2106, 1.442695
        %v2220 = vpow.pop %v2219
        %v2221 = vmul.f32 %v2107, 1.442695
        %v2222 = vpow.pop %v2221
        %v2223 = vmul.f32 %v2108, 1.442695
        %v2224 = vpow.pop %v2223
        %v2225 = vmul.f32 %v2109, 1.442695
        %v2226 = vpow.pop %v2225
        %v2227 = vmul.f32 %v2110, 1.442695
        %v2228 = vpow.pop %v2227
        %v2229 = vmul.f32 %v2111, 1.442695
        %v2230 = vpow.pop %v2229
        %v2231 = vmul.f32 %v2112, 1.442695
        %v2232 = vpow.pop %v2231
        %v2233 = vmul.f32 %v2113, 1.442695
        %v2234 = vpow.pop %v2233
        %v2235 = vmul.f32 %v2114, 1.442695
        %v2236 = vpow.pop %v2235
        %v2237 = vmul.f32 %v2115, 1.442695
        %v2238 = vpow.pop %v2237
        %v2239 = vmul.f32 %v2116, 1.442695
        %v2240 = vpow.pop %v2239
        %v2241 = vmul.f32 %v2117, 1.442695
        %v2242 = vpow.pop %v2241
        %v2243 = vmul.f32 %v2118, 1.442695
        %v2244 = vpow.pop %v2243
        %v2245 = vmul.f32 %v2119, 1.442695
        %v2246 = vpow.pop %v2245
        %v2247 = vmul.f32 %v2120, 1.442695
        %v2248 = vpow.pop %v2247
        %v2249 = vadd.f32 %v2122, 1.0
        %v2250 = vadd.f32 %v2124, 1.0
        %v2251 = vadd.f32 %v2126, 1.0
        %v2252 = vadd.f32 %v2128, 1.0
        %v2253 = vadd.f32 %v2130, 1.0
        %v2254 = vadd.f32 %v2132, 1.0
        %v2255 = vadd.f32 %v2134, 1.0
        %v2256 = vadd.f32 %v2136, 1.0
        %v2257 = vadd.f32 %v2138, 1.0
        %v2258 = vadd.f32 %v2140, 1.0
        %v2259 = vadd.f32 %v2142, 1.0
        %v2260 = vadd.f32 %v2144, 1.0
        %v2261 = vadd.f32 %v2146, 1.0
        %v2262 = vadd.f32 %v2148, 1.0
        %v2263 = vadd.f32 %v2150, 1.0
        %v2264 = vadd.f32 %v2152, 1.0
        %v2265 = vadd.f32 %v2154, 1.0
        %v2266 = vadd.f32 %v2156, 1.0
        %v2267 = vadd.f32 %v2158, 1.0
        %v2268 = vadd.f32 %v2160, 1.0
        %v2269 = vadd.f32 %v2162, 1.0
        %v2270 = vadd.f32 %v2164, 1.0
        %v2271 = vadd.f32 %v2166, 1.0
        %v2272 = vadd.f32 %v2168, 1.0
        %v2273 = vadd.f32 %v2170, 1.0
        %v2274 = vadd.f32 %v2172, 1.0
        %v2275 = vadd.f32 %v2174, 1.0
        %v2276 = vadd.f32 %v2176, 1.0
        %v2277 = vadd.f32 %v2178, 1.0
        %v2278 = vadd.f32 %v2180, 1.0
        %v2279 = vadd.f32 %v2182, 1.0
        %v2280 = vadd.f32 %v2184, 1.0
        %v2281 = vadd.f32 %v2186, 1.0
        %v2282 = vadd.f32 %v2188, 1.0
        %v2283 = vadd.f32 %v2190, 1.0
        %v2284 = vadd.f32 %v2192, 1.0
        %v2285 = vadd.f32 %v2194, 1.0
        %v2286 = vadd.f32 %v2196, 1.0
        %v2287 = vadd.f32 %v2198, 1.0
        %v2288 = vadd.f32 %v2200, 1.0
        %v2289 = vadd.f32 %v2202, 1.0
        %v2290 = vadd.f32 %v2204, 1.0
        %v2291 = vadd.f32 %v2206, 1.0
        %v2292 = vadd.f32 %v2208, 1.0
        %v2293 = vadd.f32 %v2210, 1.0
        %v2294 = vadd.f32 %v2212, 1.0
        %v2295 = vadd.f32 %v2214, 1.0
        %v2296 = vadd.f32 %v2216, 1.0
        %v2297 = vadd.f32 %v2218, 1.0
        %v2298 = vadd.f32 %v2220, 1.0
        %v2299 = vadd.f32 %v2222, 1.0
        %v2300 = vadd.f32 %v2224, 1.0
        %v2301 = vadd.f32 %v2226, 1.0
        %v2302 = vadd.f32 %v2228, 1.0
        %v2303 = vadd.f32 %v2230, 1.0
        %v2304 = vadd.f32 %v2232, 1.0
        %v2305 = vadd.f32 %v2234, 1.0
        %v2306 = vadd.f32 %v2236, 1.0
        %v2307 = vadd.f32 %v2238, 1.0
        %v2308 = vadd.f32 %v2240, 1.0
        %v2309 = vadd.f32 %v2242, 1.0
        %v2310 = vadd.f32 %v2244, 1.0
        %v2311 = vadd.f32 %v2246, 1.0
        %v2312 = vadd.f32 %v2248, 1.0
        %v2313 = vrcp.pop %v2249
        %v2314 = vmul.f32 1.0, %v2313
        %v2315 = vrcp.pop %v2250
        %v2316 = vmul.f32 1.0, %v2315
        %v2317 = vrcp.pop %v2251
        %v2318 = vmul.f32 1.0, %v2317
        %v2319 = vrcp.pop %v2252
        %v2320 = vmul.f32 1.0, %v2319
        %v2321 = vrcp.pop %v2253
        %v2322 = vmul.f32 1.0, %v2321
        %v2323 = vrcp.pop %v2254
        %v2324 = vmul.f32 1.0, %v2323
        %v2325 = vrcp.pop %v2255
        %v2326 = vmul.f32 1.0, %v2325
        %v2327 = vrcp.pop %v2256
        %v2328 = vmul.f32 1.0, %v2327
        %v2329 = vrcp.pop %v2257
        %v2330 = vmul.f32 1.0, %v2329
        %v2331 = vrcp.pop %v2258
        %v2332 = vmul.f32 1.0, %v2331
        %v2333 = vrcp.pop %v2259
        %v2334 = vmul.f32 1.0, %v2333
        %v2335 = vrcp.pop %v2260
        %v2336 = vmul.f32 1.0, %v2335
        %v2337 = vrcp.pop %v2261
        %v2338 = vmul.f32 1.0, %v2337
        %v2339 = vrcp.pop %v2262
        %v2340 = vmul.f32 1.0, %v2339
        %v2341 = vrcp.pop %v2263
        %v2342 = vmul.f32 1.0, %v2341
        %v2343 = vrcp.pop %v2264
        %v2344 = vmul.f32 1.0, %v2343
        %v2345 = vrcp.pop %v2265
        %v2346 = vmul.f32 1.0, %v2345
        %v2347 = vrcp.pop %v2266
        %v2348 = vmul.f32 1.0, %v2347
        %v2349 = vrcp.pop %v2267
        %v2350 = vmul.f32 1.0, %v2349
        %v2351 = vrcp.pop %v2268
        %v2352 = vmul.f32 1.0, %v2351
        %v2353 = vrcp.pop %v2269
        %v2354 = vmul.f32 1.0, %v2353
        %v2355 = vrcp.pop %v2270
        %v2356 = vmul.f32 1.0, %v2355
        %v2357 = vrcp.pop %v2271
        %v2358 = vmul.f32 1.0, %v2357
        %v2359 = vrcp.pop %v2272
        %v2360 = vmul.f32 1.0, %v2359
        %v2361 = vrcp.pop %v2273
        %v2362 = vmul.f32 1.0, %v2361
        %v2363 = vrcp.pop %v2274
        %v2364 = vmul.f32 1.0, %v2363
        %v2365 = vrcp.pop %v2275
        %v2366 = vmul.f32 1.0, %v2365
        %v2367 = vrcp.pop %v2276
        %v2368 = vmul.f32 1.0, %v2367
        %v2369 = vrcp.pop %v2277
        %v2370 = vmul.f32 1.0, %v2369
        %v2371 = vrcp.pop %v2278
        %v2372 = vmul.f32 1.0, %v2371
        %v2373 = vrcp.pop %v2279
        %v2374 = vmul.f32 1.0, %v2373
        %v2375 = vrcp.pop %v2280
        %v2376 = vmul.f32 1.0, %v2375
        %v2377 = vrcp.pop %v2281
        %v2378 = vmul.f32 1.0, %v2377
        %v2379 = vrcp.pop %v2282
        %v2380 = vmul.f32 1.0, %v2379
        %v2381 = vrcp.pop %v2283
        %v2382 = vmul.f32 1.0, %v2381
        %v2383 = vrcp.pop %v2284
        %v2384 = vmul.f32 1.0, %v2383
        %v2385 = vrcp.pop %v2285
        %v2386 = vmul.f32 1.0, %v2385
        %v2387 = vrcp.pop %v2286
        %v2388 = vmul.f32 1.0, %v2387
        %v2389 = vrcp.pop %v2287
        %v2390 = vmul.f32 1.0, %v2389
        %v2391 = vrcp.pop %v2288
        %v2392 = vmul.f32 1.0, %v2391
        %v2393 = vrcp.pop %v2289
        %v2394 = vmul.f32 1.0, %v2393
        %v2395 = vrcp.pop %v2290
        %v2396 = vmul.f32 1.0, %v2395
        %v2397 = vrcp.pop %v2291
        %v2398 = vmul.f32 1.0, %v2397
        %v2399 = vrcp.pop %v2292
        %v2400 = vmul.f32 1.0, %v2399
        %v2401 = vrcp.pop %v2293
        %v2402 = vmul.f32 1.0, %v2401
        %v2403 = vrcp.pop %v2294
        %v2404 = vmul.f32 1.0, %v2403
        %v2405 = vrcp.pop %v2295
        %v2406 = vmul.f32 1.0, %v2405
        %v2407 = vrcp.pop %v2296
        %v2408 = vmul.f32 1.0, %v2407
        %v2409 = vrcp.pop %v2297
        %v2410 = vmul.f32 1.0, %v2409
        %v2411 = vrcp.pop %v2298
        %v2412 = vmul.f32 1.0, %v2411
        %v2413 = vrcp.pop %v2299
        %v2414 = vmul.f32 1.0, %v2413
        %v2415 = vrcp.pop %v2300
        %v2416 = vmul.f32 1.0, %v2415
        %v2417 = vrcp.pop %v2301
        %v2418 = vmul.f32 1.0, %v2417
        %v2419 = vrcp.pop %v2302
        %v2420 = vmul.f32 1.0, %v2419
        %v2421 = vrcp.pop %v2303
        %v2422 = vmul.f32 1.0, %v2421
        %v2423 = vrcp.pop %v2304
        %v2424 = vmul.f32 1.0, %v2423
        %v2425 = vrcp.pop %v2305
        %v2426 = vmul.f32 1.0, %v2425
        %v2427 = vrcp.pop %v2306
        %v2428 = vmul.f32 1.0, %v2427
        %v2429 = vrcp.pop %v2307
        %v2430 = vmul.f32 1.0, %v2429
        %v2431 = vrcp.pop %v2308
        %v2432 = vmul.f32 1.0, %v2431
        %v2433 = vrcp.pop %v2309
        %v2434 = vmul.f32 1.0, %v2433
        %v2435 = vrcp.pop %v2310
        %v2436 = vmul.f32 1.0, %v2435
        %v2437 = vrcp.pop %v2311
        %v2438 = vmul.f32 1.0, %v2437
        %v2439 = vrcp.pop %v2312
        %v2440 = vmul.f32 1.0, %v2439
        %v2441 = vmul.f32 %v1899, %v2314
        %v2442 = vmul.f32 %v1901, %v2316
        %v2443 = vmul.f32 %v1903, %v2318
        %v2444 = vmul.f32 %v1905, %v2320
        %v2445 = vmul.f32 %v1909, %v2322
        %v2446 = vmul.f32 %v1911, %v2324
        %v2447 = vmul.f32 %v1913, %v2326
        %v2448 = vmul.f32 %v1915, %v2328
        %v2449 = vmul.f32 %v1919, %v2330
        %v2450 = vmul.f32 %v1921, %v2332
        %v2451 = vmul.f32 %v1923, %v2334
        %v2452 = vmul.f32 %v1925, %v2336
        %v2453 = vmul.f32 %v1929, %v2338
        %v2454 = vmul.f32 %v1931, %v2340
        %v2455 = vmul.f32 %v1933, %v2342
        %v2456 = vmul.f32 %v1935, %v2344
        %v2457 = vmul.f32 %v1939, %v2346
        %v2458 = vmul.f32 %v1941, %v2348
        %v2459 = vmul.f32 %v1943, %v2350
        %v2460 = vmul.f32 %v1945, %v2352
        %v2461 = vmul.f32 %v1949, %v2354
        %v2462 = vmul.f32 %v1951, %v2356
        %v2463 = vmul.f32 %v1953, %v2358
        %v2464 = vmul.f32 %v1955, %v2360
        %v2465 = vmul.f32 %v1959, %v2362
        %v2466 = vmul.f32 %v1961, %v2364
        %v2467 = vmul.f32 %v1963, %v2366
        %v2468 = vmul.f32 %v1965, %v2368
        %v2469 = vmul.f32 %v1969, %v2370
        %v2470 = vmul.f32 %v1971, %v2372
        %v2471 = vmul.f32 %v1973, %v2374
        %v2472 = vmul.f32 %v1975, %v2376
        %v2473 = vmul.f32 %v1979, %v2378
        %v2474 = vmul.f32 %v1981, %v2380
        %v2475 = vmul.f32 %v1983, %v2382
        %v2476 = vmul.f32 %v1985, %v2384
        %v2477 = vmul.f32 %v1989, %v2386
        %v2478 = vmul.f32 %v1991, %v2388
        %v2479 = vmul.f32 %v1993, %v2390
        %v2480 = vmul.f32 %v1995, %v2392
        %v2481 = vmul.f32 %v1999, %v2394
        %v2482 = vmul.f32 %v2001, %v2396
        %v2483 = vmul.f32 %v2003, %v2398
        %v2484 = vmul.f32 %v2005, %v2400
        %v2485 = vmul.f32 %v2009, %v2402
        %v2486 = vmul.f32 %v2011, %v2404
        %v2487 = vmul.f32 %v2013, %v2406
        %v2488 = vmul.f32 %v2015, %v2408
        %v2489 = vmul.f32 %v2019, %v2410
        %v2490 = vmul.f32 %v2021, %v2412
        %v2491 = vmul.f32 %v2023, %v2414
        %v2492 = vmul.f32 %v2025, %v2416
        %v2493 = vmul.f32 %v2029, %v2418
        %v2494 = vmul.f32 %v2031, %v2420
        %v2495 = vmul.f32 %v2033, %v2422
        %v2496 = vmul.f32 %v2035, %v2424
        %v2497 = vmul.f32 %v2039, %v2426
        %v2498 = vmul.f32 %v2041, %v2428
        %v2499 = vmul.f32 %v2043, %v2430
        %v2500 = vmul.f32 %v2045, %v2432
        %v2501 = vmul.f32 %v2049, %v2434
        %v2502 = vmul.f32 %v2051, %v2436
        %v2503 = vmul.f32 %v2053, %v2438
        %v2504 = vmul.f32 %v2055, %v2440
        %v2505 = vadd.f32 %v2441, %v2443
        %v2506 = vadd.f32 %v2505, %v2445
        %v2507 = vadd.f32 %v2506, %v2447
        %v2508 = vadd.f32 %v2507, %v2449
        %v2509 = vadd.f32 %v2508, %v2451
        %v2510 = vadd.f32 %v2509, %v2453
        %v2511 = vadd.f32 %v2510, %v2455
        %v2512 = vadd.f32 %v2511, %v2457
        %v2513 = vadd.f32 %v2512, %v2459
        %v2514 = vadd.f32 %v2513, %v2461
        %v2515 = vadd.f32 %v2514, %v2463
        %v2516 = vadd.f32 %v2515, %v2465
        %v2517 = vadd.f32 %v2516, %v2467
        %v2518 = vadd.f32 %v2517, %v2469
        %v2519 = vadd.f32 %v2518, %v2471
        %v2520 = vadd.f32 %v2519, %v2473
        %v2521 = vadd.f32 %v2520, %v2475
        %v2522 = vadd.f32 %v2521, %v2477
        %v2523 = vadd.f32 %v2522, %v2479
        %v2524 = vadd.f32 %v2523, %v2481
        %v2525 = vadd.f32 %v2524, %v2483
        %v2526 = vadd.f32 %v2525, %v2485
        %v2527 = vadd.f32 %v2526, %v2487
        %v2528 = vadd.f32 %v2527, %v2489
        %v2529 = vadd.f32 %v2528, %v2491
        %v2530 = vadd.f32 %v2529, %v2493
        %v2531 = vadd.f32 %v2530, %v2495
        %v2532 = vadd.f32 %v2531, %v2497
        %v2533 = vadd.f32 %v2532, %v2499
        %v2534 = vadd.f32 %v2533, %v2501
        %v2535 = vadd.f32 %v2534, %v2503
        %v2536 = vrot.slane %v2535, 4
        %v2537 = vadd.f32 %v2535, %v2536
        %v2538 = vrot.slane %v2537, 2
        %v2539 = vadd.f32 %v2537, %v2538
        %v2540 = vrot.slane %v2539, 1
        %v2541 = vadd.f32 %v2539, %v2540
        %v2542 = vadd.f32 %v2442, %v2444
        %v2543 = vadd.f32 %v2542, %v2446
        %v2544 = vadd.f32 %v2543, %v2448
        %v2545 = vadd.f32 %v2544, %v2450
        %v2546 = vadd.f32 %v2545, %v2452
        %v2547 = vadd.f32 %v2546, %v2454
        %v2548 = vadd.f32 %v2547, %v2456
        %v2549 = vadd.f32 %v2548, %v2458
        %v2550 = vadd.f32 %v2549, %v2460
        %v2551 = vadd.f32 %v2550, %v2462
        %v2552 = vadd.f32 %v2551, %v2464
        %v2553 = vadd.f32 %v2552, %v2466
        %v2554 = vadd.f32 %v2553, %v2468
        %v2555 = vadd.f32 %v2554, %v2470
        %v2556 = vadd.f32 %v2555, %v2472
        %v2557 = vadd.f32 %v2556, %v2474
        %v2558 = vadd.f32 %v2557, %v2476
        %v2559 = vadd.f32 %v2558, %v2478
        %v2560 = vadd.f32 %v2559, %v2480
        %v2561 = vadd.f32 %v2560, %v2482
        %v2562 = vadd.f32 %v2561, %v2484
        %v2563 = vadd.f32 %v2562, %v2486
        %v2564 = vadd.f32 %v2563, %v2488
        %v2565 = vadd.f32 %v2564, %v2490
        %v2566 = vadd.f32 %v2565, %v2492
        %v2567 = vadd.f32 %v2566, %v2494
        %v2568 = vadd.f32 %v2567, %v2496
        %v2569 = vadd.f32 %v2568, %v2498
        %v2570 = vadd.f32 %v2569, %v2500
        %v2571 = vadd.f32 %v2570, %v2502
        %v2572 = vadd.f32 %v2571, %v2504
        %v2573 = vrot.slane %v2572, 4
        %v2574 = vadd.f32 %v2572, %v2573
        %v2575 = vrot.slane %v2574, 2
        %v2576 = vadd.f32 %v2574, %v2575
        %v2577 = vrot.slane %v2576, 1
        %v2578 = vadd.f32 %v2576, %v2577
        %v2579 = vrcp.pop 256.0
        %v2580 = vmul.f32 %v2541, %v2579
        %v2581 = vmul.f32 %v2578, %v2579
        %v2584 = vcombine.low %v2580, %v2581
        %v2586 = vunpack.c.l.s4 1966171168
        %v2587 = vunpack.c.0.s8 %v2586
        %v2588 = vlaneseq
        %v2589 = vshrl.u32 %v2588, 7
        %v2590 = vsub.s32 %v2587, %v2589
        %v2591 = vrot.slane %v2584, %v2590
        %v2593 = vunpack.c.l.s4 1966171168
        %v2594 = vunpack.c.0.s8 %v2593
        %v2595 = vlaneseq
        %v2596 = vshrl.u32 %v2595, 7
        %v2597 = vsub.s32 %v2594, %v2596
        %v2598 = vrot.slane %v2591, %v2597
        %v2600 = vlaneseq
        %vm2601 = vcmp.ge.s32.totalorder %v2600, 0
        %vm2602 = vcmp.lt.s32.totalorder %v2600, 256
        %vm2603 = vmand %vm2601, %vm2602
        %2604 = vst.msk [vmem:[%s331] sm:$0x3] %vm2603, %v2598
        %s2605 = smul.u32 2, %s21
        %p2606 = scmp.lt.s32.totalorder %s20, 1
        %s2607 = scalar_select %p2606, %s20, 1
        %p2608 = scmp.lt.s32.totalorder %s2605, 9
        %s2609 = scalar_select %p2608, %s2605, 9
        %s2610 = smul.addr %s2607, 10
        %s2611 = sadd.s32 %s2609, %s2610
        %s2612 = scalar_lea.vmem %s5, %s2611
        // Predicated region
        $region83: #{covnet_effi_forward.2} parent=73 // pred_check
          %p2613 = pneg %p168
        $region84: #{covnet_effi_forward.2} parent=73 // pred_check_branch
          %2615 = sbr.rel (%p2613) target = $region86
        $region85: #{covnet_effi_forward.2} parent=73 // pred_region
          %s2616 = smul.u32 2, %s21
        $region86: #{covnet_effi_forward.2} parent=73 // pred_fallthru
          _
      $region74: #{covnet_effi_forward.2} parent=5 // pred_fallthru
        _
      %p2617 = scmp.le.s32.totalorder 2, %s11
      // Predicated region
      $region87: #{covnet_effi_forward.2} parent=5 // pred_check
        %p2618 = pneg %p2617
      $region88: #{covnet_effi_forward.2} parent=5 // pred_check_branch
        %2620 = sbr.rel (%p2618) target = $region90
      $region89: #{covnet_effi_forward.2} parent=5 // pred_region
        %s2621 = ssub.s32 %s11, 2
        // Predicated region
        $region91: #{covnet_effi_forward.2} parent=89 // pred_check
          %p2622 = pneg %p174
        $region92: #{covnet_effi_forward.2} parent=89 // pred_check_branch
          %2624 = sbr.rel (%p2622) target = $region94
        $region93: #{covnet_effi_forward.2} parent=89 // pred_region
          %s2625 = smul.u32 2, %s23
          %p2626 = scmp.lt.s32.totalorder %s22, 1
          %s2627 = scalar_select %p2626, %s22, 1
          %p2628 = scmp.lt.s32.totalorder %s2625, 9
          %s2629 = scalar_select %p2628, %s2625, 9
          %s2630 = smul.addr %s2627, 10
          %s2631 = sadd.s32 %s2629, %s2630
          %s2632 = scalar_lea.vmem %s5, %s2631
        $region94: #{covnet_effi_forward.2} parent=89 // pred_fallthru
          _
      $region90: #{covnet_effi_forward.2} parent=5 // pred_fallthru
        _
    $region6: #{covnet_effi_forward.2} parent=1 // loop_footer
      %s15 = sadd.s32 1, %s11
    $region7: #{covnet_effi_forward.2} parent=1 // loop_footer_branch
      %10 = sbr.rel target = $region3
    $region8: #{covnet_effi_forward.2} parent=1 // loop_exit
      _

</llo_original>
